<compile_context>
chip_gen: v7x
topology: tpu7x:2x2x1
jax: 0.10.0
libtpu: 0.0.40
codegen_flags: <defaults>
</compile_context>

<pallas_src>
import jax
import jax.numpy as jnp
from jax.experimental import pallas as pl
from jax.experimental.pallas import tpu as pltpu


def _round_up(x, m):
    return ((x + m - 1) // m) * m


def _make_xcorr_kernel(Hx, Wx, Hz, Wz, Ho, Wo_pad, Wx_pad, rows_per_stripe, TC):
    """Builds the per-channel-block kernel (all sizes are static Python ints)."""

    def kernel(x_ref, z_ref, o_ref, xs_ref, zs_ref):
        # x_ref : (TC, Hx*Wx)   NCHW-flat search features (channels on sublanes)
        # z_ref : (TC, Hz*Wz)   NCHW-flat template features
        # o_ref : (Ho, Wo_pad, TC)  channels-last output block (lane-dense stores)
        # xs_ref: (Hx, Wx_pad, TC)  f32 scratch, channels-last search block
        # zs_ref: (Hz*Wz, TC)       f32 scratch, channels-last template block

        # ---- One-time per-block relayout: NCHW -> channels-last (f32) -------
        # Replaces the old wrapper-side HBM transposes; small 2-D transposes run
        # on the otherwise-idle XLU, and the f32 cast is hoisted out of the tap
        # loop (done once here instead of Hz*Wz times).
        zs_ref[...] = z_ref[...].astype(jnp.float32).T            # (Hz*Wz, TC)
        for h in range(Hx):
            row = x_ref[:, h * Wx:(h + 1) * Wx].astype(jnp.float32)   # (TC, Wx)
            xs_ref[h, 0:Wx, :] = row.T                                 # (Wx, TC)
        if Wx_pad > Wx:
            # Zero the W padding so the (cropped-away) padded output columns
            # are well defined.
            xs_ref[:, Wx:Wx_pad, :] = jnp.zeros(
                (Hx, Wx_pad - Wx, TC), jnp.float32)

        # ---- Valid depth-wise cross-correlation, striped over output rows ---
        # Live accumulator is rows_per_stripe * Wo_pad / 8 <= ~16 vregs, so it
        # never spills.  Template extent is small -> fully unrolled tap loop.
        # TODO(synk): switch the tap loop to lax.fori_loop for very large
        # templates (Hz*Wz >> 64) to bound code size.
        for r0 in range(0, Ho, rows_per_stripe):
            rows = min(rows_per_stripe, Ho - r0)
            acc = jnp.zeros((rows, Wo_pad, TC), jnp.float32)
            for di in range(Hz):
                for dj in range(Wz):
                    x_tap = xs_ref[di + r0: di + r0 + rows, dj: dj + Wo_pad, :]
                    t = di * Wz + dj
                    z_tap = zs_ref[t:t + 1, :]            # (1, TC) lane vector
                    acc = acc + x_tap * z_tap
            o_ref[r0:r0 + rows, :, :] = acc.astype(o_ref.dtype)

    return kernel


def rpn_xcorr_depthwise(z_f, x_f, *, channel_tile=128):
    """Depth-wise cross-correlation, equivalent of
    F.conv2d(x_f.view(1, B*C, Hx, Wx), z_f.view(B*C, 1, Hz, Wz), groups=B*C).

    z_f: (B, C, Hz, Wz)   template features
    x_f: (B, C, Hx, Wx)   search features
    returns: (B, C, Hx-Hz+1, Wx-Wz+1)
    """
    B, C, Hz, Wz = z_f.shape
    Bx, Cx, Hx, Wx = x_f.shape
    assert (B, C) == (Bx, Cx), "template / search feature channels must match"
    assert Hx >= Hz and Wx >= Wz, "search map must be at least template-sized"
    Ho, Wo = Hx - Hz + 1, Wx - Wz + 1

    TC = channel_tile
    assert TC % 128 == 0, "channel_tile must be a multiple of 128 (lane width)"

    BC = B * C
    BC_pad = _round_up(BC, TC)
    num_blocks = BC_pad // TC           # >= 2 for production SiamRPN (C=256)

    # Pad output W to a sublane multiple -> full-tile (unmasked) stores; the
    # search scratch is widened to match so padded taps stay in bounds.
    Wo_pad = _round_up(Wo, 8)
    Wx_pad = Wo_pad + Wz - 1
    # Stripe height keeps the live accumulator at ~<=16 vregs.
    rows_per_stripe = max(1, min(8, 128 // Wo_pad))

    # NCHW -> flat (B*C, H*W): pure reshapes, zero HBM traffic.  Channel
    # padding is a real copy only when B*C is not a multiple of 128 (toy shapes
    # like this demo; never production SiamRPN heads).
    x2 = x_f.reshape(BC, Hx * Wx)
    z2 = z_f.reshape(BC, Hz * Wz)
    if BC_pad != BC:
        x2 = jnp.pad(x2, ((0, BC_pad - BC), (0, 0)))
        z2 = jnp.pad(z2, ((0, BC_pad - BC), (0, 0)))

    itemsize = jnp.dtype(x_f.dtype).itemsize
    cost = pl.CostEstimate(
        flops=2 * BC_pad * Ho * Wo_pad * Hz * Wz,          # work actually done
        transcendentals=0,
        bytes_accessed=(Hx * Wx + Hz * Wz + Ho * Wo_pad) * BC_pad * itemsize,
    )

    kernel = _make_xcorr_kernel(Hx, Wx, Hz, Wz, Ho, Wo_pad, Wx_pad,
                                rows_per_stripe, TC)

    out_cl = pl.pallas_call(
        kernel,
        out_shape=jax.ShapeDtypeStruct((Ho, Wo_pad, BC_pad), x_f.dtype),
        grid=(num_blocks,),
        in_specs=[
            pl.BlockSpec((TC, Hx * Wx), lambda c: (c, 0)),
            pl.BlockSpec((TC, Hz * Wz), lambda c: (c, 0)),
        ],
        out_specs=pl.BlockSpec((Ho, Wo_pad, TC), lambda c: (0, 0, c)),
        scratch_shapes=[
            pltpu.VMEM((Hx, Wx_pad, TC), jnp.float32),     # channels-last x
            pltpu.VMEM((Hz * Wz, TC), jnp.float32),        # channels-last z
        ],
        compiler_params=pltpu.CompilerParams(
            dimension_semantics=("parallel",)),
        cost_estimate=cost,
    )(x2, z2)

    # The only remaining relayout: one output-sized (smallest tensor)
    # slice+transpose back to the NCHW contract of the PyTorch module; the
    # crop of the W / channel padding fuses into this same XLA op.
    # TODO(synk): callers that can consume channels-last features should take
    # `out_cl[:, :Wo, :B*C]` directly and skip this transpose entirely.
    out = jnp.transpose(out_cl[:, :Wo, :BC], (2, 0, 1))
    return out.reshape(B, C, Ho, Wo)


# TODO(synk): RPN.template()/track() and param_groups() are stateful/optimizer
# scaffolding with no compute; only the cross-correlation forward is kernelized.


if __name__ == "__main__":
    key = jax.random.PRNGKey(0)
    kz, kx = jax.random.split(key)

    B, C = 2, 4
    Hz = Wz = 4     # template feature map
    Hx = Wx = 16    # search feature map

    z_f = jax.random.normal(kz, (B, C, Hz, Wz), dtype=jnp.float32)
    x_f = jax.random.normal(kx, (B, C, Hx, Wx), dtype=jnp.float32)

    out = rpn_xcorr_depthwise(z_f, x_f)
    out = jax.block_until_ready(out)

    # Reference: grouped conv (PyTorch F.conv2d is cross-correlation, as is
    # lax.conv_general_dilated).
    ref = jax.lax.conv_general_dilated(
        x_f.reshape(1, B * C, Hx, Wx),
        z_f.reshape(B * C, 1, Hz, Wz),
        window_strides=(1, 1),
        padding="VALID",
        feature_group_count=B * C,
        dimension_numbers=("NCHW", "OIHW", "NCHW"),
    ).reshape(B, C, Hx - Hz + 1, Wx - Wz + 1)

    assert out.shape == (B, C, 13, 13), out.shape
    assert jnp.allclose(out, ref, atol=1e-4, rtol=1e-4), "mismatch vs reference"

    print("KERNEL_OK")
</pallas_src>

<mosaic_0001>
module attributes {stable_mosaic.version = 11 : i64} {
  func.func @kernel(%arg0: i32, %arg1: memref<128x256xf32, #tpu.memory_space<vmem>>, %arg2: memref<128x16xf32, #tpu.memory_space<vmem>>, %arg3: memref<13x16x128xf32, #tpu.memory_space<vmem>>, %arg4: memref<16x19x128xf32, #tpu.memory_space<vmem>>, %arg5: memref<16x128xf32, #tpu.memory_space<vmem>>) attributes {dimension_semantics = [#tpu.dimension_semantics<parallel>], iteration_bounds = array<i64: 1>, scalar_prefetch = 0 : i64, scratch_operands = 2 : i64, tpu.core_type = #tpu.core_type<tc>, window_params = [{transform_indices = @transform_0, window_bounds = array<i64: 128, 256>}, {transform_indices = @transform_1, window_bounds = array<i64: 128, 16>}, {transform_indices = @transform_2, window_bounds = array<i64: 13, 16, 128>}]} {
    %c0 = arith.constant 0 : index
    %c0_0 = arith.constant 0 : index
    %0 = vector.load %arg2[%c0, %c0_0] : memref<128x16xf32, #tpu.memory_space<vmem>>, vector<128x16xf32>
    %1 = tpu.transpose %0, [1, 0] : vector<128x16xf32> -> vector<16x128xf32>
    %c0_1 = arith.constant 0 : index
    %c0_2 = arith.constant 0 : index
    %2 = vector.load %arg5[%c0_1, %c0_2] : memref<16x128xf32, #tpu.memory_space<vmem>>, vector<16x128xf32>
    tpu.vector_store %arg5[%c0_1, %c0_2], %1 {strides = array<i32>} : memref<16x128xf32, #tpu.memory_space<vmem>>, vector<16x128xf32>,
    %c0_3 = arith.constant 0 : index
    %c0_4 = arith.constant 0 : index
    %3 = vector.load %arg1[%c0_3, %c0_4] : memref<128x256xf32, #tpu.memory_space<vmem>>, vector<128x16xf32>
    %4 = tpu.transpose %3, [1, 0] : vector<128x16xf32> -> vector<16x128xf32>
    %c0_5 = arith.constant 0 : index
    %c0_6 = arith.constant 0 : index
    %c0_7 = arith.constant 0 : index
    %5 = vector.load %arg4[%c0_5, %c0_6, %c0_7] : memref<16x19x128xf32, #tpu.memory_space<vmem>>, vector<1x16x128xf32>
    %6 = vector.shape_cast %5 : vector<1x16x128xf32> to vector<16x128xf32>
    %7 = vector.shape_cast %4 : vector<16x128xf32> to vector<1x16x128xf32>
    tpu.vector_store %arg4[%c0_5, %c0_6, %c0_7], %7 {strides = array<i32>} : memref<16x19x128xf32, #tpu.memory_space<vmem>>, vector<1x16x128xf32>,
    %c0_8 = arith.constant 0 : index
    %c16 = arith.constant 16 : index
    %8 = vector.load %arg1[%c0_8, %c16] : memref<128x256xf32, #tpu.memory_space<vmem>>, vector<128x16xf32>
    %9 = tpu.transpose %8, [1, 0] : vector<128x16xf32> -> vector<16x128xf32>
    %c1 = arith.constant 1 : index
    %c0_9 = arith.constant 0 : index
    %c0_10 = arith.constant 0 : index
    %10 = vector.load %arg4[%c1, %c0_9, %c0_10] : memref<16x19x128xf32, #tpu.memory_space<vmem>>, vector<1x16x128xf32>
    %11 = vector.shape_cast %10 : vector<1x16x128xf32> to vector<16x128xf32>
    %12 = vector.shape_cast %9 : vector<16x128xf32> to vector<1x16x128xf32>
    tpu.vector_store %arg4[%c1, %c0_9, %c0_10], %12 {strides = array<i32>} : memref<16x19x128xf32, #tpu.memory_space<vmem>>, vector<1x16x128xf32>,
    %c0_11 = arith.constant 0 : index
    %c32 = arith.constant 32 : index
    %13 = vector.load %arg1[%c0_11, %c32] : memref<128x256xf32, #tpu.memory_space<vmem>>, vector<128x16xf32>
    %14 = tpu.transpose %13, [1, 0] : vector<128x16xf32> -> vector<16x128xf32>
    %c2 = arith.constant 2 : index
    %c0_12 = arith.constant 0 : index
    %c0_13 = arith.constant 0 : index
    %15 = vector.load %arg4[%c2, %c0_12, %c0_13] : memref<16x19x128xf32, #tpu.memory_space<vmem>>, vector<1x16x128xf32>
    %16 = vector.shape_cast %15 : vector<1x16x128xf32> to vector<16x128xf32>
    %17 = vector.shape_cast %14 : vector<16x128xf32> to vector<1x16x128xf32>
    tpu.vector_store %arg4[%c2, %c0_12, %c0_13], %17 {strides = array<i32>} : memref<16x19x128xf32, #tpu.memory_space<vmem>>, vector<1x16x128xf32>,
    %c0_14 = arith.constant 0 : index
    %c48 = arith.constant 48 : index
    %18 = vector.load %arg1[%c0_14, %c48] : memref<128x256xf32, #tpu.memory_space<vmem>>, vector<128x16xf32>
    %19 = tpu.transpose %18, [1, 0] : vector<128x16xf32> -> vector<16x128xf32>
    %c3 = arith.constant 3 : index
    %c0_15 = arith.constant 0 : index
    %c0_16 = arith.constant 0 : index
    %20 = vector.load %arg4[%c3, %c0_15, %c0_16] : memref<16x19x128xf32, #tpu.memory_space<vmem>>, vector<1x16x128xf32>
    %21 = vector.shape_cast %20 : vector<1x16x128xf32> to vector<16x128xf32>
    %22 = vector.shape_cast %19 : vector<16x128xf32> to vector<1x16x128xf32>
    tpu.vector_store %arg4[%c3, %c0_15, %c0_16], %22 {strides = array<i32>} : memref<16x19x128xf32, #tpu.memory_space<vmem>>, vector<1x16x128xf32>,
    %c0_17 = arith.constant 0 : index
    %c64 = arith.constant 64 : index
    %23 = vector.load %arg1[%c0_17, %c64] : memref<128x256xf32, #tpu.memory_space<vmem>>, vector<128x16xf32>
    %24 = tpu.transpose %23, [1, 0] : vector<128x16xf32> -> vector<16x128xf32>
    %c4 = arith.constant 4 : index
    %c0_18 = arith.constant 0 : index
    %c0_19 = arith.constant 0 : index
    %25 = vector.load %arg4[%c4, %c0_18, %c0_19] : memref<16x19x128xf32, #tpu.memory_space<vmem>>, vector<1x16x128xf32>
    %26 = vector.shape_cast %25 : vector<1x16x128xf32> to vector<16x128xf32>
    %27 = vector.shape_cast %24 : vector<16x128xf32> to vector<1x16x128xf32>
    tpu.vector_store %arg4[%c4, %c0_18, %c0_19], %27 {strides = array<i32>} : memref<16x19x128xf32, #tpu.memory_space<vmem>>, vector<1x16x128xf32>,
    %c0_20 = arith.constant 0 : index
    %c80 = arith.constant 80 : index
    %28 = vector.load %arg1[%c0_20, %c80] : memref<128x256xf32, #tpu.memory_space<vmem>>, vector<128x16xf32>
    %29 = tpu.transpose %28, [1, 0] : vector<128x16xf32> -> vector<16x128xf32>
    %c5 = arith.constant 5 : index
    %c0_21 = arith.constant 0 : index
    %c0_22 = arith.constant 0 : index
    %30 = vector.load %arg4[%c5, %c0_21, %c0_22] : memref<16x19x128xf32, #tpu.memory_space<vmem>>, vector<1x16x128xf32>
    %31 = vector.shape_cast %30 : vector<1x16x128xf32> to vector<16x128xf32>
    %32 = vector.shape_cast %29 : vector<16x128xf32> to vector<1x16x128xf32>
    tpu.vector_store %arg4[%c5, %c0_21, %c0_22], %32 {strides = array<i32>} : memref<16x19x128xf32, #tpu.memory_space<vmem>>, vector<1x16x128xf32>,
    %c0_23 = arith.constant 0 : index
    %c96 = arith.constant 96 : index
    %33 = vector.load %arg1[%c0_23, %c96] : memref<128x256xf32, #tpu.memory_space<vmem>>, vector<128x16xf32>
    %34 = tpu.transpose %33, [1, 0] : vector<128x16xf32> -> vector<16x128xf32>
    %c6 = arith.constant 6 : index
    %c0_24 = arith.constant 0 : index
    %c0_25 = arith.constant 0 : index
    %35 = vector.load %arg4[%c6, %c0_24, %c0_25] : memref<16x19x128xf32, #tpu.memory_space<vmem>>, vector<1x16x128xf32>
    %36 = vector.shape_cast %35 : vector<1x16x128xf32> to vector<16x128xf32>
    %37 = vector.shape_cast %34 : vector<16x128xf32> to vector<1x16x128xf32>
    tpu.vector_store %arg4[%c6, %c0_24, %c0_25], %37 {strides = array<i32>} : memref<16x19x128xf32, #tpu.memory_space<vmem>>, vector<1x16x128xf32>,
    %c0_26 = arith.constant 0 : index
    %c112 = arith.constant 112 : index
    %38 = vector.load %arg1[%c0_26, %c112] : memref<128x256xf32, #tpu.memory_space<vmem>>, vector<128x16xf32>
    %39 = tpu.transpose %38, [1, 0] : vector<128x16xf32> -> vector<16x128xf32>
    %c7 = arith.constant 7 : index
    %c0_27 = arith.constant 0 : index
    %c0_28 = arith.constant 0 : index
    %40 = vector.load %arg4[%c7, %c0_27, %c0_28] : memref<16x19x128xf32, #tpu.memory_space<vmem>>, vector<1x16x128xf32>
    %41 = vector.shape_cast %40 : vector<1x16x128xf32> to vector<16x128xf32>
    %42 = vector.shape_cast %39 : vector<16x128xf32> to vector<1x16x128xf32>
    tpu.vector_store %arg4[%c7, %c0_27, %c0_28], %42 {strides = array<i32>} : memref<16x19x128xf32, #tpu.memory_space<vmem>>, vector<1x16x128xf32>,
    %c0_29 = arith.constant 0 : index
    %c128 = arith.constant 128 : index
    %43 = vector.load %arg1[%c0_29, %c128] : memref<128x256xf32, #tpu.memory_space<vmem>>, vector<128x16xf32>
    %44 = tpu.transpose %43, [1, 0] : vector<128x16xf32> -> vector<16x128xf32>
    %c8 = arith.constant 8 : index
    %c0_30 = arith.constant 0 : index
    %c0_31 = arith.constant 0 : index
    %45 = vector.load %arg4[%c8, %c0_30, %c0_31] : memref<16x19x128xf32, #tpu.memory_space<vmem>>, vector<1x16x128xf32>
    %46 = vector.shape_cast %45 : vector<1x16x128xf32> to vector<16x128xf32>
    %47 = vector.shape_cast %44 : vector<16x128xf32> to vector<1x16x128xf32>
    tpu.vector_store %arg4[%c8, %c0_30, %c0_31], %47 {strides = array<i32>} : memref<16x19x128xf32, #tpu.memory_space<vmem>>, vector<1x16x128xf32>,
    %c0_32 = arith.constant 0 : index
    %c144 = arith.constant 144 : index
    %48 = vector.load %arg1[%c0_32, %c144] : memref<128x256xf32, #tpu.memory_space<vmem>>, vector<128x16xf32>
    %49 = tpu.transpose %48, [1, 0] : vector<128x16xf32> -> vector<16x128xf32>
    %c9 = arith.constant 9 : index
    %c0_33 = arith.constant 0 : index
    %c0_34 = arith.constant 0 : index
    %50 = vector.load %arg4[%c9, %c0_33, %c0_34] : memref<16x19x128xf32, #tpu.memory_space<vmem>>, vector<1x16x128xf32>
    %51 = vector.shape_cast %50 : vector<1x16x128xf32> to vector<16x128xf32>
    %52 = vector.shape_cast %49 : vector<16x128xf32> to vector<1x16x128xf32>
    tpu.vector_store %arg4[%c9, %c0_33, %c0_34], %52 {strides = array<i32>} : memref<16x19x128xf32, #tpu.memory_space<vmem>>, vector<1x16x128xf32>,
    %c0_35 = arith.constant 0 : index
    %c160 = arith.constant 160 : index
    %53 = vector.load %arg1[%c0_35, %c160] : memref<128x256xf32, #tpu.memory_space<vmem>>, vector<128x16xf32>
    %54 = tpu.transpose %53, [1, 0] : vector<128x16xf32> -> vector<16x128xf32>
    %c10 = arith.constant 10 : index
    %c0_36 = arith.constant 0 : index
    %c0_37 = arith.constant 0 : index
    %55 = vector.load %arg4[%c10, %c0_36, %c0_37] : memref<16x19x128xf32, #tpu.memory_space<vmem>>, vector<1x16x128xf32>
    %56 = vector.shape_cast %55 : vector<1x16x128xf32> to vector<16x128xf32>
    %57 = vector.shape_cast %54 : vector<16x128xf32> to vector<1x16x128xf32>
    tpu.vector_store %arg4[%c10, %c0_36, %c0_37], %57 {strides = array<i32>} : memref<16x19x128xf32, #tpu.memory_space<vmem>>, vector<1x16x128xf32>,
    %c0_38 = arith.constant 0 : index
    %c176 = arith.constant 176 : index
    %58 = vector.load %arg1[%c0_38, %c176] : memref<128x256xf32, #tpu.memory_space<vmem>>, vector<128x16xf32>
    %59 = tpu.transpose %58, [1, 0] : vector<128x16xf32> -> vector<16x128xf32>
    %c11 = arith.constant 11 : index
    %c0_39 = arith.constant 0 : index
    %c0_40 = arith.constant 0 : index
    %60 = vector.load %arg4[%c11, %c0_39, %c0_40] : memref<16x19x128xf32, #tpu.memory_space<vmem>>, vector<1x16x128xf32>
    %61 = vector.shape_cast %60 : vector<1x16x128xf32> to vector<16x128xf32>
    %62 = vector.shape_cast %59 : vector<16x128xf32> to vector<1x16x128xf32>
    tpu.vector_store %arg4[%c11, %c0_39, %c0_40], %62 {strides = array<i32>} : memref<16x19x128xf32, #tpu.memory_space<vmem>>, vector<1x16x128xf32>,
    %c0_41 = arith.constant 0 : index
    %c192 = arith.constant 192 : index
    %63 = vector.load %arg1[%c0_41, %c192] : memref<128x256xf32, #tpu.memory_space<vmem>>, vector<128x16xf32>
    %64 = tpu.transpose %63, [1, 0] : vector<128x16xf32> -> vector<16x128xf32>
    %c12 = arith.constant 12 : index
    %c0_42 = arith.constant 0 : index
    %c0_43 = arith.constant 0 : index
    %65 = vector.load %arg4[%c12, %c0_42, %c0_43] : memref<16x19x128xf32, #tpu.memory_space<vmem>>, vector<1x16x128xf32>
    %66 = vector.shape_cast %65 : vector<1x16x128xf32> to vector<16x128xf32>
    %67 = vector.shape_cast %64 : vector<16x128xf32> to vector<1x16x128xf32>
    tpu.vector_store %arg4[%c12, %c0_42, %c0_43], %67 {strides = array<i32>} : memref<16x19x128xf32, #tpu.memory_space<vmem>>, vector<1x16x128xf32>,
    %c0_44 = arith.constant 0 : index
    %c208 = arith.constant 208 : index
    %68 = vector.load %arg1[%c0_44, %c208] : memref<128x256xf32, #tpu.memory_space<vmem>>, vector<128x16xf32>
    %69 = tpu.transpose %68, [1, 0] : vector<128x16xf32> -> vector<16x128xf32>
    %c13 = arith.constant 13 : index
    %c0_45 = arith.constant 0 : index
    %c0_46 = arith.constant 0 : index
    %70 = vector.load %arg4[%c13, %c0_45, %c0_46] : memref<16x19x128xf32, #tpu.memory_space<vmem>>, vector<1x16x128xf32>
    %71 = vector.shape_cast %70 : vector<1x16x128xf32> to vector<16x128xf32>
    %72 = vector.shape_cast %69 : vector<16x128xf32> to vector<1x16x128xf32>
    tpu.vector_store %arg4[%c13, %c0_45, %c0_46], %72 {strides = array<i32>} : memref<16x19x128xf32, #tpu.memory_space<vmem>>, vector<1x16x128xf32>,
    %c0_47 = arith.constant 0 : index
    %c224 = arith.constant 224 : index
    %73 = vector.load %arg1[%c0_47, %c224] : memref<128x256xf32, #tpu.memory_space<vmem>>, vector<128x16xf32>
    %74 = tpu.transpose %73, [1, 0] : vector<128x16xf32> -> vector<16x128xf32>
    %c14 = arith.constant 14 : index
    %c0_48 = arith.constant 0 : index
    %c0_49 = arith.constant 0 : index
    %75 = vector.load %arg4[%c14, %c0_48, %c0_49] : memref<16x19x128xf32, #tpu.memory_space<vmem>>, vector<1x16x128xf32>
    %76 = vector.shape_cast %75 : vector<1x16x128xf32> to vector<16x128xf32>
    %77 = vector.shape_cast %74 : vector<16x128xf32> to vector<1x16x128xf32>
    tpu.vector_store %arg4[%c14, %c0_48, %c0_49], %77 {strides = array<i32>} : memref<16x19x128xf32, #tpu.memory_space<vmem>>, vector<1x16x128xf32>,
    %c0_50 = arith.constant 0 : index
    %c240 = arith.constant 240 : index
    %78 = vector.load %arg1[%c0_50, %c240] : memref<128x256xf32, #tpu.memory_space<vmem>>, vector<128x16xf32>
    %79 = tpu.transpose %78, [1, 0] : vector<128x16xf32> -> vector<16x128xf32>
    %c15 = arith.constant 15 : index
    %c0_51 = arith.constant 0 : index
    %c0_52 = arith.constant 0 : index
    %80 = vector.load %arg4[%c15, %c0_51, %c0_52] : memref<16x19x128xf32, #tpu.memory_space<vmem>>, vector<1x16x128xf32>
    %81 = vector.shape_cast %80 : vector<1x16x128xf32> to vector<16x128xf32>
    %82 = vector.shape_cast %79 : vector<16x128xf32> to vector<1x16x128xf32>
    tpu.vector_store %arg4[%c15, %c0_51, %c0_52], %82 {strides = array<i32>} : memref<16x19x128xf32, #tpu.memory_space<vmem>>, vector<1x16x128xf32>,
    %cst = arith.constant 0.000000e+00 : f32
    %83 = vector.broadcast %cst : f32 to vector<16x3x128xf32>
    %c0_53 = arith.constant 0 : index
    %c16_54 = arith.constant 16 : index
    %c0_55 = arith.constant 0 : index
    %84 = vector.load %arg4[%c0_53, %c16_54, %c0_55] : memref<16x19x128xf32, #tpu.memory_space<vmem>>, vector<16x3x128xf32>
    tpu.vector_store %arg4[%c0_53, %c16_54, %c0_55], %83 {strides = array<i32>} : memref<16x19x128xf32, #tpu.memory_space<vmem>>, vector<16x3x128xf32>,
    %cst_56 = arith.constant 0.000000e+00 : f32
    %85 = vector.broadcast %cst_56 : f32 to vector<8x16x128xf32>
    %c0_57 = arith.constant 0 : index
    %c0_58 = arith.constant 0 : index
    %c0_59 = arith.constant 0 : index
    %86 = vector.load %arg4[%c0_57, %c0_58, %c0_59] : memref<16x19x128xf32, #tpu.memory_space<vmem>>, vector<8x16x128xf32>
    %c0_60 = arith.constant 0 : index
    %c0_61 = arith.constant 0 : index
    %87 = vector.load %arg5[%c0_60, %c0_61] : memref<16x128xf32, #tpu.memory_space<vmem>>, vector<1x128xf32>
    %88 = vector.shape_cast %87 : vector<1x128xf32> to vector<1x1x128xf32>
    %89 = vector.broadcast %88 : vector<1x1x128xf32> to vector<8x16x128xf32>
    %90 = arith.mulf %86, %89 : vector<8x16x128xf32>
    %91 = arith.addf %85, %90 : vector<8x16x128xf32>
    %c0_62 = arith.constant 0 : index
    %c1_63 = arith.constant 1 : index
    %c0_64 = arith.constant 0 : index
    %92 = vector.load %arg4[%c0_62, %c1_63, %c0_64] : memref<16x19x128xf32, #tpu.memory_space<vmem>>, vector<8x16x128xf32>
    %c1_65 = arith.constant 1 : index
    %c0_66 = arith.constant 0 : index
    %93 = vector.load %arg5[%c1_65, %c0_66] : memref<16x128xf32, #tpu.memory_space<vmem>>, vector<1x128xf32>
    %94 = vector.shape_cast %93 : vector<1x128xf32> to vector<1x1x128xf32>
    %95 = vector.broadcast %94 : vector<1x1x128xf32> to vector<8x16x128xf32>
    %96 = arith.mulf %92, %95 : vector<8x16x128xf32>
    %97 = arith.addf %91, %96 : vector<8x16x128xf32>
    %c0_67 = arith.constant 0 : index
    %c2_68 = arith.constant 2 : index
    %c0_69 = arith.constant 0 : index
    %98 = vector.load %arg4[%c0_67, %c2_68, %c0_69] : memref<16x19x128xf32, #tpu.memory_space<vmem>>, vector<8x16x128xf32>
    %c2_70 = arith.constant 2 : index
    %c0_71 = arith.constant 0 : index
    %99 = vector.load %arg5[%c2_70, %c0_71] : memref<16x128xf32, #tpu.memory_space<vmem>>, vector<1x128xf32>
    %100 = vector.shape_cast %99 : vector<1x128xf32> to vector<1x1x128xf32>
    %101 = vector.broadcast %100 : vector<1x1x128xf32> to vector<8x16x128xf32>
    %102 = arith.mulf %98, %101 : vector<8x16x128xf32>
    %103 = arith.addf %97, %102 : vector<8x16x128xf32>
    %c0_72 = arith.constant 0 : index
    %c3_73 = arith.constant 3 : index
    %c0_74 = arith.constant 0 : index
    %104 = vector.load %arg4[%c0_72, %c3_73, %c0_74] : memref<16x19x128xf32, #tpu.memory_space<vmem>>, vector<8x16x128xf32>
    %c3_75 = arith.constant 3 : index
    %c0_76 = arith.constant 0 : index
    %105 = vector.load %arg5[%c3_75, %c0_76] : memref<16x128xf32, #tpu.memory_space<vmem>>, vector<1x128xf32>
    %106 = vector.shape_cast %105 : vector<1x128xf32> to vector<1x1x128xf32>
    %107 = vector.broadcast %106 : vector<1x1x128xf32> to vector<8x16x128xf32>
    %108 = arith.mulf %104, %107 : vector<8x16x128xf32>
    %109 = arith.addf %103, %108 : vector<8x16x128xf32>
    %c1_77 = arith.constant 1 : index
    %c0_78 = arith.constant 0 : index
    %c0_79 = arith.constant 0 : index
    %110 = vector.load %arg4[%c1_77, %c0_78, %c0_79] : memref<16x19x128xf32, #tpu.memory_space<vmem>>, vector<8x16x128xf32>
    %c4_80 = arith.constant 4 : index
    %c0_81 = arith.constant 0 : index
    %111 = vector.load %arg5[%c4_80, %c0_81] : memref<16x128xf32, #tpu.memory_space<vmem>>, vector<1x128xf32>
    %112 = vector.shape_cast %111 : vector<1x128xf32> to vector<1x1x128xf32>
    %113 = vector.broadcast %112 : vector<1x1x128xf32> to vector<8x16x128xf32>
    %114 = arith.mulf %110, %113 : vector<8x16x128xf32>
    %115 = arith.addf %109, %114 : vector<8x16x128xf32>
    %c1_82 = arith.constant 1 : index
    %c1_83 = arith.constant 1 : index
    %c0_84 = arith.constant 0 : index
    %116 = vector.load %arg4[%c1_82, %c1_83, %c0_84] : memref<16x19x128xf32, #tpu.memory_space<vmem>>, vector<8x16x128xf32>
    %c5_85 = arith.constant 5 : index
    %c0_86 = arith.constant 0 : index
    %117 = vector.load %arg5[%c5_85, %c0_86] : memref<16x128xf32, #tpu.memory_space<vmem>>, vector<1x128xf32>
    %118 = vector.shape_cast %117 : vector<1x128xf32> to vector<1x1x128xf32>
    %119 = vector.broadcast %118 : vector<1x1x128xf32> to vector<8x16x128xf32>
    %120 = arith.mulf %116, %119 : vector<8x16x128xf32>
    %121 = arith.addf %115, %120 : vector<8x16x128xf32>
    %c1_87 = arith.constant 1 : index
    %c2_88 = arith.constant 2 : index
    %c0_89 = arith.constant 0 : index
    %122 = vector.load %arg4[%c1_87, %c2_88, %c0_89] : memref<16x19x128xf32, #tpu.memory_space<vmem>>, vector<8x16x128xf32>
    %c6_90 = arith.constant 6 : index
    %c0_91 = arith.constant 0 : index
    %123 = vector.load %arg5[%c6_90, %c0_91] : memref<16x128xf32, #tpu.memory_space<vmem>>, vector<1x128xf32>
    %124 = vector.shape_cast %123 : vector<1x128xf32> to vector<1x1x128xf32>
    %125 = vector.broadcast %124 : vector<1x1x128xf32> to vector<8x16x128xf32>
    %126 = arith.mulf %122, %125 : vector<8x16x128xf32>
    %127 = arith.addf %121, %126 : vector<8x16x128xf32>
    %c1_92 = arith.constant 1 : index
    %c3_93 = arith.constant 3 : index
    %c0_94 = arith.constant 0 : index
    %128 = vector.load %arg4[%c1_92, %c3_93, %c0_94] : memref<16x19x128xf32, #tpu.memory_space<vmem>>, vector<8x16x128xf32>
    %c7_95 = arith.constant 7 : index
    %c0_96 = arith.constant 0 : index
    %129 = vector.load %arg5[%c7_95, %c0_96] : memref<16x128xf32, #tpu.memory_space<vmem>>, vector<1x128xf32>
    %130 = vector.shape_cast %129 : vector<1x128xf32> to vector<1x1x128xf32>
    %131 = vector.broadcast %130 : vector<1x1x128xf32> to vector<8x16x128xf32>
    %132 = arith.mulf %128, %131 : vector<8x16x128xf32>
    %133 = arith.addf %127, %132 : vector<8x16x128xf32>
    %c2_97 = arith.constant 2 : index
    %c0_98 = arith.constant 0 : index
    %c0_99 = arith.constant 0 : index
    %134 = vector.load %arg4[%c2_97, %c0_98, %c0_99] : memref<16x19x128xf32, #tpu.memory_space<vmem>>, vector<8x16x128xf32>
    %c8_100 = arith.constant 8 : index
    %c0_101 = arith.constant 0 : index
    %135 = vector.load %arg5[%c8_100, %c0_101] : memref<16x128xf32, #tpu.memory_space<vmem>>, vector<1x128xf32>
    %136 = vector.shape_cast %135 : vector<1x128xf32> to vector<1x1x128xf32>
    %137 = vector.broadcast %136 : vector<1x1x128xf32> to vector<8x16x128xf32>
    %138 = arith.mulf %134, %137 : vector<8x16x128xf32>
    %139 = arith.addf %133, %138 : vector<8x16x128xf32>
    %c2_102 = arith.constant 2 : index
    %c1_103 = arith.constant 1 : index
    %c0_104 = arith.constant 0 : index
    %140 = vector.load %arg4[%c2_102, %c1_103, %c0_104] : memref<16x19x128xf32, #tpu.memory_space<vmem>>, vector<8x16x128xf32>
    %c9_105 = arith.constant 9 : index
    %c0_106 = arith.constant 0 : index
    %141 = vector.load %arg5[%c9_105, %c0_106] : memref<16x128xf32, #tpu.memory_space<vmem>>, vector<1x128xf32>
    %142 = vector.shape_cast %141 : vector<1x128xf32> to vector<1x1x128xf32>
    %143 = vector.broadcast %142 : vector<1x1x128xf32> to vector<8x16x128xf32>
    %144 = arith.mulf %140, %143 : vector<8x16x128xf32>
    %145 = arith.addf %139, %144 : vector<8x16x128xf32>
    %c2_107 = arith.constant 2 : index
    %c2_108 = arith.constant 2 : index
    %c0_109 = arith.constant 0 : index
    %146 = vector.load %arg4[%c2_107, %c2_108, %c0_109] : memref<16x19x128xf32, #tpu.memory_space<vmem>>, vector<8x16x128xf32>
    %c10_110 = arith.constant 10 : index
    %c0_111 = arith.constant 0 : index
    %147 = vector.load %arg5[%c10_110, %c0_111] : memref<16x128xf32, #tpu.memory_space<vmem>>, vector<1x128xf32>
    %148 = vector.shape_cast %147 : vector<1x128xf32> to vector<1x1x128xf32>
    %149 = vector.broadcast %148 : vector<1x1x128xf32> to vector<8x16x128xf32>
    %150 = arith.mulf %146, %149 : vector<8x16x128xf32>
    %151 = arith.addf %145, %150 : vector<8x16x128xf32>
    %c2_112 = arith.constant 2 : index
    %c3_113 = arith.constant 3 : index
    %c0_114 = arith.constant 0 : index
    %152 = vector.load %arg4[%c2_112, %c3_113, %c0_114] : memref<16x19x128xf32, #tpu.memory_space<vmem>>, vector<8x16x128xf32>
    %c11_115 = arith.constant 11 : index
    %c0_116 = arith.constant 0 : index
    %153 = vector.load %arg5[%c11_115, %c0_116] : memref<16x128xf32, #tpu.memory_space<vmem>>, vector<1x128xf32>
    %154 = vector.shape_cast %153 : vector<1x128xf32> to vector<1x1x128xf32>
    %155 = vector.broadcast %154 : vector<1x1x128xf32> to vector<8x16x128xf32>
    %156 = arith.mulf %152, %155 : vector<8x16x128xf32>
    %157 = arith.addf %151, %156 : vector<8x16x128xf32>
    %c3_117 = arith.constant 3 : index
    %c0_118 = arith.constant 0 : index
    %c0_119 = arith.constant 0 : index
    %158 = vector.load %arg4[%c3_117, %c0_118, %c0_119] : memref<16x19x128xf32, #tpu.memory_space<vmem>>, vector<8x16x128xf32>
    %c12_120 = arith.constant 12 : index
    %c0_121 = arith.constant 0 : index
    %159 = vector.load %arg5[%c12_120, %c0_121] : memref<16x128xf32, #tpu.memory_space<vmem>>, vector<1x128xf32>
    %160 = vector.shape_cast %159 : vector<1x128xf32> to vector<1x1x128xf32>
    %161 = vector.broadcast %160 : vector<1x1x128xf32> to vector<8x16x128xf32>
    %162 = arith.mulf %158, %161 : vector<8x16x128xf32>
    %163 = arith.addf %157, %162 : vector<8x16x128xf32>
    %c3_122 = arith.constant 3 : index
    %c1_123 = arith.constant 1 : index
    %c0_124 = arith.constant 0 : index
    %164 = vector.load %arg4[%c3_122, %c1_123, %c0_124] : memref<16x19x128xf32, #tpu.memory_space<vmem>>, vector<8x16x128xf32>
    %c13_125 = arith.constant 13 : index
    %c0_126 = arith.constant 0 : index
    %165 = vector.load %arg5[%c13_125, %c0_126] : memref<16x128xf32, #tpu.memory_space<vmem>>, vector<1x128xf32>
    %166 = vector.shape_cast %165 : vector<1x128xf32> to vector<1x1x128xf32>
    %167 = vector.broadcast %166 : vector<1x1x128xf32> to vector<8x16x128xf32>
    %168 = arith.mulf %164, %167 : vector<8x16x128xf32>
    %169 = arith.addf %163, %168 : vector<8x16x128xf32>
    %c3_127 = arith.constant 3 : index
    %c2_128 = arith.constant 2 : index
    %c0_129 = arith.constant 0 : index
    %170 = vector.load %arg4[%c3_127, %c2_128, %c0_129] : memref<16x19x128xf32, #tpu.memory_space<vmem>>, vector<8x16x128xf32>
    %c14_130 = arith.constant 14 : index
    %c0_131 = arith.constant 0 : index
    %171 = vector.load %arg5[%c14_130, %c0_131] : memref<16x128xf32, #tpu.memory_space<vmem>>, vector<1x128xf32>
    %172 = vector.shape_cast %171 : vector<1x128xf32> to vector<1x1x128xf32>
    %173 = vector.broadcast %172 : vector<1x1x128xf32> to vector<8x16x128xf32>
    %174 = arith.mulf %170, %173 : vector<8x16x128xf32>
    %175 = arith.addf %169, %174 : vector<8x16x128xf32>
    %c3_132 = arith.constant 3 : index
    %c3_133 = arith.constant 3 : index
    %c0_134 = arith.constant 0 : index
    %176 = vector.load %arg4[%c3_132, %c3_133, %c0_134] : memref<16x19x128xf32, #tpu.memory_space<vmem>>, vector<8x16x128xf32>
    %c15_135 = arith.constant 15 : index
    %c0_136 = arith.constant 0 : index
    %177 = vector.load %arg5[%c15_135, %c0_136] : memref<16x128xf32, #tpu.memory_space<vmem>>, vector<1x128xf32>
    %178 = vector.shape_cast %177 : vector<1x128xf32> to vector<1x1x128xf32>
    %179 = vector.broadcast %178 : vector<1x1x128xf32> to vector<8x16x128xf32>
    %180 = arith.mulf %176, %179 : vector<8x16x128xf32>
    %181 = arith.addf %175, %180 : vector<8x16x128xf32>
    %c0_137 = arith.constant 0 : index
    %c0_138 = arith.constant 0 : index
    %c0_139 = arith.constant 0 : index
    %182 = vector.load %arg3[%c0_137, %c0_138, %c0_139] : memref<13x16x128xf32, #tpu.memory_space<vmem>>, vector<8x16x128xf32>
    tpu.vector_store %arg3[%c0_137, %c0_138, %c0_139], %181 {strides = array<i32>} : memref<13x16x128xf32, #tpu.memory_space<vmem>>, vector<8x16x128xf32>,
    %cst_140 = arith.constant 0.000000e+00 : f32
    %183 = vector.broadcast %cst_140 : f32 to vector<5x16x128xf32>
    %c8_141 = arith.constant 8 : index
    %c0_142 = arith.constant 0 : index
    %c0_143 = arith.constant 0 : index
    %184 = vector.load %arg4[%c8_141, %c0_142, %c0_143] : memref<16x19x128xf32, #tpu.memory_space<vmem>>, vector<5x16x128xf32>
    %c0_144 = arith.constant 0 : index
    %c0_145 = arith.constant 0 : index
    %185 = vector.load %arg5[%c0_144, %c0_145] : memref<16x128xf32, #tpu.memory_space<vmem>>, vector<1x128xf32>
    %186 = vector.shape_cast %185 : vector<1x128xf32> to vector<1x1x128xf32>
    %187 = vector.broadcast %186 : vector<1x1x128xf32> to vector<5x16x128xf32>
    %188 = arith.mulf %184, %187 : vector<5x16x128xf32>
    %189 = arith.addf %183, %188 : vector<5x16x128xf32>
    %c8_146 = arith.constant 8 : index
    %c1_147 = arith.constant 1 : index
    %c0_148 = arith.constant 0 : index
    %190 = vector.load %arg4[%c8_146, %c1_147, %c0_148] : memref<16x19x128xf32, #tpu.memory_space<vmem>>, vector<5x16x128xf32>
    %c1_149 = arith.constant 1 : index
    %c0_150 = arith.constant 0 : index
    %191 = vector.load %arg5[%c1_149, %c0_150] : memref<16x128xf32, #tpu.memory_space<vmem>>, vector<1x128xf32>
    %192 = vector.shape_cast %191 : vector<1x128xf32> to vector<1x1x128xf32>
    %193 = vector.broadcast %192 : vector<1x1x128xf32> to vector<5x16x128xf32>
    %194 = arith.mulf %190, %193 : vector<5x16x128xf32>
    %195 = arith.addf %189, %194 : vector<5x16x128xf32>
    %c8_151 = arith.constant 8 : index
    %c2_152 = arith.constant 2 : index
    %c0_153 = arith.constant 0 : index
    %196 = vector.load %arg4[%c8_151, %c2_152, %c0_153] : memref<16x19x128xf32, #tpu.memory_space<vmem>>, vector<5x16x128xf32>
    %c2_154 = arith.constant 2 : index
    %c0_155 = arith.constant 0 : index
    %197 = vector.load %arg5[%c2_154, %c0_155] : memref<16x128xf32, #tpu.memory_space<vmem>>, vector<1x128xf32>
    %198 = vector.shape_cast %197 : vector<1x128xf32> to vector<1x1x128xf32>
    %199 = vector.broadcast %198 : vector<1x1x128xf32> to vector<5x16x128xf32>
    %200 = arith.mulf %196, %199 : vector<5x16x128xf32>
    %201 = arith.addf %195, %200 : vector<5x16x128xf32>
    %c8_156 = arith.constant 8 : index
    %c3_157 = arith.constant 3 : index
    %c0_158 = arith.constant 0 : index
    %202 = vector.load %arg4[%c8_156, %c3_157, %c0_158] : memref<16x19x128xf32, #tpu.memory_space<vmem>>, vector<5x16x128xf32>
    %c3_159 = arith.constant 3 : index
    %c0_160 = arith.constant 0 : index
    %203 = vector.load %arg5[%c3_159, %c0_160] : memref<16x128xf32, #tpu.memory_space<vmem>>, vector<1x128xf32>
    %204 = vector.shape_cast %203 : vector<1x128xf32> to vector<1x1x128xf32>
    %205 = vector.broadcast %204 : vector<1x1x128xf32> to vector<5x16x128xf32>
    %206 = arith.mulf %202, %205 : vector<5x16x128xf32>
    %207 = arith.addf %201, %206 : vector<5x16x128xf32>
    %c9_161 = arith.constant 9 : index
    %c0_162 = arith.constant 0 : index
    %c0_163 = arith.constant 0 : index
    %208 = vector.load %arg4[%c9_161, %c0_162, %c0_163] : memref<16x19x128xf32, #tpu.memory_space<vmem>>, vector<5x16x128xf32>
    %c4_164 = arith.constant 4 : index
    %c0_165 = arith.constant 0 : index
    %209 = vector.load %arg5[%c4_164, %c0_165] : memref<16x128xf32, #tpu.memory_space<vmem>>, vector<1x128xf32>
    %210 = vector.shape_cast %209 : vector<1x128xf32> to vector<1x1x128xf32>
    %211 = vector.broadcast %210 : vector<1x1x128xf32> to vector<5x16x128xf32>
    %212 = arith.mulf %208, %211 : vector<5x16x128xf32>
    %213 = arith.addf %207, %212 : vector<5x16x128xf32>
    %c9_166 = arith.constant 9 : index
    %c1_167 = arith.constant 1 : index
    %c0_168 = arith.constant 0 : index
    %214 = vector.load %arg4[%c9_166, %c1_167, %c0_168] : memref<16x19x128xf32, #tpu.memory_space<vmem>>, vector<5x16x128xf32>
    %c5_169 = arith.constant 5 : index
    %c0_170 = arith.constant 0 : index
    %215 = vector.load %arg5[%c5_169, %c0_170] : memref<16x128xf32, #tpu.memory_space<vmem>>, vector<1x128xf32>
    %216 = vector.shape_cast %215 : vector<1x128xf32> to vector<1x1x128xf32>
    %217 = vector.broadcast %216 : vector<1x1x128xf32> to vector<5x16x128xf32>
    %218 = arith.mulf %214, %217 : vector<5x16x128xf32>
    %219 = arith.addf %213, %218 : vector<5x16x128xf32>
    %c9_171 = arith.constant 9 : index
    %c2_172 = arith.constant 2 : index
    %c0_173 = arith.constant 0 : index
    %220 = vector.load %arg4[%c9_171, %c2_172, %c0_173] : memref<16x19x128xf32, #tpu.memory_space<vmem>>, vector<5x16x128xf32>
    %c6_174 = arith.constant 6 : index
    %c0_175 = arith.constant 0 : index
    %221 = vector.load %arg5[%c6_174, %c0_175] : memref<16x128xf32, #tpu.memory_space<vmem>>, vector<1x128xf32>
    %222 = vector.shape_cast %221 : vector<1x128xf32> to vector<1x1x128xf32>
    %223 = vector.broadcast %222 : vector<1x1x128xf32> to vector<5x16x128xf32>
    %224 = arith.mulf %220, %223 : vector<5x16x128xf32>
    %225 = arith.addf %219, %224 : vector<5x16x128xf32>
    %c9_176 = arith.constant 9 : index
    %c3_177 = arith.constant 3 : index
    %c0_178 = arith.constant 0 : index
    %226 = vector.load %arg4[%c9_176, %c3_177, %c0_178] : memref<16x19x128xf32, #tpu.memory_space<vmem>>, vector<5x16x128xf32>
    %c7_179 = arith.constant 7 : index
    %c0_180 = arith.constant 0 : index
    %227 = vector.load %arg5[%c7_179, %c0_180] : memref<16x128xf32, #tpu.memory_space<vmem>>, vector<1x128xf32>
    %228 = vector.shape_cast %227 : vector<1x128xf32> to vector<1x1x128xf32>
    %229 = vector.broadcast %228 : vector<1x1x128xf32> to vector<5x16x128xf32>
    %230 = arith.mulf %226, %229 : vector<5x16x128xf32>
    %231 = arith.addf %225, %230 : vector<5x16x128xf32>
    %c10_181 = arith.constant 10 : index
    %c0_182 = arith.constant 0 : index
    %c0_183 = arith.constant 0 : index
    %232 = vector.load %arg4[%c10_181, %c0_182, %c0_183] : memref<16x19x128xf32, #tpu.memory_space<vmem>>, vector<5x16x128xf32>
    %c8_184 = arith.constant 8 : index
    %c0_185 = arith.constant 0 : index
    %233 = vector.load %arg5[%c8_184, %c0_185] : memref<16x128xf32, #tpu.memory_space<vmem>>, vector<1x128xf32>
    %234 = vector.shape_cast %233 : vector<1x128xf32> to vector<1x1x128xf32>
    %235 = vector.broadcast %234 : vector<1x1x128xf32> to vector<5x16x128xf32>
    %236 = arith.mulf %232, %235 : vector<5x16x128xf32>
    %237 = arith.addf %231, %236 : vector<5x16x128xf32>
    %c10_186 = arith.constant 10 : index
    %c1_187 = arith.constant 1 : index
    %c0_188 = arith.constant 0 : index
    %238 = vector.load %arg4[%c10_186, %c1_187, %c0_188] : memref<16x19x128xf32, #tpu.memory_space<vmem>>, vector<5x16x128xf32>
    %c9_189 = arith.constant 9 : index
    %c0_190 = arith.constant 0 : index
    %239 = vector.load %arg5[%c9_189, %c0_190] : memref<16x128xf32, #tpu.memory_space<vmem>>, vector<1x128xf32>
    %240 = vector.shape_cast %239 : vector<1x128xf32> to vector<1x1x128xf32>
    %241 = vector.broadcast %240 : vector<1x1x128xf32> to vector<5x16x128xf32>
    %242 = arith.mulf %238, %241 : vector<5x16x128xf32>
    %243 = arith.addf %237, %242 : vector<5x16x128xf32>
    %c10_191 = arith.constant 10 : index
    %c2_192 = arith.constant 2 : index
    %c0_193 = arith.constant 0 : index
    %244 = vector.load %arg4[%c10_191, %c2_192, %c0_193] : memref<16x19x128xf32, #tpu.memory_space<vmem>>, vector<5x16x128xf32>
    %c10_194 = arith.constant 10 : index
    %c0_195 = arith.constant 0 : index
    %245 = vector.load %arg5[%c10_194, %c0_195] : memref<16x128xf32, #tpu.memory_space<vmem>>, vector<1x128xf32>
    %246 = vector.shape_cast %245 : vector<1x128xf32> to vector<1x1x128xf32>
    %247 = vector.broadcast %246 : vector<1x1x128xf32> to vector<5x16x128xf32>
    %248 = arith.mulf %244, %247 : vector<5x16x128xf32>
    %249 = arith.addf %243, %248 : vector<5x16x128xf32>
    %c10_196 = arith.constant 10 : index
    %c3_197 = arith.constant 3 : index
    %c0_198 = arith.constant 0 : index
    %250 = vector.load %arg4[%c10_196, %c3_197, %c0_198] : memref<16x19x128xf32, #tpu.memory_space<vmem>>, vector<5x16x128xf32>
    %c11_199 = arith.constant 11 : index
    %c0_200 = arith.constant 0 : index
    %251 = vector.load %arg5[%c11_199, %c0_200] : memref<16x128xf32, #tpu.memory_space<vmem>>, vector<1x128xf32>
    %252 = vector.shape_cast %251 : vector<1x128xf32> to vector<1x1x128xf32>
    %253 = vector.broadcast %252 : vector<1x1x128xf32> to vector<5x16x128xf32>
    %254 = arith.mulf %250, %253 : vector<5x16x128xf32>
    %255 = arith.addf %249, %254 : vector<5x16x128xf32>
    %c11_201 = arith.constant 11 : index
    %c0_202 = arith.constant 0 : index
    %c0_203 = arith.constant 0 : index
    %256 = vector.load %arg4[%c11_201, %c0_202, %c0_203] : memref<16x19x128xf32, #tpu.memory_space<vmem>>, vector<5x16x128xf32>
    %c12_204 = arith.constant 12 : index
    %c0_205 = arith.constant 0 : index
    %257 = vector.load %arg5[%c12_204, %c0_205] : memref<16x128xf32, #tpu.memory_space<vmem>>, vector<1x128xf32>
    %258 = vector.shape_cast %257 : vector<1x128xf32> to vector<1x1x128xf32>
    %259 = vector.broadcast %258 : vector<1x1x128xf32> to vector<5x16x128xf32>
    %260 = arith.mulf %256, %259 : vector<5x16x128xf32>
    %261 = arith.addf %255, %260 : vector<5x16x128xf32>
    %c11_206 = arith.constant 11 : index
    %c1_207 = arith.constant 1 : index
    %c0_208 = arith.constant 0 : index
    %262 = vector.load %arg4[%c11_206, %c1_207, %c0_208] : memref<16x19x128xf32, #tpu.memory_space<vmem>>, vector<5x16x128xf32>
    %c13_209 = arith.constant 13 : index
    %c0_210 = arith.constant 0 : index
    %263 = vector.load %arg5[%c13_209, %c0_210] : memref<16x128xf32, #tpu.memory_space<vmem>>, vector<1x128xf32>
    %264 = vector.shape_cast %263 : vector<1x128xf32> to vector<1x1x128xf32>
    %265 = vector.broadcast %264 : vector<1x1x128xf32> to vector<5x16x128xf32>
    %266 = arith.mulf %262, %265 : vector<5x16x128xf32>
    %267 = arith.addf %261, %266 : vector<5x16x128xf32>
    %c11_211 = arith.constant 11 : index
    %c2_212 = arith.constant 2 : index
    %c0_213 = arith.constant 0 : index
    %268 = vector.load %arg4[%c11_211, %c2_212, %c0_213] : memref<16x19x128xf32, #tpu.memory_space<vmem>>, vector<5x16x128xf32>
    %c14_214 = arith.constant 14 : index
    %c0_215 = arith.constant 0 : index
    %269 = vector.load %arg5[%c14_214, %c0_215] : memref<16x128xf32, #tpu.memory_space<vmem>>, vector<1x128xf32>
    %270 = vector.shape_cast %269 : vector<1x128xf32> to vector<1x1x128xf32>
    %271 = vector.broadcast %270 : vector<1x1x128xf32> to vector<5x16x128xf32>
    %272 = arith.mulf %268, %271 : vector<5x16x128xf32>
    %273 = arith.addf %267, %272 : vector<5x16x128xf32>
    %c11_216 = arith.constant 11 : index
    %c3_217 = arith.constant 3 : index
    %c0_218 = arith.constant 0 : index
    %274 = vector.load %arg4[%c11_216, %c3_217, %c0_218] : memref<16x19x128xf32, #tpu.memory_space<vmem>>, vector<5x16x128xf32>
    %c15_219 = arith.constant 15 : index
    %c0_220 = arith.constant 0 : index
    %275 = vector.load %arg5[%c15_219, %c0_220] : memref<16x128xf32, #tpu.memory_space<vmem>>, vector<1x128xf32>
    %276 = vector.shape_cast %275 : vector<1x128xf32> to vector<1x1x128xf32>
    %277 = vector.broadcast %276 : vector<1x1x128xf32> to vector<5x16x128xf32>
    %278 = arith.mulf %274, %277 : vector<5x16x128xf32>
    %279 = arith.addf %273, %278 : vector<5x16x128xf32>
    %c8_221 = arith.constant 8 : index
    %c0_222 = arith.constant 0 : index
    %c0_223 = arith.constant 0 : index
    %280 = vector.load %arg3[%c8_221, %c0_222, %c0_223] : memref<13x16x128xf32, #tpu.memory_space<vmem>>, vector<5x16x128xf32>
    tpu.vector_store %arg3[%c8_221, %c0_222, %c0_223], %279 {strides = array<i32>} : memref<13x16x128xf32, #tpu.memory_space<vmem>>, vector<5x16x128xf32>,
    return
  }
  func.func @transform_0(%arg0: i32) -> (i32, i32) {
    %c0_i32 = arith.constant 0 : i32
    %c0_i32_0 = arith.constant 0 : i32
    return %arg0, %c0_i32 : i32, i32
  }
  func.func @transform_1(%arg0: i32) -> (i32, i32) {
    %c0_i32 = arith.constant 0 : i32
    %c0_i32_0 = arith.constant 0 : i32
    return %arg0, %c0_i32 : i32, i32
  }
  func.func @transform_2(%arg0: i32) -> (i32, i32, i32) {
    %c0_i32 = arith.constant 0 : i32
    %c0_i32_0 = arith.constant 0 : i32
    %c0_i32_1 = arith.constant 0 : i32
    return %c0_i32, %c0_i32_0, %arg0 : i32, i32, i32
  }
}

</mosaic_0001>

<llo_original>
// kernel: tpu_custom_call.1
$region0: #{tpu_custom_call.1}
  #allocation0 [shape = 'u32[]', space=smem, size = 0x4, offset = 0x4, fixed_abs, tag = 'smem constant byte address 0x4 - core index']
  #allocation1 [shape = 'u32[144,128]{1,0:T(1,128)}', space=vmem, size = 0x12000, scoped, tag = 'internal scratch']
  #allocation2 [shape = 'f32[16,19,128]{2,1,0:T(8,128)}', space=vmem, size = 0x30000, scoped, tag = 'scratch operand']
  #allocation3 [shape = 'f32[16,128]{1,0:T(8,128)}', space=vmem, size = 0x2000, scoped, tag = 'scratch operand']
  %s0 = inlined_call_operand.hbm [shape: f32[128,256], index: 0, kind: input, shape index: {}]
  %s1 = inlined_call_operand.vmem [shape: f32[128,16], index: 1, kind: input, shape index: {}]
  %s2 = inlined_call_operand.hbm [shape: f32[13,16,128], index: 2, kind: output, shape index: {}]
  %s3 = sld [smem:[#allocation0]]
  $region22: #{tpu_custom_call.1} parent=0
    _
  %s5 = ssub.s32 1, %s3
  %s6 = scalar_select 0, %s5, %s3
  $region1: #{tpu_custom_call.1} parent=0
    #allocation4 [shape = 'u8[131072]{0}', space=vmem, size = 0x20000, scoped, tag = 'input window, operand 0, single buffered']
    #allocation5 [shape = 's32[1]{0}', space=sflag, size = 0x4, scoped, tag = 'scoped memory for tpu_custom_call.1']
    #allocation6 [shape = 's32[1]{0}', space=sflag, size = 0x4, scoped, tag = 'scoped memory for tpu_custom_call.1']
    #allocation7 [shape = 'u8[106496]{0}', space=vmem, size = 0x1a000, scoped, tag = 'output window, operand 0, single buffered']
    %7 = vsyncpa [#allocation5], 0
    %8 = vsyncpa [#allocation6], 0
    // Predicated region
    $region2: #{tpu_custom_call.1} parent=1 // pred_check
      _
    $region3: #{tpu_custom_call.1} parent=1 // pred_check_branch
      %10 = sbr.rel (0) target = $region5
    $region4: #{tpu_custom_call.1} parent=1 // pred_region
      %s12 = ssub.s32 4096, 4096
      %13 = vsyncadd [#allocation5], %s12
      %s14 = sshll.u32 [#allocation4], 4
      %s15 = int_to_ptr.vmem [resolvable:$true] %s14
      %20 = dma.hbm_to_vmem [thread:$0]  %s0, 4096, %s15, [#allocation5], 256, 256, 16
    $region5: #{tpu_custom_call.1} parent=1 // pred_fallthru
      _
    // Predicated region
    $region6: #{tpu_custom_call.1} parent=1 // pred_check
      _
    $region7: #{tpu_custom_call.1} parent=1 // pred_check_branch
      %22 = sbr.rel (0) target = $region9
    $region8: #{tpu_custom_call.1} parent=1 // pred_region
      _
    $region9: #{tpu_custom_call.1} parent=1 // pred_fallthru
      _
    // Predicated region
    $region10: #{tpu_custom_call.1} parent=1 // pred_check
      _
    $region11: #{tpu_custom_call.1} parent=1 // pred_check_branch
      %24 = sbr.rel (0) target = $region13
    $region12: #{tpu_custom_call.1} parent=1 // pred_region
      %25 = dma.done [#allocation5], 4096
    $region13: #{tpu_custom_call.1} parent=1 // pred_fallthru
      _
    %v26 = vld [vmem:[%s1] sm:$0xff]
    %v27 = vld [vmem:[%s1 + $0x8] sm:$0xff]
    %v28 = vld [vmem:[%s1 + $0x10] sm:$0xff]
    %v29 = vld [vmem:[%s1 + $0x18] sm:$0xff]
    %v30 = vld [vmem:[%s1 + $0x20] sm:$0xff]
    %v31 = vld [vmem:[%s1 + $0x28] sm:$0xff]
    %v32 = vld [vmem:[%s1 + $0x30] sm:$0xff]
    %v33 = vld [vmem:[%s1 + $0x38] sm:$0xff]
    %v34 = vld [vmem:[%s1 + $0x40] sm:$0xff]
    %v35 = vld [vmem:[%s1 + $0x48] sm:$0xff]
    %v36 = vld [vmem:[%s1 + $0x50] sm:$0xff]
    %v37 = vld [vmem:[%s1 + $0x58] sm:$0xff]
    %v38 = vld [vmem:[%s1 + $0x60] sm:$0xff]
    %v39 = vld [vmem:[%s1 + $0x68] sm:$0xff]
    %v40 = vld [vmem:[%s1 + $0x70] sm:$0xff]
    %v41 = vld [vmem:[%s1 + $0x78] sm:$0xff]
    %42 = vxpose.xlu0.b32.start [1/16] %v26, 128
    %43 = vxpose.xlu0.b32.cont [2/16] %v27, 128
    %44 = vxpose.xlu0.b32.cont [3/16] %v28, 128
    %45 = vxpose.xlu0.b32.cont [4/16] %v29, 128
    %46 = vxpose.xlu0.b32.cont [5/16] %v30, 128
    %47 = vxpose.xlu0.b32.cont [6/16] %v31, 128
    %48 = vxpose.xlu0.b32.cont [7/16] %v32, 128
    %49 = vxpose.xlu0.b32.cont [8/16] %v33, 128
    %50 = vxpose.xlu0.b32.cont [9/16] %v34, 128
    %51 = vxpose.xlu0.b32.cont [10/16] %v35, 128
    %52 = vxpose.xlu0.b32.cont [11/16] %v36, 128
    %53 = vxpose.xlu0.b32.cont [12/16] %v37, 128
    %54 = vxpose.xlu0.b32.cont [13/16] %v38, 128
    %55 = vxpose.xlu0.b32.cont [14/16] %v39, 128
    %56 = vxpose.xlu0.b32.cont [15/16] %v40, 128
    %57 = vxpose.xlu0.b32.end [16/16] %v41, 128
    %v58 = vpop.trf.xlu0
    %v59 = vpop.trf.xlu0
    %v60 = vpop.trf.xlu0
    %v61 = vpop.trf.xlu0
    %v62 = vpop.trf.xlu0
    %v63 = vpop.trf.xlu0
    %v64 = vpop.trf.xlu0
    %v65 = vpop.trf.xlu0
    %v66 = vpop.trf.xlu0
    %v67 = vpop.trf.xlu0
    %v68 = vpop.trf.xlu0
    %v69 = vpop.trf.xlu0
    %v70 = vpop.trf.xlu0
    %v71 = vpop.trf.xlu0
    %v72 = vpop.trf.xlu0
    %v73 = vpop.trf.xlu0
    %74 = vst [vmem:[#allocation3] sm:$0xff] %v58
    %75 = vst [vmem:[#allocation3 + $0x8] sm:$0xff] %v59
    %v76 = vld [vmem:[#allocation4] sm:$0xff]
    %v77 = vld [vmem:[#allocation4 + $0x10] sm:$0xff]
    %v78 = vld [vmem:[#allocation4 + $0x20] sm:$0xff]
    %v79 = vld [vmem:[#allocation4 + $0x30] sm:$0xff]
    %v80 = vld [vmem:[#allocation4 + $0x40] sm:$0xff]
    %v81 = vld [vmem:[#allocation4 + $0x50] sm:$0xff]
    %v82 = vld [vmem:[#allocation4 + $0x60] sm:$0xff]
    %v83 = vld [vmem:[#allocation4 + $0x70] sm:$0xff]
    %v84 = vld [vmem:[#allocation4 + $0x80] sm:$0xff]
    %v85 = vld [vmem:[#allocation4 + $0x90] sm:$0xff]
    %v86 = vld [vmem:[#allocation4 + $0xa0] sm:$0xff]
    %v87 = vld [vmem:[#allocation4 + $0xb0] sm:$0xff]
    %v88 = vld [vmem:[#allocation4 + $0xc0] sm:$0xff]
    %v89 = vld [vmem:[#allocation4 + $0xd0] sm:$0xff]
    %v90 = vld [vmem:[#allocation4 + $0xe0] sm:$0xff]
    %v91 = vld [vmem:[#allocation4 + $0xf0] sm:$0xff]
    %92 = vxpose.xlu0.b32.start [1/16] %v76, 128
    %93 = vxpose.xlu0.b32.cont [2/16] %v77, 128
    %94 = vxpose.xlu0.b32.cont [3/16] %v78, 128
    %95 = vxpose.xlu0.b32.cont [4/16] %v79, 128
    %96 = vxpose.xlu0.b32.cont [5/16] %v80, 128
    %97 = vxpose.xlu0.b32.cont [6/16] %v81, 128
    %98 = vxpose.xlu0.b32.cont [7/16] %v82, 128
    %99 = vxpose.xlu0.b32.cont [8/16] %v83, 128
    %100 = vxpose.xlu0.b32.cont [9/16] %v84, 128
    %101 = vxpose.xlu0.b32.cont [10/16] %v85, 128
    %102 = vxpose.xlu0.b32.cont [11/16] %v86, 128
    %103 = vxpose.xlu0.b32.cont [12/16] %v87, 128
    %104 = vxpose.xlu0.b32.cont [13/16] %v88, 128
    %105 = vxpose.xlu0.b32.cont [14/16] %v89, 128
    %106 = vxpose.xlu0.b32.cont [15/16] %v90, 128
    %107 = vxpose.xlu0.b32.end [16/16] %v91, 128
    %v108 = vpop.trf.xlu0
    %v109 = vpop.trf.xlu0
    %v110 = vpop.trf.xlu0
    %v111 = vpop.trf.xlu0
    %v112 = vpop.trf.xlu0
    %v113 = vpop.trf.xlu0
    %v114 = vpop.trf.xlu0
    %v115 = vpop.trf.xlu0
    %v116 = vpop.trf.xlu0
    %v117 = vpop.trf.xlu0
    %v118 = vpop.trf.xlu0
    %v119 = vpop.trf.xlu0
    %v120 = vpop.trf.xlu0
    %v121 = vpop.trf.xlu0
    %v122 = vpop.trf.xlu0
    %v123 = vpop.trf.xlu0
    %124 = vst [vmem:[#allocation2] sm:$0xff] %v108
    %125 = vst [vmem:[#allocation2 + $0x8] sm:$0xff] %v109
    %v126 = vld [vmem:[#allocation4] sm:$0xff]
    %v127 = vld [vmem:[#allocation4 + $0x10] sm:$0xff]
    %v128 = vld [vmem:[#allocation4 + $0x20] sm:$0xff]
    %v129 = vld [vmem:[#allocation4 + $0x30] sm:$0xff]
    %v130 = vld [vmem:[#allocation4 + $0x40] sm:$0xff]
    %v131 = vld [vmem:[#allocation4 + $0x50] sm:$0xff]
    %v132 = vld [vmem:[#allocation4 + $0x60] sm:$0xff]
    %v133 = vld [vmem:[#allocation4 + $0x70] sm:$0xff]
    %v134 = vld [vmem:[#allocation4 + $0x80] sm:$0xff]
    %v135 = vld [vmem:[#allocation4 + $0x90] sm:$0xff]
    %v136 = vld [vmem:[#allocation4 + $0xa0] sm:$0xff]
    %v137 = vld [vmem:[#allocation4 + $0xb0] sm:$0xff]
    %v138 = vld [vmem:[#allocation4 + $0xc0] sm:$0xff]
    %v139 = vld [vmem:[#allocation4 + $0xd0] sm:$0xff]
    %v140 = vld [vmem:[#allocation4 + $0xe0] sm:$0xff]
    %v141 = vld [vmem:[#allocation4 + $0xf0] sm:$0xff]
    %158 = vrot.lane.b32.xlu0 %v126, 112
    %v159 = vpop.permute.xlu0 %158
    %160 = vrot.lane.b32.xlu0 %v127, 112
    %v161 = vpop.permute.xlu0 %160
    %162 = vrot.lane.b32.xlu0 %v128, 112
    %v163 = vpop.permute.xlu0 %162
    %164 = vrot.lane.b32.xlu0 %v129, 112
    %v165 = vpop.permute.xlu0 %164
    %166 = vrot.lane.b32.xlu0 %v130, 112
    %v167 = vpop.permute.xlu0 %166
    %168 = vrot.lane.b32.xlu0 %v131, 112
    %v169 = vpop.permute.xlu0 %168
    %170 = vrot.lane.b32.xlu0 %v132, 112
    %v171 = vpop.permute.xlu0 %170
    %172 = vrot.lane.b32.xlu0 %v133, 112
    %v173 = vpop.permute.xlu0 %172
    %174 = vrot.lane.b32.xlu0 %v134, 112
    %v175 = vpop.permute.xlu0 %174
    %176 = vrot.lane.b32.xlu0 %v135, 112
    %v177 = vpop.permute.xlu0 %176
    %178 = vrot.lane.b32.xlu0 %v136, 112
    %v179 = vpop.permute.xlu0 %178
    %180 = vrot.lane.b32.xlu0 %v137, 112
    %v181 = vpop.permute.xlu0 %180
    %182 = vrot.lane.b32.xlu0 %v138, 112
    %v183 = vpop.permute.xlu0 %182
    %184 = vrot.lane.b32.xlu0 %v139, 112
    %v185 = vpop.permute.xlu0 %184
    %186 = vrot.lane.b32.xlu0 %v140, 112
    %v187 = vpop.permute.xlu0 %186
    %188 = vrot.lane.b32.xlu0 %v141, 112
    %v189 = vpop.permute.xlu0 %188
    %206 = vxpose.xlu0.b32.start [1/16] %v159, 128
    %207 = vxpose.xlu0.b32.cont [2/16] %v161, 128
    %208 = vxpose.xlu0.b32.cont [3/16] %v163, 128
    %209 = vxpose.xlu0.b32.cont [4/16] %v165, 128
    %210 = vxpose.xlu0.b32.cont [5/16] %v167, 128
    %211 = vxpose.xlu0.b32.cont [6/16] %v169, 128
    %212 = vxpose.xlu0.b32.cont [7/16] %v171, 128
    %213 = vxpose.xlu0.b32.cont [8/16] %v173, 128
    %214 = vxpose.xlu0.b32.cont [9/16] %v175, 128
    %215 = vxpose.xlu0.b32.cont [10/16] %v177, 128
    %216 = vxpose.xlu0.b32.cont [11/16] %v179, 128
    %217 = vxpose.xlu0.b32.cont [12/16] %v181, 128
    %218 = vxpose.xlu0.b32.cont [13/16] %v183, 128
    %219 = vxpose.xlu0.b32.cont [14/16] %v185, 128
    %220 = vxpose.xlu0.b32.cont [15/16] %v187, 128
    %221 = vxpose.xlu0.b32.end [16/16] %v189, 128
    %v222 = vpop.trf.xlu0
    %v223 = vpop.trf.xlu0
    %v224 = vpop.trf.xlu0
    %v225 = vpop.trf.xlu0
    %v226 = vpop.trf.xlu0
    %v227 = vpop.trf.xlu0
    %v228 = vpop.trf.xlu0
    %v229 = vpop.trf.xlu0
    %v230 = vpop.trf.xlu0
    %v231 = vpop.trf.xlu0
    %v232 = vpop.trf.xlu0
    %v233 = vpop.trf.xlu0
    %v234 = vpop.trf.xlu0
    %v235 = vpop.trf.xlu0
    %v236 = vpop.trf.xlu0
    %v237 = vpop.trf.xlu0
    %s238 = scalar_lea.vmem [#allocation2], 24
    %239 = vst [vmem:[%s238] sm:$0xff] %v222
    %240 = vst [vmem:[%s238 + $0x8] sm:$0xff] %v223
    %v241 = vld [vmem:[#allocation4] sm:$0xff]
    %v242 = vld [vmem:[#allocation4 + $0x10] sm:$0xff]
    %v243 = vld [vmem:[#allocation4 + $0x20] sm:$0xff]
    %v244 = vld [vmem:[#allocation4 + $0x30] sm:$0xff]
    %v245 = vld [vmem:[#allocation4 + $0x40] sm:$0xff]
    %v246 = vld [vmem:[#allocation4 + $0x50] sm:$0xff]
    %v247 = vld [vmem:[#allocation4 + $0x60] sm:$0xff]
    %v248 = vld [vmem:[#allocation4 + $0x70] sm:$0xff]
    %v249 = vld [vmem:[#allocation4 + $0x80] sm:$0xff]
    %v250 = vld [vmem:[#allocation4 + $0x90] sm:$0xff]
    %v251 = vld [vmem:[#allocation4 + $0xa0] sm:$0xff]
    %v252 = vld [vmem:[#allocation4 + $0xb0] sm:$0xff]
    %v253 = vld [vmem:[#allocation4 + $0xc0] sm:$0xff]
    %v254 = vld [vmem:[#allocation4 + $0xd0] sm:$0xff]
    %v255 = vld [vmem:[#allocation4 + $0xe0] sm:$0xff]
    %v256 = vld [vmem:[#allocation4 + $0xf0] sm:$0xff]
    %273 = vrot.lane.b32.xlu0 %v241, 96
    %v274 = vpop.permute.xlu0 %273
    %275 = vrot.lane.b32.xlu0 %v242, 96
    %v276 = vpop.permute.xlu0 %275
    %277 = vrot.lane.b32.xlu0 %v243, 96
    %v278 = vpop.permute.xlu0 %277
    %279 = vrot.lane.b32.xlu0 %v244, 96
    %v280 = vpop.permute.xlu0 %279
    %281 = vrot.lane.b32.xlu0 %v245, 96
    %v282 = vpop.permute.xlu0 %281
    %283 = vrot.lane.b32.xlu0 %v246, 96
    %v284 = vpop.permute.xlu0 %283
    %285 = vrot.lane.b32.xlu0 %v247, 96
    %v286 = vpop.permute.xlu0 %285
    %287 = vrot.lane.b32.xlu0 %v248, 96
    %v288 = vpop.permute.xlu0 %287
    %289 = vrot.lane.b32.xlu0 %v249, 96
    %v290 = vpop.permute.xlu0 %289
    %291 = vrot.lane.b32.xlu0 %v250, 96
    %v292 = vpop.permute.xlu0 %291
    %293 = vrot.lane.b32.xlu0 %v251, 96
    %v294 = vpop.permute.xlu0 %293
    %295 = vrot.lane.b32.xlu0 %v252, 96
    %v296 = vpop.permute.xlu0 %295
    %297 = vrot.lane.b32.xlu0 %v253, 96
    %v298 = vpop.permute.xlu0 %297
    %299 = vrot.lane.b32.xlu0 %v254, 96
    %v300 = vpop.permute.xlu0 %299
    %301 = vrot.lane.b32.xlu0 %v255, 96
    %v302 = vpop.permute.xlu0 %301
    %303 = vrot.lane.b32.xlu0 %v256, 96
    %v304 = vpop.permute.xlu0 %303
    %321 = vxpose.xlu0.b32.start [1/16] %v274, 128
    %322 = vxpose.xlu0.b32.cont [2/16] %v276, 128
    %323 = vxpose.xlu0.b32.cont [3/16] %v278, 128
    %324 = vxpose.xlu0.b32.cont [4/16] %v280, 128
    %325 = vxpose.xlu0.b32.cont [5/16] %v282, 128
    %326 = vxpose.xlu0.b32.cont [6/16] %v284, 128
    %327 = vxpose.xlu0.b32.cont [7/16] %v286, 128
    %328 = vxpose.xlu0.b32.cont [8/16] %v288, 128
    %329 = vxpose.xlu0.b32.cont [9/16] %v290, 128
    %330 = vxpose.xlu0.b32.cont [10/16] %v292, 128
    %331 = vxpose.xlu0.b32.cont [11/16] %v294, 128
    %332 = vxpose.xlu0.b32.cont [12/16] %v296, 128
    %333 = vxpose.xlu0.b32.cont [13/16] %v298, 128
    %334 = vxpose.xlu0.b32.cont [14/16] %v300, 128
    %335 = vxpose.xlu0.b32.cont [15/16] %v302, 128
    %336 = vxpose.xlu0.b32.end [16/16] %v304, 128
    %v337 = vpop.trf.xlu0
    %v338 = vpop.trf.xlu0
    %v339 = vpop.trf.xlu0
    %v340 = vpop.trf.xlu0
    %v341 = vpop.trf.xlu0
    %v342 = vpop.trf.xlu0
    %v343 = vpop.trf.xlu0
    %v344 = vpop.trf.xlu0
    %v345 = vpop.trf.xlu0
    %v346 = vpop.trf.xlu0
    %v347 = vpop.trf.xlu0
    %v348 = vpop.trf.xlu0
    %v349 = vpop.trf.xlu0
    %v350 = vpop.trf.xlu0
    %v351 = vpop.trf.xlu0
    %v352 = vpop.trf.xlu0
    %s353 = scalar_lea.vmem [#allocation2], 48
    %354 = vst [vmem:[%s353] sm:$0xff] %v337
    %355 = vst [vmem:[%s353 + $0x8] sm:$0xff] %v338
    %v356 = vld [vmem:[#allocation4] sm:$0xff]
    %v357 = vld [vmem:[#allocation4 + $0x10] sm:$0xff]
    %v358 = vld [vmem:[#allocation4 + $0x20] sm:$0xff]
    %v359 = vld [vmem:[#allocation4 + $0x30] sm:$0xff]
    %v360 = vld [vmem:[#allocation4 + $0x40] sm:$0xff]
    %v361 = vld [vmem:[#allocation4 + $0x50] sm:$0xff]
    %v362 = vld [vmem:[#allocation4 + $0x60] sm:$0xff]
    %v363 = vld [vmem:[#allocation4 + $0x70] sm:$0xff]
    %v364 = vld [vmem:[#allocation4 + $0x80] sm:$0xff]
    %v365 = vld [vmem:[#allocation4 + $0x90] sm:$0xff]
    %v366 = vld [vmem:[#allocation4 + $0xa0] sm:$0xff]
    %v367 = vld [vmem:[#allocation4 + $0xb0] sm:$0xff]
    %v368 = vld [vmem:[#allocation4 + $0xc0] sm:$0xff]
    %v369 = vld [vmem:[#allocation4 + $0xd0] sm:$0xff]
    %v370 = vld [vmem:[#allocation4 + $0xe0] sm:$0xff]
    %v371 = vld [vmem:[#allocation4 + $0xf0] sm:$0xff]
    %388 = vrot.lane.b32.xlu0 %v356, 80
    %v389 = vpop.permute.xlu0 %388
    %390 = vrot.lane.b32.xlu0 %v357, 80
    %v391 = vpop.permute.xlu0 %390
    %392 = vrot.lane.b32.xlu0 %v358, 80
    %v393 = vpop.permute.xlu0 %392
    %394 = vrot.lane.b32.xlu0 %v359, 80
    %v395 = vpop.permute.xlu0 %394
    %396 = vrot.lane.b32.xlu0 %v360, 80
    %v397 = vpop.permute.xlu0 %396
    %398 = vrot.lane.b32.xlu0 %v361, 80
    %v399 = vpop.permute.xlu0 %398
    %400 = vrot.lane.b32.xlu0 %v362, 80
    %v401 = vpop.permute.xlu0 %400
    %402 = vrot.lane.b32.xlu0 %v363, 80
    %v403 = vpop.permute.xlu0 %402
    %404 = vrot.lane.b32.xlu0 %v364, 80
    %v405 = vpop.permute.xlu0 %404
    %406 = vrot.lane.b32.xlu0 %v365, 80
    %v407 = vpop.permute.xlu0 %406
    %408 = vrot.lane.b32.xlu0 %v366, 80
    %v409 = vpop.permute.xlu0 %408
    %410 = vrot.lane.b32.xlu0 %v367, 80
    %v411 = vpop.permute.xlu0 %410
    %412 = vrot.lane.b32.xlu0 %v368, 80
    %v413 = vpop.permute.xlu0 %412
    %414 = vrot.lane.b32.xlu0 %v369, 80
    %v415 = vpop.permute.xlu0 %414
    %416 = vrot.lane.b32.xlu0 %v370, 80
    %v417 = vpop.permute.xlu0 %416
    %418 = vrot.lane.b32.xlu0 %v371, 80
    %v419 = vpop.permute.xlu0 %418
    %436 = vxpose.xlu0.b32.start [1/16] %v389, 128
    %437 = vxpose.xlu0.b32.cont [2/16] %v391, 128
    %438 = vxpose.xlu0.b32.cont [3/16] %v393, 128
    %439 = vxpose.xlu0.b32.cont [4/16] %v395, 128
    %440 = vxpose.xlu0.b32.cont [5/16] %v397, 128
    %441 = vxpose.xlu0.b32.cont [6/16] %v399, 128
    %442 = vxpose.xlu0.b32.cont [7/16] %v401, 128
    %443 = vxpose.xlu0.b32.cont [8/16] %v403, 128
    %444 = vxpose.xlu0.b32.cont [9/16] %v405, 128
    %445 = vxpose.xlu0.b32.cont [10/16] %v407, 128
    %446 = vxpose.xlu0.b32.cont [11/16] %v409, 128
    %447 = vxpose.xlu0.b32.cont [12/16] %v411, 128
    %448 = vxpose.xlu0.b32.cont [13/16] %v413, 128
    %449 = vxpose.xlu0.b32.cont [14/16] %v415, 128
    %450 = vxpose.xlu0.b32.cont [15/16] %v417, 128
    %451 = vxpose.xlu0.b32.end [16/16] %v419, 128
    %v452 = vpop.trf.xlu0
    %v453 = vpop.trf.xlu0
    %v454 = vpop.trf.xlu0
    %v455 = vpop.trf.xlu0
    %v456 = vpop.trf.xlu0
    %v457 = vpop.trf.xlu0
    %v458 = vpop.trf.xlu0
    %v459 = vpop.trf.xlu0
    %v460 = vpop.trf.xlu0
    %v461 = vpop.trf.xlu0
    %v462 = vpop.trf.xlu0
    %v463 = vpop.trf.xlu0
    %v464 = vpop.trf.xlu0
    %v465 = vpop.trf.xlu0
    %v466 = vpop.trf.xlu0
    %v467 = vpop.trf.xlu0
    %s468 = scalar_lea.vmem [#allocation2], 72
    %469 = vst [vmem:[%s468] sm:$0xff] %v452
    %470 = vst [vmem:[%s468 + $0x8] sm:$0xff] %v453
    %v471 = vld [vmem:[#allocation4] sm:$0xff]
    %v472 = vld [vmem:[#allocation4 + $0x10] sm:$0xff]
    %v473 = vld [vmem:[#allocation4 + $0x20] sm:$0xff]
    %v474 = vld [vmem:[#allocation4 + $0x30] sm:$0xff]
    %v475 = vld [vmem:[#allocation4 + $0x40] sm:$0xff]
    %v476 = vld [vmem:[#allocation4 + $0x50] sm:$0xff]
    %v477 = vld [vmem:[#allocation4 + $0x60] sm:$0xff]
    %v478 = vld [vmem:[#allocation4 + $0x70] sm:$0xff]
    %v479 = vld [vmem:[#allocation4 + $0x80] sm:$0xff]
    %v480 = vld [vmem:[#allocation4 + $0x90] sm:$0xff]
    %v481 = vld [vmem:[#allocation4 + $0xa0] sm:$0xff]
    %v482 = vld [vmem:[#allocation4 + $0xb0] sm:$0xff]
    %v483 = vld [vmem:[#allocation4 + $0xc0] sm:$0xff]
    %v484 = vld [vmem:[#allocation4 + $0xd0] sm:$0xff]
    %v485 = vld [vmem:[#allocation4 + $0xe0] sm:$0xff]
    %v486 = vld [vmem:[#allocation4 + $0xf0] sm:$0xff]
    %503 = vrot.lane.b32.xlu0 %v471, 64
    %v504 = vpop.permute.xlu0 %503
    %505 = vrot.lane.b32.xlu0 %v472, 64
    %v506 = vpop.permute.xlu0 %505
    %507 = vrot.lane.b32.xlu0 %v473, 64
    %v508 = vpop.permute.xlu0 %507
    %509 = vrot.lane.b32.xlu0 %v474, 64
    %v510 = vpop.permute.xlu0 %509
    %511 = vrot.lane.b32.xlu0 %v475, 64
    %v512 = vpop.permute.xlu0 %511
    %513 = vrot.lane.b32.xlu0 %v476, 64
    %v514 = vpop.permute.xlu0 %513
    %515 = vrot.lane.b32.xlu0 %v477, 64
    %v516 = vpop.permute.xlu0 %515
    %517 = vrot.lane.b32.xlu0 %v478, 64
    %v518 = vpop.permute.xlu0 %517
    %519 = vrot.lane.b32.xlu0 %v479, 64
    %v520 = vpop.permute.xlu0 %519
    %521 = vrot.lane.b32.xlu0 %v480, 64
    %v522 = vpop.permute.xlu0 %521
    %523 = vrot.lane.b32.xlu0 %v481, 64
    %v524 = vpop.permute.xlu0 %523
    %525 = vrot.lane.b32.xlu0 %v482, 64
    %v526 = vpop.permute.xlu0 %525
    %527 = vrot.lane.b32.xlu0 %v483, 64
    %v528 = vpop.permute.xlu0 %527
    %529 = vrot.lane.b32.xlu0 %v484, 64
    %v530 = vpop.permute.xlu0 %529
    %531 = vrot.lane.b32.xlu0 %v485, 64
    %v532 = vpop.permute.xlu0 %531
    %533 = vrot.lane.b32.xlu0 %v486, 64
    %v534 = vpop.permute.xlu0 %533
    %551 = vxpose.xlu0.b32.start [1/16] %v504, 128
    %552 = vxpose.xlu0.b32.cont [2/16] %v506, 128
    %553 = vxpose.xlu0.b32.cont [3/16] %v508, 128
    %554 = vxpose.xlu0.b32.cont [4/16] %v510, 128
    %555 = vxpose.xlu0.b32.cont [5/16] %v512, 128
    %556 = vxpose.xlu0.b32.cont [6/16] %v514, 128
    %557 = vxpose.xlu0.b32.cont [7/16] %v516, 128
    %558 = vxpose.xlu0.b32.cont [8/16] %v518, 128
    %559 = vxpose.xlu0.b32.cont [9/16] %v520, 128
    %560 = vxpose.xlu0.b32.cont [10/16] %v522, 128
    %561 = vxpose.xlu0.b32.cont [11/16] %v524, 128
    %562 = vxpose.xlu0.b32.cont [12/16] %v526, 128
    %563 = vxpose.xlu0.b32.cont [13/16] %v528, 128
    %564 = vxpose.xlu0.b32.cont [14/16] %v530, 128
    %565 = vxpose.xlu0.b32.cont [15/16] %v532, 128
    %566 = vxpose.xlu0.b32.end [16/16] %v534, 128
    %v567 = vpop.trf.xlu0
    %v568 = vpop.trf.xlu0
    %v569 = vpop.trf.xlu0
    %v570 = vpop.trf.xlu0
    %v571 = vpop.trf.xlu0
    %v572 = vpop.trf.xlu0
    %v573 = vpop.trf.xlu0
    %v574 = vpop.trf.xlu0
    %v575 = vpop.trf.xlu0
    %v576 = vpop.trf.xlu0
    %v577 = vpop.trf.xlu0
    %v578 = vpop.trf.xlu0
    %v579 = vpop.trf.xlu0
    %v580 = vpop.trf.xlu0
    %v581 = vpop.trf.xlu0
    %v582 = vpop.trf.xlu0
    %s583 = scalar_lea.vmem [#allocation2], 96
    %584 = vst [vmem:[%s583] sm:$0xff] %v567
    %585 = vst [vmem:[%s583 + $0x8] sm:$0xff] %v568
    %v586 = vld [vmem:[#allocation4] sm:$0xff]
    %v587 = vld [vmem:[#allocation4 + $0x10] sm:$0xff]
    %v588 = vld [vmem:[#allocation4 + $0x20] sm:$0xff]
    %v589 = vld [vmem:[#allocation4 + $0x30] sm:$0xff]
    %v590 = vld [vmem:[#allocation4 + $0x40] sm:$0xff]
    %v591 = vld [vmem:[#allocation4 + $0x50] sm:$0xff]
    %v592 = vld [vmem:[#allocation4 + $0x60] sm:$0xff]
    %v593 = vld [vmem:[#allocation4 + $0x70] sm:$0xff]
    %v594 = vld [vmem:[#allocation4 + $0x80] sm:$0xff]
    %v595 = vld [vmem:[#allocation4 + $0x90] sm:$0xff]
    %v596 = vld [vmem:[#allocation4 + $0xa0] sm:$0xff]
    %v597 = vld [vmem:[#allocation4 + $0xb0] sm:$0xff]
    %v598 = vld [vmem:[#allocation4 + $0xc0] sm:$0xff]
    %v599 = vld [vmem:[#allocation4 + $0xd0] sm:$0xff]
    %v600 = vld [vmem:[#allocation4 + $0xe0] sm:$0xff]
    %v601 = vld [vmem:[#allocation4 + $0xf0] sm:$0xff]
    %618 = vrot.lane.b32.xlu0 %v586, 48
    %v619 = vpop.permute.xlu0 %618
    %620 = vrot.lane.b32.xlu0 %v587, 48
    %v621 = vpop.permute.xlu0 %620
    %622 = vrot.lane.b32.xlu0 %v588, 48
    %v623 = vpop.permute.xlu0 %622
    %624 = vrot.lane.b32.xlu0 %v589, 48
    %v625 = vpop.permute.xlu0 %624
    %626 = vrot.lane.b32.xlu0 %v590, 48
    %v627 = vpop.permute.xlu0 %626
    %628 = vrot.lane.b32.xlu0 %v591, 48
    %v629 = vpop.permute.xlu0 %628
    %630 = vrot.lane.b32.xlu0 %v592, 48
    %v631 = vpop.permute.xlu0 %630
    %632 = vrot.lane.b32.xlu0 %v593, 48
    %v633 = vpop.permute.xlu0 %632
    %634 = vrot.lane.b32.xlu0 %v594, 48
    %v635 = vpop.permute.xlu0 %634
    %636 = vrot.lane.b32.xlu0 %v595, 48
    %v637 = vpop.permute.xlu0 %636
    %638 = vrot.lane.b32.xlu0 %v596, 48
    %v639 = vpop.permute.xlu0 %638
    %640 = vrot.lane.b32.xlu0 %v597, 48
    %v641 = vpop.permute.xlu0 %640
    %642 = vrot.lane.b32.xlu0 %v598, 48
    %v643 = vpop.permute.xlu0 %642
    %644 = vrot.lane.b32.xlu0 %v599, 48
    %v645 = vpop.permute.xlu0 %644
    %646 = vrot.lane.b32.xlu0 %v600, 48
    %v647 = vpop.permute.xlu0 %646
    %648 = vrot.lane.b32.xlu0 %v601, 48
    %v649 = vpop.permute.xlu0 %648
    %666 = vxpose.xlu0.b32.start [1/16] %v619, 128
    %667 = vxpose.xlu0.b32.cont [2/16] %v621, 128
    %668 = vxpose.xlu0.b32.cont [3/16] %v623, 128
    %669 = vxpose.xlu0.b32.cont [4/16] %v625, 128
    %670 = vxpose.xlu0.b32.cont [5/16] %v627, 128
    %671 = vxpose.xlu0.b32.cont [6/16] %v629, 128
    %672 = vxpose.xlu0.b32.cont [7/16] %v631, 128
    %673 = vxpose.xlu0.b32.cont [8/16] %v633, 128
    %674 = vxpose.xlu0.b32.cont [9/16] %v635, 128
    %675 = vxpose.xlu0.b32.cont [10/16] %v637, 128
    %676 = vxpose.xlu0.b32.cont [11/16] %v639, 128
    %677 = vxpose.xlu0.b32.cont [12/16] %v641, 128
    %678 = vxpose.xlu0.b32.cont [13/16] %v643, 128
    %679 = vxpose.xlu0.b32.cont [14/16] %v645, 128
    %680 = vxpose.xlu0.b32.cont [15/16] %v647, 128
    %681 = vxpose.xlu0.b32.end [16/16] %v649, 128
    %v682 = vpop.trf.xlu0
    %v683 = vpop.trf.xlu0
    %v684 = vpop.trf.xlu0
    %v685 = vpop.trf.xlu0
    %v686 = vpop.trf.xlu0
    %v687 = vpop.trf.xlu0
    %v688 = vpop.trf.xlu0
    %v689 = vpop.trf.xlu0
    %v690 = vpop.trf.xlu0
    %v691 = vpop.trf.xlu0
    %v692 = vpop.trf.xlu0
    %v693 = vpop.trf.xlu0
    %v694 = vpop.trf.xlu0
    %v695 = vpop.trf.xlu0
    %v696 = vpop.trf.xlu0
    %v697 = vpop.trf.xlu0
    %s698 = scalar_lea.vmem [#allocation2], 120
    %699 = vst [vmem:[%s698] sm:$0xff] %v682
    %700 = vst [vmem:[%s698 + $0x8] sm:$0xff] %v683
    %v701 = vld [vmem:[#allocation4] sm:$0xff]
    %v702 = vld [vmem:[#allocation4 + $0x10] sm:$0xff]
    %v703 = vld [vmem:[#allocation4 + $0x20] sm:$0xff]
    %v704 = vld [vmem:[#allocation4 + $0x30] sm:$0xff]
    %v705 = vld [vmem:[#allocation4 + $0x40] sm:$0xff]
    %v706 = vld [vmem:[#allocation4 + $0x50] sm:$0xff]
    %v707 = vld [vmem:[#allocation4 + $0x60] sm:$0xff]
    %v708 = vld [vmem:[#allocation4 + $0x70] sm:$0xff]
    %v709 = vld [vmem:[#allocation4 + $0x80] sm:$0xff]
    %v710 = vld [vmem:[#allocation4 + $0x90] sm:$0xff]
    %v711 = vld [vmem:[#allocation4 + $0xa0] sm:$0xff]
    %v712 = vld [vmem:[#allocation4 + $0xb0] sm:$0xff]
    %v713 = vld [vmem:[#allocation4 + $0xc0] sm:$0xff]
    %v714 = vld [vmem:[#allocation4 + $0xd0] sm:$0xff]
    %v715 = vld [vmem:[#allocation4 + $0xe0] sm:$0xff]
    %v716 = vld [vmem:[#allocation4 + $0xf0] sm:$0xff]
    %733 = vrot.lane.b32.xlu0 %v701, 32
    %v734 = vpop.permute.xlu0 %733
    %735 = vrot.lane.b32.xlu0 %v702, 32
    %v736 = vpop.permute.xlu0 %735
    %737 = vrot.lane.b32.xlu0 %v703, 32
    %v738 = vpop.permute.xlu0 %737
    %739 = vrot.lane.b32.xlu0 %v704, 32
    %v740 = vpop.permute.xlu0 %739
    %741 = vrot.lane.b32.xlu0 %v705, 32
    %v742 = vpop.permute.xlu0 %741
    %743 = vrot.lane.b32.xlu0 %v706, 32
    %v744 = vpop.permute.xlu0 %743
    %745 = vrot.lane.b32.xlu0 %v707, 32
    %v746 = vpop.permute.xlu0 %745
    %747 = vrot.lane.b32.xlu0 %v708, 32
    %v748 = vpop.permute.xlu0 %747
    %749 = vrot.lane.b32.xlu0 %v709, 32
    %v750 = vpop.permute.xlu0 %749
    %751 = vrot.lane.b32.xlu0 %v710, 32
    %v752 = vpop.permute.xlu0 %751
    %753 = vrot.lane.b32.xlu0 %v711, 32
    %v754 = vpop.permute.xlu0 %753
    %755 = vrot.lane.b32.xlu0 %v712, 32
    %v756 = vpop.permute.xlu0 %755
    %757 = vrot.lane.b32.xlu0 %v713, 32
    %v758 = vpop.permute.xlu0 %757
    %759 = vrot.lane.b32.xlu0 %v714, 32
    %v760 = vpop.permute.xlu0 %759
    %761 = vrot.lane.b32.xlu0 %v715, 32
    %v762 = vpop.permute.xlu0 %761
    %763 = vrot.lane.b32.xlu0 %v716, 32
    %v764 = vpop.permute.xlu0 %763
    %781 = vxpose.xlu0.b32.start [1/16] %v734, 128
    %782 = vxpose.xlu0.b32.cont [2/16] %v736, 128
    %783 = vxpose.xlu0.b32.cont [3/16] %v738, 128
    %784 = vxpose.xlu0.b32.cont [4/16] %v740, 128
    %785 = vxpose.xlu0.b32.cont [5/16] %v742, 128
    %786 = vxpose.xlu0.b32.cont [6/16] %v744, 128
    %787 = vxpose.xlu0.b32.cont [7/16] %v746, 128
    %788 = vxpose.xlu0.b32.cont [8/16] %v748, 128
    %789 = vxpose.xlu0.b32.cont [9/16] %v750, 128
    %790 = vxpose.xlu0.b32.cont [10/16] %v752, 128
    %791 = vxpose.xlu0.b32.cont [11/16] %v754, 128
    %792 = vxpose.xlu0.b32.cont [12/16] %v756, 128
    %793 = vxpose.xlu0.b32.cont [13/16] %v758, 128
    %794 = vxpose.xlu0.b32.cont [14/16] %v760, 128
    %795 = vxpose.xlu0.b32.cont [15/16] %v762, 128
    %796 = vxpose.xlu0.b32.end [16/16] %v764, 128
    %v797 = vpop.trf.xlu0
    %v798 = vpop.trf.xlu0
    %v799 = vpop.trf.xlu0
    %v800 = vpop.trf.xlu0
    %v801 = vpop.trf.xlu0
    %v802 = vpop.trf.xlu0
    %v803 = vpop.trf.xlu0
    %v804 = vpop.trf.xlu0
    %v805 = vpop.trf.xlu0
    %v806 = vpop.trf.xlu0
    %v807 = vpop.trf.xlu0
    %v808 = vpop.trf.xlu0
    %v809 = vpop.trf.xlu0
    %v810 = vpop.trf.xlu0
    %v811 = vpop.trf.xlu0
    %v812 = vpop.trf.xlu0
    %s813 = scalar_lea.vmem [#allocation2], 144
    %814 = vst [vmem:[%s813] sm:$0xff] %v797
    %815 = vst [vmem:[%s813 + $0x8] sm:$0xff] %v798
    %v816 = vld [vmem:[#allocation4] sm:$0xff]
    %v817 = vld [vmem:[#allocation4 + $0x10] sm:$0xff]
    %v818 = vld [vmem:[#allocation4 + $0x20] sm:$0xff]
    %v819 = vld [vmem:[#allocation4 + $0x30] sm:$0xff]
    %v820 = vld [vmem:[#allocation4 + $0x40] sm:$0xff]
    %v821 = vld [vmem:[#allocation4 + $0x50] sm:$0xff]
    %v822 = vld [vmem:[#allocation4 + $0x60] sm:$0xff]
    %v823 = vld [vmem:[#allocation4 + $0x70] sm:$0xff]
    %v824 = vld [vmem:[#allocation4 + $0x80] sm:$0xff]
    %v825 = vld [vmem:[#allocation4 + $0x90] sm:$0xff]
    %v826 = vld [vmem:[#allocation4 + $0xa0] sm:$0xff]
    %v827 = vld [vmem:[#allocation4 + $0xb0] sm:$0xff]
    %v828 = vld [vmem:[#allocation4 + $0xc0] sm:$0xff]
    %v829 = vld [vmem:[#allocation4 + $0xd0] sm:$0xff]
    %v830 = vld [vmem:[#allocation4 + $0xe0] sm:$0xff]
    %v831 = vld [vmem:[#allocation4 + $0xf0] sm:$0xff]
    %848 = vrot.lane.b32.xlu0 %v816, 16
    %v849 = vpop.permute.xlu0 %848
    %850 = vrot.lane.b32.xlu0 %v817, 16
    %v851 = vpop.permute.xlu0 %850
    %852 = vrot.lane.b32.xlu0 %v818, 16
    %v853 = vpop.permute.xlu0 %852
    %854 = vrot.lane.b32.xlu0 %v819, 16
    %v855 = vpop.permute.xlu0 %854
    %856 = vrot.lane.b32.xlu0 %v820, 16
    %v857 = vpop.permute.xlu0 %856
    %858 = vrot.lane.b32.xlu0 %v821, 16
    %v859 = vpop.permute.xlu0 %858
    %860 = vrot.lane.b32.xlu0 %v822, 16
    %v861 = vpop.permute.xlu0 %860
    %862 = vrot.lane.b32.xlu0 %v823, 16
    %v863 = vpop.permute.xlu0 %862
    %864 = vrot.lane.b32.xlu0 %v824, 16
    %v865 = vpop.permute.xlu0 %864
    %866 = vrot.lane.b32.xlu0 %v825, 16
    %v867 = vpop.permute.xlu0 %866
    %868 = vrot.lane.b32.xlu0 %v826, 16
    %v869 = vpop.permute.xlu0 %868
    %870 = vrot.lane.b32.xlu0 %v827, 16
    %v871 = vpop.permute.xlu0 %870
    %872 = vrot.lane.b32.xlu0 %v828, 16
    %v873 = vpop.permute.xlu0 %872
    %874 = vrot.lane.b32.xlu0 %v829, 16
    %v875 = vpop.permute.xlu0 %874
    %876 = vrot.lane.b32.xlu0 %v830, 16
    %v877 = vpop.permute.xlu0 %876
    %878 = vrot.lane.b32.xlu0 %v831, 16
    %v879 = vpop.permute.xlu0 %878
    %896 = vxpose.xlu0.b32.start [1/16] %v849, 128
    %897 = vxpose.xlu0.b32.cont [2/16] %v851, 128
    %898 = vxpose.xlu0.b32.cont [3/16] %v853, 128
    %899 = vxpose.xlu0.b32.cont [4/16] %v855, 128
    %900 = vxpose.xlu0.b32.cont [5/16] %v857, 128
    %901 = vxpose.xlu0.b32.cont [6/16] %v859, 128
    %902 = vxpose.xlu0.b32.cont [7/16] %v861, 128
    %903 = vxpose.xlu0.b32.cont [8/16] %v863, 128
    %904 = vxpose.xlu0.b32.cont [9/16] %v865, 128
    %905 = vxpose.xlu0.b32.cont [10/16] %v867, 128
    %906 = vxpose.xlu0.b32.cont [11/16] %v869, 128
    %907 = vxpose.xlu0.b32.cont [12/16] %v871, 128
    %908 = vxpose.xlu0.b32.cont [13/16] %v873, 128
    %909 = vxpose.xlu0.b32.cont [14/16] %v875, 128
    %910 = vxpose.xlu0.b32.cont [15/16] %v877, 128
    %911 = vxpose.xlu0.b32.end [16/16] %v879, 128
    %v912 = vpop.trf.xlu0
    %v913 = vpop.trf.xlu0
    %v914 = vpop.trf.xlu0
    %v915 = vpop.trf.xlu0
    %v916 = vpop.trf.xlu0
    %v917 = vpop.trf.xlu0
    %v918 = vpop.trf.xlu0
    %v919 = vpop.trf.xlu0
    %v920 = vpop.trf.xlu0
    %v921 = vpop.trf.xlu0
    %v922 = vpop.trf.xlu0
    %v923 = vpop.trf.xlu0
    %v924 = vpop.trf.xlu0
    %v925 = vpop.trf.xlu0
    %v926 = vpop.trf.xlu0
    %v927 = vpop.trf.xlu0
    %s928 = scalar_lea.vmem [#allocation2], 168
    %929 = vst [vmem:[%s928] sm:$0xff] %v912
    %930 = vst [vmem:[%s928 + $0x8] sm:$0xff] %v913
    %v931 = vld [vmem:[#allocation4 + $0x8] sm:$0xff]
    %v932 = vld [vmem:[#allocation4 + $0x18] sm:$0xff]
    %v933 = vld [vmem:[#allocation4 + $0x28] sm:$0xff]
    %v934 = vld [vmem:[#allocation4 + $0x38] sm:$0xff]
    %v935 = vld [vmem:[#allocation4 + $0x48] sm:$0xff]
    %v936 = vld [vmem:[#allocation4 + $0x58] sm:$0xff]
    %v937 = vld [vmem:[#allocation4 + $0x68] sm:$0xff]
    %v938 = vld [vmem:[#allocation4 + $0x78] sm:$0xff]
    %v939 = vld [vmem:[#allocation4 + $0x88] sm:$0xff]
    %v940 = vld [vmem:[#allocation4 + $0x98] sm:$0xff]
    %v941 = vld [vmem:[#allocation4 + $0xa8] sm:$0xff]
    %v942 = vld [vmem:[#allocation4 + $0xb8] sm:$0xff]
    %v943 = vld [vmem:[#allocation4 + $0xc8] sm:$0xff]
    %v944 = vld [vmem:[#allocation4 + $0xd8] sm:$0xff]
    %v945 = vld [vmem:[#allocation4 + $0xe8] sm:$0xff]
    %v946 = vld [vmem:[#allocation4 + $0xf8] sm:$0xff]
    %947 = vxpose.xlu0.b32.start [1/16] %v931, 128
    %948 = vxpose.xlu0.b32.cont [2/16] %v932, 128
    %949 = vxpose.xlu0.b32.cont [3/16] %v933, 128
    %950 = vxpose.xlu0.b32.cont [4/16] %v934, 128
    %951 = vxpose.xlu0.b32.cont [5/16] %v935, 128
    %952 = vxpose.xlu0.b32.cont [6/16] %v936, 128
    %953 = vxpose.xlu0.b32.cont [7/16] %v937, 128
    %954 = vxpose.xlu0.b32.cont [8/16] %v938, 128
    %955 = vxpose.xlu0.b32.cont [9/16] %v939, 128
    %956 = vxpose.xlu0.b32.cont [10/16] %v940, 128
    %957 = vxpose.xlu0.b32.cont [11/16] %v941, 128
    %958 = vxpose.xlu0.b32.cont [12/16] %v942, 128
    %959 = vxpose.xlu0.b32.cont [13/16] %v943, 128
    %960 = vxpose.xlu0.b32.cont [14/16] %v944, 128
    %961 = vxpose.xlu0.b32.cont [15/16] %v945, 128
    %962 = vxpose.xlu0.b32.end [16/16] %v946, 128
    %v963 = vpop.trf.xlu0
    %v964 = vpop.trf.xlu0
    %v965 = vpop.trf.xlu0
    %v966 = vpop.trf.xlu0
    %v967 = vpop.trf.xlu0
    %v968 = vpop.trf.xlu0
    %v969 = vpop.trf.xlu0
    %v970 = vpop.trf.xlu0
    %v971 = vpop.trf.xlu0
    %v972 = vpop.trf.xlu0
    %v973 = vpop.trf.xlu0
    %v974 = vpop.trf.xlu0
    %v975 = vpop.trf.xlu0
    %v976 = vpop.trf.xlu0
    %v977 = vpop.trf.xlu0
    %v978 = vpop.trf.xlu0
    %s979 = scalar_lea.vmem [#allocation2], 192
    %980 = vst [vmem:[%s979] sm:$0xff] %v963
    %981 = vst [vmem:[%s979 + $0x8] sm:$0xff] %v964
    %v982 = vld [vmem:[#allocation4 + $0x8] sm:$0xff]
    %v983 = vld [vmem:[#allocation4 + $0x18] sm:$0xff]
    %v984 = vld [vmem:[#allocation4 + $0x28] sm:$0xff]
    %v985 = vld [vmem:[#allocation4 + $0x38] sm:$0xff]
    %v986 = vld [vmem:[#allocation4 + $0x48] sm:$0xff]
    %v987 = vld [vmem:[#allocation4 + $0x58] sm:$0xff]
    %v988 = vld [vmem:[#allocation4 + $0x68] sm:$0xff]
    %v989 = vld [vmem:[#allocation4 + $0x78] sm:$0xff]
    %v990 = vld [vmem:[#allocation4 + $0x88] sm:$0xff]
    %v991 = vld [vmem:[#allocation4 + $0x98] sm:$0xff]
    %v992 = vld [vmem:[#allocation4 + $0xa8] sm:$0xff]
    %v993 = vld [vmem:[#allocation4 + $0xb8] sm:$0xff]
    %v994 = vld [vmem:[#allocation4 + $0xc8] sm:$0xff]
    %v995 = vld [vmem:[#allocation4 + $0xd8] sm:$0xff]
    %v996 = vld [vmem:[#allocation4 + $0xe8] sm:$0xff]
    %v997 = vld [vmem:[#allocation4 + $0xf8] sm:$0xff]
    %1014 = vrot.lane.b32.xlu0 %v982, 112
    %v1015 = vpop.permute.xlu0 %1014
    %1016 = vrot.lane.b32.xlu0 %v983, 112
    %v1017 = vpop.permute.xlu0 %1016
    %1018 = vrot.lane.b32.xlu0 %v984, 112
    %v1019 = vpop.permute.xlu0 %1018
    %1020 = vrot.lane.b32.xlu0 %v985, 112
    %v1021 = vpop.permute.xlu0 %1020
    %1022 = vrot.lane.b32.xlu0 %v986, 112
    %v1023 = vpop.permute.xlu0 %1022
    %1024 = vrot.lane.b32.xlu0 %v987, 112
    %v1025 = vpop.permute.xlu0 %1024
    %1026 = vrot.lane.b32.xlu0 %v988, 112
    %v1027 = vpop.permute.xlu0 %1026
    %1028 = vrot.lane.b32.xlu0 %v989, 112
    %v1029 = vpop.permute.xlu0 %1028
    %1030 = vrot.lane.b32.xlu0 %v990, 112
    %v1031 = vpop.permute.xlu0 %1030
    %1032 = vrot.lane.b32.xlu0 %v991, 112
    %v1033 = vpop.permute.xlu0 %1032
    %1034 = vrot.lane.b32.xlu0 %v992, 112
    %v1035 = vpop.permute.xlu0 %1034
    %1036 = vrot.lane.b32.xlu0 %v993, 112
    %v1037 = vpop.permute.xlu0 %1036
    %1038 = vrot.lane.b32.xlu0 %v994, 112
    %v1039 = vpop.permute.xlu0 %1038
    %1040 = vrot.lane.b32.xlu0 %v995, 112
    %v1041 = vpop.permute.xlu0 %1040
    %1042 = vrot.lane.b32.xlu0 %v996, 112
    %v1043 = vpop.permute.xlu0 %1042
    %1044 = vrot.lane.b32.xlu0 %v997, 112
    %v1045 = vpop.permute.xlu0 %1044
    %1062 = vxpose.xlu0.b32.start [1/16] %v1015, 128
    %1063 = vxpose.xlu0.b32.cont [2/16] %v1017, 128
    %1064 = vxpose.xlu0.b32.cont [3/16] %v1019, 128
    %1065 = vxpose.xlu0.b32.cont [4/16] %v1021, 128
    %1066 = vxpose.xlu0.b32.cont [5/16] %v1023, 128
    %1067 = vxpose.xlu0.b32.cont [6/16] %v1025, 128
    %1068 = vxpose.xlu0.b32.cont [7/16] %v1027, 128
    %1069 = vxpose.xlu0.b32.cont [8/16] %v1029, 128
    %1070 = vxpose.xlu0.b32.cont [9/16] %v1031, 128
    %1071 = vxpose.xlu0.b32.cont [10/16] %v1033, 128
    %1072 = vxpose.xlu0.b32.cont [11/16] %v1035, 128
    %1073 = vxpose.xlu0.b32.cont [12/16] %v1037, 128
    %1074 = vxpose.xlu0.b32.cont [13/16] %v1039, 128
    %1075 = vxpose.xlu0.b32.cont [14/16] %v1041, 128
    %1076 = vxpose.xlu0.b32.cont [15/16] %v1043, 128
    %1077 = vxpose.xlu0.b32.end [16/16] %v1045, 128
    %v1078 = vpop.trf.xlu0
    %v1079 = vpop.trf.xlu0
    %v1080 = vpop.trf.xlu0
    %v1081 = vpop.trf.xlu0
    %v1082 = vpop.trf.xlu0
    %v1083 = vpop.trf.xlu0
    %v1084 = vpop.trf.xlu0
    %v1085 = vpop.trf.xlu0
    %v1086 = vpop.trf.xlu0
    %v1087 = vpop.trf.xlu0
    %v1088 = vpop.trf.xlu0
    %v1089 = vpop.trf.xlu0
    %v1090 = vpop.trf.xlu0
    %v1091 = vpop.trf.xlu0
    %v1092 = vpop.trf.xlu0
    %v1093 = vpop.trf.xlu0
    %s1094 = scalar_lea.vmem [#allocation2], 216
    %1095 = vst [vmem:[%s1094] sm:$0xff] %v1078
    %1096 = vst [vmem:[%s1094 + $0x8] sm:$0xff] %v1079
    %v1097 = vld [vmem:[#allocation4 + $0x8] sm:$0xff]
    %v1098 = vld [vmem:[#allocation4 + $0x18] sm:$0xff]
    %v1099 = vld [vmem:[#allocation4 + $0x28] sm:$0xff]
    %v1100 = vld [vmem:[#allocation4 + $0x38] sm:$0xff]
    %v1101 = vld [vmem:[#allocation4 + $0x48] sm:$0xff]
    %v1102 = vld [vmem:[#allocation4 + $0x58] sm:$0xff]
    %v1103 = vld [vmem:[#allocation4 + $0x68] sm:$0xff]
    %v1104 = vld [vmem:[#allocation4 + $0x78] sm:$0xff]
    %v1105 = vld [vmem:[#allocation4 + $0x88] sm:$0xff]
    %v1106 = vld [vmem:[#allocation4 + $0x98] sm:$0xff]
    %v1107 = vld [vmem:[#allocation4 + $0xa8] sm:$0xff]
    %v1108 = vld [vmem:[#allocation4 + $0xb8] sm:$0xff]
    %v1109 = vld [vmem:[#allocation4 + $0xc8] sm:$0xff]
    %v1110 = vld [vmem:[#allocation4 + $0xd8] sm:$0xff]
    %v1111 = vld [vmem:[#allocation4 + $0xe8] sm:$0xff]
    %v1112 = vld [vmem:[#allocation4 + $0xf8] sm:$0xff]
    %1129 = vrot.lane.b32.xlu0 %v1097, 96
    %v1130 = vpop.permute.xlu0 %1129
    %1131 = vrot.lane.b32.xlu0 %v1098, 96
    %v1132 = vpop.permute.xlu0 %1131
    %1133 = vrot.lane.b32.xlu0 %v1099, 96
    %v1134 = vpop.permute.xlu0 %1133
    %1135 = vrot.lane.b32.xlu0 %v1100, 96
    %v1136 = vpop.permute.xlu0 %1135
    %1137 = vrot.lane.b32.xlu0 %v1101, 96
    %v1138 = vpop.permute.xlu0 %1137
    %1139 = vrot.lane.b32.xlu0 %v1102, 96
    %v1140 = vpop.permute.xlu0 %1139
    %1141 = vrot.lane.b32.xlu0 %v1103, 96
    %v1142 = vpop.permute.xlu0 %1141
    %1143 = vrot.lane.b32.xlu0 %v1104, 96
    %v1144 = vpop.permute.xlu0 %1143
    %1145 = vrot.lane.b32.xlu0 %v1105, 96
    %v1146 = vpop.permute.xlu0 %1145
    %1147 = vrot.lane.b32.xlu0 %v1106, 96
    %v1148 = vpop.permute.xlu0 %1147
    %1149 = vrot.lane.b32.xlu0 %v1107, 96
    %v1150 = vpop.permute.xlu0 %1149
    %1151 = vrot.lane.b32.xlu0 %v1108, 96
    %v1152 = vpop.permute.xlu0 %1151
    %1153 = vrot.lane.b32.xlu0 %v1109, 96
    %v1154 = vpop.permute.xlu0 %1153
    %1155 = vrot.lane.b32.xlu0 %v1110, 96
    %v1156 = vpop.permute.xlu0 %1155
    %1157 = vrot.lane.b32.xlu0 %v1111, 96
    %v1158 = vpop.permute.xlu0 %1157
    %1159 = vrot.lane.b32.xlu0 %v1112, 96
    %v1160 = vpop.permute.xlu0 %1159
    %1177 = vxpose.xlu0.b32.start [1/16] %v1130, 128
    %1178 = vxpose.xlu0.b32.cont [2/16] %v1132, 128
    %1179 = vxpose.xlu0.b32.cont [3/16] %v1134, 128
    %1180 = vxpose.xlu0.b32.cont [4/16] %v1136, 128
    %1181 = vxpose.xlu0.b32.cont [5/16] %v1138, 128
    %1182 = vxpose.xlu0.b32.cont [6/16] %v1140, 128
    %1183 = vxpose.xlu0.b32.cont [7/16] %v1142, 128
    %1184 = vxpose.xlu0.b32.cont [8/16] %v1144, 128
    %1185 = vxpose.xlu0.b32.cont [9/16] %v1146, 128
    %1186 = vxpose.xlu0.b32.cont [10/16] %v1148, 128
    %1187 = vxpose.xlu0.b32.cont [11/16] %v1150, 128
    %1188 = vxpose.xlu0.b32.cont [12/16] %v1152, 128
    %1189 = vxpose.xlu0.b32.cont [13/16] %v1154, 128
    %1190 = vxpose.xlu0.b32.cont [14/16] %v1156, 128
    %1191 = vxpose.xlu0.b32.cont [15/16] %v1158, 128
    %1192 = vxpose.xlu0.b32.end [16/16] %v1160, 128
    %v1193 = vpop.trf.xlu0
    %v1194 = vpop.trf.xlu0
    %v1195 = vpop.trf.xlu0
    %v1196 = vpop.trf.xlu0
    %v1197 = vpop.trf.xlu0
    %v1198 = vpop.trf.xlu0
    %v1199 = vpop.trf.xlu0
    %v1200 = vpop.trf.xlu0
    %v1201 = vpop.trf.xlu0
    %v1202 = vpop.trf.xlu0
    %v1203 = vpop.trf.xlu0
    %v1204 = vpop.trf.xlu0
    %v1205 = vpop.trf.xlu0
    %v1206 = vpop.trf.xlu0
    %v1207 = vpop.trf.xlu0
    %v1208 = vpop.trf.xlu0
    %s1209 = scalar_lea.vmem [#allocation2], 240
    %1210 = vst [vmem:[%s1209] sm:$0xff] %v1193
    %1211 = vst [vmem:[%s1209 + $0x8] sm:$0xff] %v1194
    %v1212 = vld [vmem:[#allocation4 + $0x8] sm:$0xff]
    %v1213 = vld [vmem:[#allocation4 + $0x18] sm:$0xff]
    %v1214 = vld [vmem:[#allocation4 + $0x28] sm:$0xff]
    %v1215 = vld [vmem:[#allocation4 + $0x38] sm:$0xff]
    %v1216 = vld [vmem:[#allocation4 + $0x48] sm:$0xff]
    %v1217 = vld [vmem:[#allocation4 + $0x58] sm:$0xff]
    %v1218 = vld [vmem:[#allocation4 + $0x68] sm:$0xff]
    %v1219 = vld [vmem:[#allocation4 + $0x78] sm:$0xff]
    %v1220 = vld [vmem:[#allocation4 + $0x88] sm:$0xff]
    %v1221 = vld [vmem:[#allocation4 + $0x98] sm:$0xff]
    %v1222 = vld [vmem:[#allocation4 + $0xa8] sm:$0xff]
    %v1223 = vld [vmem:[#allocation4 + $0xb8] sm:$0xff]
    %v1224 = vld [vmem:[#allocation4 + $0xc8] sm:$0xff]
    %v1225 = vld [vmem:[#allocation4 + $0xd8] sm:$0xff]
    %v1226 = vld [vmem:[#allocation4 + $0xe8] sm:$0xff]
    %v1227 = vld [vmem:[#allocation4 + $0xf8] sm:$0xff]
    %1244 = vrot.lane.b32.xlu0 %v1212, 80
    %v1245 = vpop.permute.xlu0 %1244
    %1246 = vrot.lane.b32.xlu0 %v1213, 80
    %v1247 = vpop.permute.xlu0 %1246
    %1248 = vrot.lane.b32.xlu0 %v1214, 80
    %v1249 = vpop.permute.xlu0 %1248
    %1250 = vrot.lane.b32.xlu0 %v1215, 80
    %v1251 = vpop.permute.xlu0 %1250
    %1252 = vrot.lane.b32.xlu0 %v1216, 80
    %v1253 = vpop.permute.xlu0 %1252
    %1254 = vrot.lane.b32.xlu0 %v1217, 80
    %v1255 = vpop.permute.xlu0 %1254
    %1256 = vrot.lane.b32.xlu0 %v1218, 80
    %v1257 = vpop.permute.xlu0 %1256
    %1258 = vrot.lane.b32.xlu0 %v1219, 80
    %v1259 = vpop.permute.xlu0 %1258
    %1260 = vrot.lane.b32.xlu0 %v1220, 80
    %v1261 = vpop.permute.xlu0 %1260
    %1262 = vrot.lane.b32.xlu0 %v1221, 80
    %v1263 = vpop.permute.xlu0 %1262
    %1264 = vrot.lane.b32.xlu0 %v1222, 80
    %v1265 = vpop.permute.xlu0 %1264
    %1266 = vrot.lane.b32.xlu0 %v1223, 80
    %v1267 = vpop.permute.xlu0 %1266
    %1268 = vrot.lane.b32.xlu0 %v1224, 80
    %v1269 = vpop.permute.xlu0 %1268
    %1270 = vrot.lane.b32.xlu0 %v1225, 80
    %v1271 = vpop.permute.xlu0 %1270
    %1272 = vrot.lane.b32.xlu0 %v1226, 80
    %v1273 = vpop.permute.xlu0 %1272
    %1274 = vrot.lane.b32.xlu0 %v1227, 80
    %v1275 = vpop.permute.xlu0 %1274
    %1292 = vxpose.xlu0.b32.start [1/16] %v1245, 128
    %1293 = vxpose.xlu0.b32.cont [2/16] %v1247, 128
    %1294 = vxpose.xlu0.b32.cont [3/16] %v1249, 128
    %1295 = vxpose.xlu0.b32.cont [4/16] %v1251, 128
    %1296 = vxpose.xlu0.b32.cont [5/16] %v1253, 128
    %1297 = vxpose.xlu0.b32.cont [6/16] %v1255, 128
    %1298 = vxpose.xlu0.b32.cont [7/16] %v1257, 128
    %1299 = vxpose.xlu0.b32.cont [8/16] %v1259, 128
    %1300 = vxpose.xlu0.b32.cont [9/16] %v1261, 128
    %1301 = vxpose.xlu0.b32.cont [10/16] %v1263, 128
    %1302 = vxpose.xlu0.b32.cont [11/16] %v1265, 128
    %1303 = vxpose.xlu0.b32.cont [12/16] %v1267, 128
    %1304 = vxpose.xlu0.b32.cont [13/16] %v1269, 128
    %1305 = vxpose.xlu0.b32.cont [14/16] %v1271, 128
    %1306 = vxpose.xlu0.b32.cont [15/16] %v1273, 128
    %1307 = vxpose.xlu0.b32.end [16/16] %v1275, 128
    %v1308 = vpop.trf.xlu0
    %v1309 = vpop.trf.xlu0
    %v1310 = vpop.trf.xlu0
    %v1311 = vpop.trf.xlu0
    %v1312 = vpop.trf.xlu0
    %v1313 = vpop.trf.xlu0
    %v1314 = vpop.trf.xlu0
    %v1315 = vpop.trf.xlu0
    %v1316 = vpop.trf.xlu0
    %v1317 = vpop.trf.xlu0
    %v1318 = vpop.trf.xlu0
    %v1319 = vpop.trf.xlu0
    %v1320 = vpop.trf.xlu0
    %v1321 = vpop.trf.xlu0
    %v1322 = vpop.trf.xlu0
    %v1323 = vpop.trf.xlu0
    %s1324 = scalar_lea.vmem [#allocation2], 264
    %1325 = vst [vmem:[%s1324] sm:$0xff] %v1308
    %1326 = vst [vmem:[%s1324 + $0x8] sm:$0xff] %v1309
    %v1327 = vld [vmem:[#allocation4 + $0x8] sm:$0xff]
    %v1328 = vld [vmem:[#allocation4 + $0x18] sm:$0xff]
    %v1329 = vld [vmem:[#allocation4 + $0x28] sm:$0xff]
    %v1330 = vld [vmem:[#allocation4 + $0x38] sm:$0xff]
    %v1331 = vld [vmem:[#allocation4 + $0x48] sm:$0xff]
    %v1332 = vld [vmem:[#allocation4 + $0x58] sm:$0xff]
    %v1333 = vld [vmem:[#allocation4 + $0x68] sm:$0xff]
    %v1334 = vld [vmem:[#allocation4 + $0x78] sm:$0xff]
    %v1335 = vld [vmem:[#allocation4 + $0x88] sm:$0xff]
    %v1336 = vld [vmem:[#allocation4 + $0x98] sm:$0xff]
    %v1337 = vld [vmem:[#allocation4 + $0xa8] sm:$0xff]
    %v1338 = vld [vmem:[#allocation4 + $0xb8] sm:$0xff]
    %v1339 = vld [vmem:[#allocation4 + $0xc8] sm:$0xff]
    %v1340 = vld [vmem:[#allocation4 + $0xd8] sm:$0xff]
    %v1341 = vld [vmem:[#allocation4 + $0xe8] sm:$0xff]
    %v1342 = vld [vmem:[#allocation4 + $0xf8] sm:$0xff]
    %1359 = vrot.lane.b32.xlu0 %v1327, 64
    %v1360 = vpop.permute.xlu0 %1359
    %1361 = vrot.lane.b32.xlu0 %v1328, 64
    %v1362 = vpop.permute.xlu0 %1361
    %1363 = vrot.lane.b32.xlu0 %v1329, 64
    %v1364 = vpop.permute.xlu0 %1363
    %1365 = vrot.lane.b32.xlu0 %v1330, 64
    %v1366 = vpop.permute.xlu0 %1365
    %1367 = vrot.lane.b32.xlu0 %v1331, 64
    %v1368 = vpop.permute.xlu0 %1367
    %1369 = vrot.lane.b32.xlu0 %v1332, 64
    %v1370 = vpop.permute.xlu0 %1369
    %1371 = vrot.lane.b32.xlu0 %v1333, 64
    %v1372 = vpop.permute.xlu0 %1371
    %1373 = vrot.lane.b32.xlu0 %v1334, 64
    %v1374 = vpop.permute.xlu0 %1373
    %1375 = vrot.lane.b32.xlu0 %v1335, 64
    %v1376 = vpop.permute.xlu0 %1375
    %1377 = vrot.lane.b32.xlu0 %v1336, 64
    %v1378 = vpop.permute.xlu0 %1377
    %1379 = vrot.lane.b32.xlu0 %v1337, 64
    %v1380 = vpop.permute.xlu0 %1379
    %1381 = vrot.lane.b32.xlu0 %v1338, 64
    %v1382 = vpop.permute.xlu0 %1381
    %1383 = vrot.lane.b32.xlu0 %v1339, 64
    %v1384 = vpop.permute.xlu0 %1383
    %1385 = vrot.lane.b32.xlu0 %v1340, 64
    %v1386 = vpop.permute.xlu0 %1385
    %1387 = vrot.lane.b32.xlu0 %v1341, 64
    %v1388 = vpop.permute.xlu0 %1387
    %1389 = vrot.lane.b32.xlu0 %v1342, 64
    %v1390 = vpop.permute.xlu0 %1389
    %1407 = vxpose.xlu0.b32.start [1/16] %v1360, 128
    %1408 = vxpose.xlu0.b32.cont [2/16] %v1362, 128
    %1409 = vxpose.xlu0.b32.cont [3/16] %v1364, 128
    %1410 = vxpose.xlu0.b32.cont [4/16] %v1366, 128
    %1411 = vxpose.xlu0.b32.cont [5/16] %v1368, 128
    %1412 = vxpose.xlu0.b32.cont [6/16] %v1370, 128
    %1413 = vxpose.xlu0.b32.cont [7/16] %v1372, 128
    %1414 = vxpose.xlu0.b32.cont [8/16] %v1374, 128
    %1415 = vxpose.xlu0.b32.cont [9/16] %v1376, 128
    %1416 = vxpose.xlu0.b32.cont [10/16] %v1378, 128
    %1417 = vxpose.xlu0.b32.cont [11/16] %v1380, 128
    %1418 = vxpose.xlu0.b32.cont [12/16] %v1382, 128
    %1419 = vxpose.xlu0.b32.cont [13/16] %v1384, 128
    %1420 = vxpose.xlu0.b32.cont [14/16] %v1386, 128
    %1421 = vxpose.xlu0.b32.cont [15/16] %v1388, 128
    %1422 = vxpose.xlu0.b32.end [16/16] %v1390, 128
    %v1423 = vpop.trf.xlu0
    %v1424 = vpop.trf.xlu0
    %v1425 = vpop.trf.xlu0
    %v1426 = vpop.trf.xlu0
    %v1427 = vpop.trf.xlu0
    %v1428 = vpop.trf.xlu0
    %v1429 = vpop.trf.xlu0
    %v1430 = vpop.trf.xlu0
    %v1431 = vpop.trf.xlu0
    %v1432 = vpop.trf.xlu0
    %v1433 = vpop.trf.xlu0
    %v1434 = vpop.trf.xlu0
    %v1435 = vpop.trf.xlu0
    %v1436 = vpop.trf.xlu0
    %v1437 = vpop.trf.xlu0
    %v1438 = vpop.trf.xlu0
    %s1439 = scalar_lea.vmem [#allocation2], 288
    %1440 = vst [vmem:[%s1439] sm:$0xff] %v1423
    %1441 = vst [vmem:[%s1439 + $0x8] sm:$0xff] %v1424
    %v1442 = vld [vmem:[#allocation4 + $0x8] sm:$0xff]
    %v1443 = vld [vmem:[#allocation4 + $0x18] sm:$0xff]
    %v1444 = vld [vmem:[#allocation4 + $0x28] sm:$0xff]
    %v1445 = vld [vmem:[#allocation4 + $0x38] sm:$0xff]
    %v1446 = vld [vmem:[#allocation4 + $0x48] sm:$0xff]
    %v1447 = vld [vmem:[#allocation4 + $0x58] sm:$0xff]
    %v1448 = vld [vmem:[#allocation4 + $0x68] sm:$0xff]
    %v1449 = vld [vmem:[#allocation4 + $0x78] sm:$0xff]
    %v1450 = vld [vmem:[#allocation4 + $0x88] sm:$0xff]
    %v1451 = vld [vmem:[#allocation4 + $0x98] sm:$0xff]
    %v1452 = vld [vmem:[#allocation4 + $0xa8] sm:$0xff]
    %v1453 = vld [vmem:[#allocation4 + $0xb8] sm:$0xff]
    %v1454 = vld [vmem:[#allocation4 + $0xc8] sm:$0xff]
    %v1455 = vld [vmem:[#allocation4 + $0xd8] sm:$0xff]
    %v1456 = vld [vmem:[#allocation4 + $0xe8] sm:$0xff]
    %v1457 = vld [vmem:[#allocation4 + $0xf8] sm:$0xff]
    %1474 = vrot.lane.b32.xlu0 %v1442, 48
    %v1475 = vpop.permute.xlu0 %1474
    %1476 = vrot.lane.b32.xlu0 %v1443, 48
    %v1477 = vpop.permute.xlu0 %1476
    %1478 = vrot.lane.b32.xlu0 %v1444, 48
    %v1479 = vpop.permute.xlu0 %1478
    %1480 = vrot.lane.b32.xlu0 %v1445, 48
    %v1481 = vpop.permute.xlu0 %1480
    %1482 = vrot.lane.b32.xlu0 %v1446, 48
    %v1483 = vpop.permute.xlu0 %1482
    %1484 = vrot.lane.b32.xlu0 %v1447, 48
    %v1485 = vpop.permute.xlu0 %1484
    %1486 = vrot.lane.b32.xlu0 %v1448, 48
    %v1487 = vpop.permute.xlu0 %1486
    %1488 = vrot.lane.b32.xlu0 %v1449, 48
    %v1489 = vpop.permute.xlu0 %1488
    %1490 = vrot.lane.b32.xlu0 %v1450, 48
    %v1491 = vpop.permute.xlu0 %1490
    %1492 = vrot.lane.b32.xlu0 %v1451, 48
    %v1493 = vpop.permute.xlu0 %1492
    %1494 = vrot.lane.b32.xlu0 %v1452, 48
    %v1495 = vpop.permute.xlu0 %1494
    %1496 = vrot.lane.b32.xlu0 %v1453, 48
    %v1497 = vpop.permute.xlu0 %1496
    %1498 = vrot.lane.b32.xlu0 %v1454, 48
    %v1499 = vpop.permute.xlu0 %1498
    %1500 = vrot.lane.b32.xlu0 %v1455, 48
    %v1501 = vpop.permute.xlu0 %1500
    %1502 = vrot.lane.b32.xlu0 %v1456, 48
    %v1503 = vpop.permute.xlu0 %1502
    %1504 = vrot.lane.b32.xlu0 %v1457, 48
    %v1505 = vpop.permute.xlu0 %1504
    %1522 = vxpose.xlu0.b32.start [1/16] %v1475, 128
    %1523 = vxpose.xlu0.b32.cont [2/16] %v1477, 128
    %1524 = vxpose.xlu0.b32.cont [3/16] %v1479, 128
    %1525 = vxpose.xlu0.b32.cont [4/16] %v1481, 128
    %1526 = vxpose.xlu0.b32.cont [5/16] %v1483, 128
    %1527 = vxpose.xlu0.b32.cont [6/16] %v1485, 128
    %1528 = vxpose.xlu0.b32.cont [7/16] %v1487, 128
    %1529 = vxpose.xlu0.b32.cont [8/16] %v1489, 128
    %1530 = vxpose.xlu0.b32.cont [9/16] %v1491, 128
    %1531 = vxpose.xlu0.b32.cont [10/16] %v1493, 128
    %1532 = vxpose.xlu0.b32.cont [11/16] %v1495, 128
    %1533 = vxpose.xlu0.b32.cont [12/16] %v1497, 128
    %1534 = vxpose.xlu0.b32.cont [13/16] %v1499, 128
    %1535 = vxpose.xlu0.b32.cont [14/16] %v1501, 128
    %1536 = vxpose.xlu0.b32.cont [15/16] %v1503, 128
    %1537 = vxpose.xlu0.b32.end [16/16] %v1505, 128
    %v1538 = vpop.trf.xlu0
    %v1539 = vpop.trf.xlu0
    %v1540 = vpop.trf.xlu0
    %v1541 = vpop.trf.xlu0
    %v1542 = vpop.trf.xlu0
    %v1543 = vpop.trf.xlu0
    %v1544 = vpop.trf.xlu0
    %v1545 = vpop.trf.xlu0
    %v1546 = vpop.trf.xlu0
    %v1547 = vpop.trf.xlu0
    %v1548 = vpop.trf.xlu0
    %v1549 = vpop.trf.xlu0
    %v1550 = vpop.trf.xlu0
    %v1551 = vpop.trf.xlu0
    %v1552 = vpop.trf.xlu0
    %v1553 = vpop.trf.xlu0
    %s1554 = scalar_lea.vmem [#allocation2], 312
    %1555 = vst [vmem:[%s1554] sm:$0xff] %v1538
    %1556 = vst [vmem:[%s1554 + $0x8] sm:$0xff] %v1539
    %v1557 = vld [vmem:[#allocation4 + $0x8] sm:$0xff]
    %v1558 = vld [vmem:[#allocation4 + $0x18] sm:$0xff]
    %v1559 = vld [vmem:[#allocation4 + $0x28] sm:$0xff]
    %v1560 = vld [vmem:[#allocation4 + $0x38] sm:$0xff]
    %v1561 = vld [vmem:[#allocation4 + $0x48] sm:$0xff]
    %v1562 = vld [vmem:[#allocation4 + $0x58] sm:$0xff]
    %v1563 = vld [vmem:[#allocation4 + $0x68] sm:$0xff]
    %v1564 = vld [vmem:[#allocation4 + $0x78] sm:$0xff]
    %v1565 = vld [vmem:[#allocation4 + $0x88] sm:$0xff]
    %v1566 = vld [vmem:[#allocation4 + $0x98] sm:$0xff]
    %v1567 = vld [vmem:[#allocation4 + $0xa8] sm:$0xff]
    %v1568 = vld [vmem:[#allocation4 + $0xb8] sm:$0xff]
    %v1569 = vld [vmem:[#allocation4 + $0xc8] sm:$0xff]
    %v1570 = vld [vmem:[#allocation4 + $0xd8] sm:$0xff]
    %v1571 = vld [vmem:[#allocation4 + $0xe8] sm:$0xff]
    %v1572 = vld [vmem:[#allocation4 + $0xf8] sm:$0xff]
    %1589 = vrot.lane.b32.xlu0 %v1557, 32
    %v1590 = vpop.permute.xlu0 %1589
    %1591 = vrot.lane.b32.xlu0 %v1558, 32
    %v1592 = vpop.permute.xlu0 %1591
    %1593 = vrot.lane.b32.xlu0 %v1559, 32
    %v1594 = vpop.permute.xlu0 %1593
    %1595 = vrot.lane.b32.xlu0 %v1560, 32
    %v1596 = vpop.permute.xlu0 %1595
    %1597 = vrot.lane.b32.xlu0 %v1561, 32
    %v1598 = vpop.permute.xlu0 %1597
    %1599 = vrot.lane.b32.xlu0 %v1562, 32
    %v1600 = vpop.permute.xlu0 %1599
    %1601 = vrot.lane.b32.xlu0 %v1563, 32
    %v1602 = vpop.permute.xlu0 %1601
    %1603 = vrot.lane.b32.xlu0 %v1564, 32
    %v1604 = vpop.permute.xlu0 %1603
    %1605 = vrot.lane.b32.xlu0 %v1565, 32
    %v1606 = vpop.permute.xlu0 %1605
    %1607 = vrot.lane.b32.xlu0 %v1566, 32
    %v1608 = vpop.permute.xlu0 %1607
    %1609 = vrot.lane.b32.xlu0 %v1567, 32
    %v1610 = vpop.permute.xlu0 %1609
    %1611 = vrot.lane.b32.xlu0 %v1568, 32
    %v1612 = vpop.permute.xlu0 %1611
    %1613 = vrot.lane.b32.xlu0 %v1569, 32
    %v1614 = vpop.permute.xlu0 %1613
    %1615 = vrot.lane.b32.xlu0 %v1570, 32
    %v1616 = vpop.permute.xlu0 %1615
    %1617 = vrot.lane.b32.xlu0 %v1571, 32
    %v1618 = vpop.permute.xlu0 %1617
    %1619 = vrot.lane.b32.xlu0 %v1572, 32
    %v1620 = vpop.permute.xlu0 %1619
    %1637 = vxpose.xlu0.b32.start [1/16] %v1590, 128
    %1638 = vxpose.xlu0.b32.cont [2/16] %v1592, 128
    %1639 = vxpose.xlu0.b32.cont [3/16] %v1594, 128
    %1640 = vxpose.xlu0.b32.cont [4/16] %v1596, 128
    %1641 = vxpose.xlu0.b32.cont [5/16] %v1598, 128
    %1642 = vxpose.xlu0.b32.cont [6/16] %v1600, 128
    %1643 = vxpose.xlu0.b32.cont [7/16] %v1602, 128
    %1644 = vxpose.xlu0.b32.cont [8/16] %v1604, 128
    %1645 = vxpose.xlu0.b32.cont [9/16] %v1606, 128
    %1646 = vxpose.xlu0.b32.cont [10/16] %v1608, 128
    %1647 = vxpose.xlu0.b32.cont [11/16] %v1610, 128
    %1648 = vxpose.xlu0.b32.cont [12/16] %v1612, 128
    %1649 = vxpose.xlu0.b32.cont [13/16] %v1614, 128
    %1650 = vxpose.xlu0.b32.cont [14/16] %v1616, 128
    %1651 = vxpose.xlu0.b32.cont [15/16] %v1618, 128
    %1652 = vxpose.xlu0.b32.end [16/16] %v1620, 128
    %v1653 = vpop.trf.xlu0
    %v1654 = vpop.trf.xlu0
    %v1655 = vpop.trf.xlu0
    %v1656 = vpop.trf.xlu0
    %v1657 = vpop.trf.xlu0
    %v1658 = vpop.trf.xlu0
    %v1659 = vpop.trf.xlu0
    %v1660 = vpop.trf.xlu0
    %v1661 = vpop.trf.xlu0
    %v1662 = vpop.trf.xlu0
    %v1663 = vpop.trf.xlu0
    %v1664 = vpop.trf.xlu0
    %v1665 = vpop.trf.xlu0
    %v1666 = vpop.trf.xlu0
    %v1667 = vpop.trf.xlu0
    %v1668 = vpop.trf.xlu0
    %s1669 = scalar_lea.vmem [#allocation2], 336
    %1670 = vst [vmem:[%s1669] sm:$0xff] %v1653
    %1671 = vst [vmem:[%s1669 + $0x8] sm:$0xff] %v1654
    %v1672 = vld [vmem:[#allocation4 + $0x8] sm:$0xff]
    %v1673 = vld [vmem:[#allocation4 + $0x18] sm:$0xff]
    %v1674 = vld [vmem:[#allocation4 + $0x28] sm:$0xff]
    %v1675 = vld [vmem:[#allocation4 + $0x38] sm:$0xff]
    %v1676 = vld [vmem:[#allocation4 + $0x48] sm:$0xff]
    %v1677 = vld [vmem:[#allocation4 + $0x58] sm:$0xff]
    %v1678 = vld [vmem:[#allocation4 + $0x68] sm:$0xff]
    %v1679 = vld [vmem:[#allocation4 + $0x78] sm:$0xff]
    %v1680 = vld [vmem:[#allocation4 + $0x88] sm:$0xff]
    %v1681 = vld [vmem:[#allocation4 + $0x98] sm:$0xff]
    %v1682 = vld [vmem:[#allocation4 + $0xa8] sm:$0xff]
    %v1683 = vld [vmem:[#allocation4 + $0xb8] sm:$0xff]
    %v1684 = vld [vmem:[#allocation4 + $0xc8] sm:$0xff]
    %v1685 = vld [vmem:[#allocation4 + $0xd8] sm:$0xff]
    %v1686 = vld [vmem:[#allocation4 + $0xe8] sm:$0xff]
    %v1687 = vld [vmem:[#allocation4 + $0xf8] sm:$0xff]
    %1704 = vrot.lane.b32.xlu0 %v1672, 16
    %v1705 = vpop.permute.xlu0 %1704
    %1706 = vrot.lane.b32.xlu0 %v1673, 16
    %v1707 = vpop.permute.xlu0 %1706
    %1708 = vrot.lane.b32.xlu0 %v1674, 16
    %v1709 = vpop.permute.xlu0 %1708
    %1710 = vrot.lane.b32.xlu0 %v1675, 16
    %v1711 = vpop.permute.xlu0 %1710
    %1712 = vrot.lane.b32.xlu0 %v1676, 16
    %v1713 = vpop.permute.xlu0 %1712
    %1714 = vrot.lane.b32.xlu0 %v1677, 16
    %v1715 = vpop.permute.xlu0 %1714
    %1716 = vrot.lane.b32.xlu0 %v1678, 16
    %v1717 = vpop.permute.xlu0 %1716
    %1718 = vrot.lane.b32.xlu0 %v1679, 16
    %v1719 = vpop.permute.xlu0 %1718
    %1720 = vrot.lane.b32.xlu0 %v1680, 16
    %v1721 = vpop.permute.xlu0 %1720
    %1722 = vrot.lane.b32.xlu0 %v1681, 16
    %v1723 = vpop.permute.xlu0 %1722
    %1724 = vrot.lane.b32.xlu0 %v1682, 16
    %v1725 = vpop.permute.xlu0 %1724
    %1726 = vrot.lane.b32.xlu0 %v1683, 16
    %v1727 = vpop.permute.xlu0 %1726
    %1728 = vrot.lane.b32.xlu0 %v1684, 16
    %v1729 = vpop.permute.xlu0 %1728
    %1730 = vrot.lane.b32.xlu0 %v1685, 16
    %v1731 = vpop.permute.xlu0 %1730
    %1732 = vrot.lane.b32.xlu0 %v1686, 16
    %v1733 = vpop.permute.xlu0 %1732
    %1734 = vrot.lane.b32.xlu0 %v1687, 16
    %v1735 = vpop.permute.xlu0 %1734
    %1752 = vxpose.xlu0.b32.start [1/16] %v1705, 128
    %1753 = vxpose.xlu0.b32.cont [2/16] %v1707, 128
    %1754 = vxpose.xlu0.b32.cont [3/16] %v1709, 128
    %1755 = vxpose.xlu0.b32.cont [4/16] %v1711, 128
    %1756 = vxpose.xlu0.b32.cont [5/16] %v1713, 128
    %1757 = vxpose.xlu0.b32.cont [6/16] %v1715, 128
    %1758 = vxpose.xlu0.b32.cont [7/16] %v1717, 128
    %1759 = vxpose.xlu0.b32.cont [8/16] %v1719, 128
    %1760 = vxpose.xlu0.b32.cont [9/16] %v1721, 128
    %1761 = vxpose.xlu0.b32.cont [10/16] %v1723, 128
    %1762 = vxpose.xlu0.b32.cont [11/16] %v1725, 128
    %1763 = vxpose.xlu0.b32.cont [12/16] %v1727, 128
    %1764 = vxpose.xlu0.b32.cont [13/16] %v1729, 128
    %1765 = vxpose.xlu0.b32.cont [14/16] %v1731, 128
    %1766 = vxpose.xlu0.b32.cont [15/16] %v1733, 128
    %1767 = vxpose.xlu0.b32.end [16/16] %v1735, 128
    %v1768 = vpop.trf.xlu0
    %v1769 = vpop.trf.xlu0
    %v1770 = vpop.trf.xlu0
    %v1771 = vpop.trf.xlu0
    %v1772 = vpop.trf.xlu0
    %v1773 = vpop.trf.xlu0
    %v1774 = vpop.trf.xlu0
    %v1775 = vpop.trf.xlu0
    %v1776 = vpop.trf.xlu0
    %v1777 = vpop.trf.xlu0
    %v1778 = vpop.trf.xlu0
    %v1779 = vpop.trf.xlu0
    %v1780 = vpop.trf.xlu0
    %v1781 = vpop.trf.xlu0
    %v1782 = vpop.trf.xlu0
    %v1783 = vpop.trf.xlu0
    %s1784 = scalar_lea.vmem [#allocation2], 360
    %1785 = vst [vmem:[%s1784] sm:$0xff] %v1768
    %1786 = vst [vmem:[%s1784 + $0x8] sm:$0xff] %v1769
    %1787 = vst [vmem:[#allocation2 + $0x10] sm:$0x7] 0.0
    %1788 = vst [vmem:[#allocation2 + $0x28] sm:$0x7] 0.0
    %1789 = vst [vmem:[#allocation2 + $0x40] sm:$0x7] 0.0
    %1790 = vst [vmem:[#allocation2 + $0x58] sm:$0x7] 0.0
    %1791 = vst [vmem:[#allocation2 + $0x70] sm:$0x7] 0.0
    %1792 = vst [vmem:[#allocation2 + $0x88] sm:$0x7] 0.0
    %1793 = vst [vmem:[#allocation2 + $0xa0] sm:$0x7] 0.0
    %1794 = vst [vmem:[#allocation2 + $0xb8] sm:$0x7] 0.0
    %1795 = vst [vmem:[#allocation2 + $0xd0] sm:$0x7] 0.0
    %1796 = vst [vmem:[#allocation2 + $0xe8] sm:$0x7] 0.0
    %1797 = vst [vmem:[#allocation2 + $0x100] sm:$0x7] 0.0
    %1798 = vst [vmem:[#allocation2 + $0x118] sm:$0x7] 0.0
    %1799 = vst [vmem:[#allocation2 + $0x130] sm:$0x7] 0.0
    %1800 = vst [vmem:[#allocation2 + $0x148] sm:$0x7] 0.0
    %1801 = vst [vmem:[#allocation2 + $0x160] sm:$0x7] 0.0
    %1802 = vst [vmem:[#allocation2 + $0x178] sm:$0x7] 0.0
    %v1803 = vld [vmem:[#allocation2] sm:$0xff]
    %v1804 = vld [vmem:[#allocation2 + $0x8] sm:$0xff]
    %v1805 = vld [vmem:[#allocation2 + $0x18] sm:$0xff]
    %v1806 = vld [vmem:[#allocation2 + $0x20] sm:$0xff]
    %v1807 = vld [vmem:[#allocation2 + $0x30] sm:$0xff]
    %v1808 = vld [vmem:[#allocation2 + $0x38] sm:$0xff]
    %v1809 = vld [vmem:[#allocation2 + $0x48] sm:$0xff]
    %v1810 = vld [vmem:[#allocation2 + $0x50] sm:$0xff]
    %v1811 = vld [vmem:[#allocation2 + $0x60] sm:$0xff]
    %v1812 = vld [vmem:[#allocation2 + $0x68] sm:$0xff]
    %v1813 = vld [vmem:[#allocation2 + $0x78] sm:$0xff]
    %v1814 = vld [vmem:[#allocation2 + $0x80] sm:$0xff]
    %v1815 = vld [vmem:[#allocation2 + $0x90] sm:$0xff]
    %v1816 = vld [vmem:[#allocation2 + $0x98] sm:$0xff]
    %v1817 = vld [vmem:[#allocation2 + $0xa8] sm:$0xff]
    %v1818 = vld [vmem:[#allocation2 + $0xb0] sm:$0xff]
    %v1819 = vld [vmem:[#allocation3] sm:$0x1]
    %v1820 = vlaneseq
    %v1821 = vshrl.u32 %v1820, 7
    %v1822 = vsub.s32 0, %v1821
    %v1823 = vrot.slane %v1819, %v1822
    %v1824 = vmul.f32 %v1803, %v1823
    %v1825 = vmul.f32 %v1804, %v1823
    %v1826 = vmul.f32 %v1805, %v1823
    %v1827 = vmul.f32 %v1806, %v1823
    %v1828 = vmul.f32 %v1807, %v1823
    %v1829 = vmul.f32 %v1808, %v1823
    %v1830 = vmul.f32 %v1809, %v1823
    %v1831 = vmul.f32 %v1810, %v1823
    %v1832 = vmul.f32 %v1811, %v1823
    %v1833 = vmul.f32 %v1812, %v1823
    %v1834 = vmul.f32 %v1813, %v1823
    %v1835 = vmul.f32 %v1814, %v1823
    %v1836 = vmul.f32 %v1815, %v1823
    %v1837 = vmul.f32 %v1816, %v1823
    %v1838 = vmul.f32 %v1817, %v1823
    %v1839 = vmul.f32 %v1818, %v1823
    %v1840 = vadd.f32 %v1824, 0.0
    %v1841 = vadd.f32 %v1825, 0.0
    %v1842 = vadd.f32 %v1826, 0.0
    %v1843 = vadd.f32 %v1827, 0.0
    %v1844 = vadd.f32 %v1828, 0.0
    %v1845 = vadd.f32 %v1829, 0.0
    %v1846 = vadd.f32 %v1830, 0.0
    %v1847 = vadd.f32 %v1831, 0.0
    %v1848 = vadd.f32 %v1832, 0.0
    %v1849 = vadd.f32 %v1833, 0.0
    %v1850 = vadd.f32 %v1834, 0.0
    %v1851 = vadd.f32 %v1835, 0.0
    %v1852 = vadd.f32 %v1836, 0.0
    %v1853 = vadd.f32 %v1837, 0.0
    %v1854 = vadd.f32 %v1838, 0.0
    %v1855 = vadd.f32 %v1839, 0.0
    %v1856 = vld [vmem:[#allocation2 + $0x1] sm:$0xff]
    %v1857 = vld [vmem:[#allocation2 + $0x9] sm:$0xff]
    %v1858 = vld [vmem:[#allocation2 + $0x19] sm:$0xff]
    %v1859 = vld [vmem:[#allocation2 + $0x21] sm:$0xff]
    %v1860 = vld [vmem:[#allocation2 + $0x31] sm:$0xff]
    %v1861 = vld [vmem:[#allocation2 + $0x39] sm:$0xff]
    %v1862 = vld [vmem:[#allocation2 + $0x49] sm:$0xff]
    %v1863 = vld [vmem:[#allocation2 + $0x51] sm:$0xff]
    %v1864 = vld [vmem:[#allocation2 + $0x61] sm:$0xff]
    %v1865 = vld [vmem:[#allocation2 + $0x69] sm:$0xff]
    %v1866 = vld [vmem:[#allocation2 + $0x79] sm:$0xff]
    %v1867 = vld [vmem:[#allocation2 + $0x81] sm:$0xff]
    %v1868 = vld [vmem:[#allocation2 + $0x91] sm:$0xff]
    %v1869 = vld [vmem:[#allocation2 + $0x99] sm:$0xff]
    %v1870 = vld [vmem:[#allocation2 + $0xa9] sm:$0xff]
    %v1871 = vld [vmem:[#allocation2 + $0xb1] sm:$0xff]
    %v1872 = vld [vmem:[#allocation3 + $0x1] sm:$0x1]
    %v1873 = vlaneseq
    %v1874 = vshrl.u32 %v1873, 7
    %v1875 = vsub.s32 0, %v1874
    %v1876 = vrot.slane %v1872, %v1875
    %v1877 = vmul.f32 %v1856, %v1876
    %v1878 = vmul.f32 %v1857, %v1876
    %v1879 = vmul.f32 %v1858, %v1876
    %v1880 = vmul.f32 %v1859, %v1876
    %v1881 = vmul.f32 %v1860, %v1876
    %v1882 = vmul.f32 %v1861, %v1876
    %v1883 = vmul.f32 %v1862, %v1876
    %v1884 = vmul.f32 %v1863, %v1876
    %v1885 = vmul.f32 %v1864, %v1876
    %v1886 = vmul.f32 %v1865, %v1876
    %v1887 = vmul.f32 %v1866, %v1876
    %v1888 = vmul.f32 %v1867, %v1876
    %v1889 = vmul.f32 %v1868, %v1876
    %v1890 = vmul.f32 %v1869, %v1876
    %v1891 = vmul.f32 %v1870, %v1876
    %v1892 = vmul.f32 %v1871, %v1876
    %v1893 = vadd.f32 %v1840, %v1877
    %v1894 = vadd.f32 %v1841, %v1878
    %v1895 = vadd.f32 %v1842, %v1879
    %v1896 = vadd.f32 %v1843, %v1880
    %v1897 = vadd.f32 %v1844, %v1881
    %v1898 = vadd.f32 %v1845, %v1882
    %v1899 = vadd.f32 %v1846, %v1883
    %v1900 = vadd.f32 %v1847, %v1884
    %v1901 = vadd.f32 %v1848, %v1885
    %v1902 = vadd.f32 %v1849, %v1886
    %v1903 = vadd.f32 %v1850, %v1887
    %v1904 = vadd.f32 %v1851, %v1888
    %v1905 = vadd.f32 %v1852, %v1889
    %v1906 = vadd.f32 %v1853, %v1890
    %v1907 = vadd.f32 %v1854, %v1891
    %v1908 = vadd.f32 %v1855, %v1892
    %v1909 = vld [vmem:[#allocation2 + $0x2] sm:$0xff]
    %v1910 = vld [vmem:[#allocation2 + $0xa] sm:$0xff]
    %v1911 = vld [vmem:[#allocation2 + $0x1a] sm:$0xff]
    %v1912 = vld [vmem:[#allocation2 + $0x22] sm:$0xff]
    %v1913 = vld [vmem:[#allocation2 + $0x32] sm:$0xff]
    %v1914 = vld [vmem:[#allocation2 + $0x3a] sm:$0xff]
    %v1915 = vld [vmem:[#allocation2 + $0x4a] sm:$0xff]
    %v1916 = vld [vmem:[#allocation2 + $0x52] sm:$0xff]
    %v1917 = vld [vmem:[#allocation2 + $0x62] sm:$0xff]
    %v1918 = vld [vmem:[#allocation2 + $0x6a] sm:$0xff]
    %v1919 = vld [vmem:[#allocation2 + $0x7a] sm:$0xff]
    %v1920 = vld [vmem:[#allocation2 + $0x82] sm:$0xff]
    %v1921 = vld [vmem:[#allocation2 + $0x92] sm:$0xff]
    %v1922 = vld [vmem:[#allocation2 + $0x9a] sm:$0xff]
    %v1923 = vld [vmem:[#allocation2 + $0xaa] sm:$0xff]
    %v1924 = vld [vmem:[#allocation2 + $0xb2] sm:$0xff]
    %v1925 = vld [vmem:[#allocation3 + $0x2] sm:$0x1]
    %v1926 = vlaneseq
    %v1927 = vshrl.u32 %v1926, 7
    %v1928 = vsub.s32 0, %v1927
    %v1929 = vrot.slane %v1925, %v1928
    %v1930 = vmul.f32 %v1909, %v1929
    %v1931 = vmul.f32 %v1910, %v1929
    %v1932 = vmul.f32 %v1911, %v1929
    %v1933 = vmul.f32 %v1912, %v1929
    %v1934 = vmul.f32 %v1913, %v1929
    %v1935 = vmul.f32 %v1914, %v1929
    %v1936 = vmul.f32 %v1915, %v1929
    %v1937 = vmul.f32 %v1916, %v1929
    %v1938 = vmul.f32 %v1917, %v1929
    %v1939 = vmul.f32 %v1918, %v1929
    %v1940 = vmul.f32 %v1919, %v1929
    %v1941 = vmul.f32 %v1920, %v1929
    %v1942 = vmul.f32 %v1921, %v1929
    %v1943 = vmul.f32 %v1922, %v1929
    %v1944 = vmul.f32 %v1923, %v1929
    %v1945 = vmul.f32 %v1924, %v1929
    %v1946 = vadd.f32 %v1893, %v1930
    %v1947 = vadd.f32 %v1894, %v1931
    %v1948 = vadd.f32 %v1895, %v1932
    %v1949 = vadd.f32 %v1896, %v1933
    %v1950 = vadd.f32 %v1897, %v1934
    %v1951 = vadd.f32 %v1898, %v1935
    %v1952 = vadd.f32 %v1899, %v1936
    %v1953 = vadd.f32 %v1900, %v1937
    %v1954 = vadd.f32 %v1901, %v1938
    %v1955 = vadd.f32 %v1902, %v1939
    %v1956 = vadd.f32 %v1903, %v1940
    %v1957 = vadd.f32 %v1904, %v1941
    %v1958 = vadd.f32 %v1905, %v1942
    %v1959 = vadd.f32 %v1906, %v1943
    %v1960 = vadd.f32 %v1907, %v1944
    %v1961 = vadd.f32 %v1908, %v1945
    %v1962 = vld [vmem:[#allocation2 + $0x3] sm:$0xff]
    %v1963 = vld [vmem:[#allocation2 + $0xb] sm:$0xff]
    %v1964 = vld [vmem:[#allocation2 + $0x1b] sm:$0xff]
    %v1965 = vld [vmem:[#allocation2 + $0x23] sm:$0xff]
    %v1966 = vld [vmem:[#allocation2 + $0x33] sm:$0xff]
    %v1967 = vld [vmem:[#allocation2 + $0x3b] sm:$0xff]
    %v1968 = vld [vmem:[#allocation2 + $0x4b] sm:$0xff]
    %v1969 = vld [vmem:[#allocation2 + $0x53] sm:$0xff]
    %v1970 = vld [vmem:[#allocation2 + $0x63] sm:$0xff]
    %v1971 = vld [vmem:[#allocation2 + $0x6b] sm:$0xff]
    %v1972 = vld [vmem:[#allocation2 + $0x7b] sm:$0xff]
    %v1973 = vld [vmem:[#allocation2 + $0x83] sm:$0xff]
    %v1974 = vld [vmem:[#allocation2 + $0x93] sm:$0xff]
    %v1975 = vld [vmem:[#allocation2 + $0x9b] sm:$0xff]
    %v1976 = vld [vmem:[#allocation2 + $0xab] sm:$0xff]
    %v1977 = vld [vmem:[#allocation2 + $0xb3] sm:$0xff]
    %v1978 = vld [vmem:[#allocation3 + $0x3] sm:$0x1]
    %v1979 = vlaneseq
    %v1980 = vshrl.u32 %v1979, 7
    %v1981 = vsub.s32 0, %v1980
    %v1982 = vrot.slane %v1978, %v1981
    %v1983 = vmul.f32 %v1962, %v1982
    %v1984 = vmul.f32 %v1963, %v1982
    %v1985 = vmul.f32 %v1964, %v1982
    %v1986 = vmul.f32 %v1965, %v1982
    %v1987 = vmul.f32 %v1966, %v1982
    %v1988 = vmul.f32 %v1967, %v1982
    %v1989 = vmul.f32 %v1968, %v1982
    %v1990 = vmul.f32 %v1969, %v1982
    %v1991 = vmul.f32 %v1970, %v1982
    %v1992 = vmul.f32 %v1971, %v1982
    %v1993 = vmul.f32 %v1972, %v1982
    %v1994 = vmul.f32 %v1973, %v1982
    %v1995 = vmul.f32 %v1974, %v1982
    %v1996 = vmul.f32 %v1975, %v1982
    %v1997 = vmul.f32 %v1976, %v1982
    %v1998 = vmul.f32 %v1977, %v1982
    %v1999 = vadd.f32 %v1946, %v1983
    %v2000 = vadd.f32 %v1947, %v1984
    %v2001 = vadd.f32 %v1948, %v1985
    %v2002 = vadd.f32 %v1949, %v1986
    %v2003 = vadd.f32 %v1950, %v1987
    %v2004 = vadd.f32 %v1951, %v1988
    %v2005 = vadd.f32 %v1952, %v1989
    %v2006 = vadd.f32 %v1953, %v1990
    %v2007 = vadd.f32 %v1954, %v1991
    %v2008 = vadd.f32 %v1955, %v1992
    %v2009 = vadd.f32 %v1956, %v1993
    %v2010 = vadd.f32 %v1957, %v1994
    %v2011 = vadd.f32 %v1958, %v1995
    %v2012 = vadd.f32 %v1959, %v1996
    %v2013 = vadd.f32 %v1960, %v1997
    %v2014 = vadd.f32 %v1961, %v1998
    %v2015 = vld [vmem:[%s238] sm:$0xff]
    %v2016 = vld [vmem:[%s238 + $0x8] sm:$0xff]
    %v2017 = vld [vmem:[%s238 + $0x18] sm:$0xff]
    %v2018 = vld [vmem:[%s238 + $0x20] sm:$0xff]
    %v2019 = vld [vmem:[%s238 + $0x30] sm:$0xff]
    %v2020 = vld [vmem:[%s238 + $0x38] sm:$0xff]
    %v2021 = vld [vmem:[%s238 + $0x48] sm:$0xff]
    %v2022 = vld [vmem:[%s238 + $0x50] sm:$0xff]
    %v2023 = vld [vmem:[%s238 + $0x60] sm:$0xff]
    %v2024 = vld [vmem:[%s238 + $0x68] sm:$0xff]
    %v2025 = vld [vmem:[%s238 + $0x78] sm:$0xff]
    %v2026 = vld [vmem:[%s238 + $0x80] sm:$0xff]
    %v2027 = vld [vmem:[%s238 + $0x90] sm:$0xff]
    %v2028 = vld [vmem:[%s238 + $0x98] sm:$0xff]
    %v2029 = vld [vmem:[%s238 + $0xa8] sm:$0xff]
    %v2030 = vld [vmem:[%s238 + $0xb0] sm:$0xff]
    %v2031 = vld [vmem:[#allocation3 + $0x4] sm:$0x1]
    %v2032 = vlaneseq
    %v2033 = vshrl.u32 %v2032, 7
    %v2034 = vsub.s32 0, %v2033
    %v2035 = vrot.slane %v2031, %v2034
    %v2036 = vmul.f32 %v2015, %v2035
    %v2037 = vmul.f32 %v2016, %v2035
    %v2038 = vmul.f32 %v2017, %v2035
    %v2039 = vmul.f32 %v2018, %v2035
    %v2040 = vmul.f32 %v2019, %v2035
    %v2041 = vmul.f32 %v2020, %v2035
    %v2042 = vmul.f32 %v2021, %v2035
    %v2043 = vmul.f32 %v2022, %v2035
    %v2044 = vmul.f32 %v2023, %v2035
    %v2045 = vmul.f32 %v2024, %v2035
    %v2046 = vmul.f32 %v2025, %v2035
    %v2047 = vmul.f32 %v2026, %v2035
    %v2048 = vmul.f32 %v2027, %v2035
    %v2049 = vmul.f32 %v2028, %v2035
    %v2050 = vmul.f32 %v2029, %v2035
    %v2051 = vmul.f32 %v2030, %v2035
    %v2052 = vadd.f32 %v1999, %v2036
    %v2053 = vadd.f32 %v2000, %v2037
    %v2054 = vadd.f32 %v2001, %v2038
    %v2055 = vadd.f32 %v2002, %v2039
    %v2056 = vadd.f32 %v2003, %v2040
    %v2057 = vadd.f32 %v2004, %v2041
    %v2058 = vadd.f32 %v2005, %v2042
    %v2059 = vadd.f32 %v2006, %v2043
    %v2060 = vadd.f32 %v2007, %v2044
    %v2061 = vadd.f32 %v2008, %v2045
    %v2062 = vadd.f32 %v2009, %v2046
    %v2063 = vadd.f32 %v2010, %v2047
    %v2064 = vadd.f32 %v2011, %v2048
    %v2065 = vadd.f32 %v2012, %v2049
    %v2066 = vadd.f32 %v2013, %v2050
    %v2067 = vadd.f32 %v2014, %v2051
    %v2068 = vld [vmem:[%s238 + $0x1] sm:$0xff]
    %v2069 = vld [vmem:[%s238 + $0x9] sm:$0xff]
    %v2070 = vld [vmem:[%s238 + $0x19] sm:$0xff]
    %v2071 = vld [vmem:[%s238 + $0x21] sm:$0xff]
    %v2072 = vld [vmem:[%s238 + $0x31] sm:$0xff]
    %v2073 = vld [vmem:[%s238 + $0x39] sm:$0xff]
    %v2074 = vld [vmem:[%s238 + $0x49] sm:$0xff]
    %v2075 = vld [vmem:[%s238 + $0x51] sm:$0xff]
    %v2076 = vld [vmem:[%s238 + $0x61] sm:$0xff]
    %v2077 = vld [vmem:[%s238 + $0x69] sm:$0xff]
    %v2078 = vld [vmem:[%s238 + $0x79] sm:$0xff]
    %v2079 = vld [vmem:[%s238 + $0x81] sm:$0xff]
    %v2080 = vld [vmem:[%s238 + $0x91] sm:$0xff]
    %v2081 = vld [vmem:[%s238 + $0x99] sm:$0xff]
    %v2082 = vld [vmem:[%s238 + $0xa9] sm:$0xff]
    %v2083 = vld [vmem:[%s238 + $0xb1] sm:$0xff]
    %v2084 = vld [vmem:[#allocation3 + $0x5] sm:$0x1]
    %v2085 = vlaneseq
    %v2086 = vshrl.u32 %v2085, 7
    %v2087 = vsub.s32 0, %v2086
    %v2088 = vrot.slane %v2084, %v2087
    %v2089 = vmul.f32 %v2068, %v2088
    %v2090 = vmul.f32 %v2069, %v2088
    %v2091 = vmul.f32 %v2070, %v2088
    %v2092 = vmul.f32 %v2071, %v2088
    %v2093 = vmul.f32 %v2072, %v2088
    %v2094 = vmul.f32 %v2073, %v2088
    %v2095 = vmul.f32 %v2074, %v2088
    %v2096 = vmul.f32 %v2075, %v2088
    %v2097 = vmul.f32 %v2076, %v2088
    %v2098 = vmul.f32 %v2077, %v2088
    %v2099 = vmul.f32 %v2078, %v2088
    %v2100 = vmul.f32 %v2079, %v2088
    %v2101 = vmul.f32 %v2080, %v2088
    %v2102 = vmul.f32 %v2081, %v2088
    %v2103 = vmul.f32 %v2082, %v2088
    %v2104 = vmul.f32 %v2083, %v2088
    %v2105 = vadd.f32 %v2052, %v2089
    %v2106 = vadd.f32 %v2053, %v2090
    %v2107 = vadd.f32 %v2054, %v2091
    %v2108 = vadd.f32 %v2055, %v2092
    %v2109 = vadd.f32 %v2056, %v2093
    %v2110 = vadd.f32 %v2057, %v2094
    %v2111 = vadd.f32 %v2058, %v2095
    %v2112 = vadd.f32 %v2059, %v2096
    %v2113 = vadd.f32 %v2060, %v2097
    %v2114 = vadd.f32 %v2061, %v2098
    %v2115 = vadd.f32 %v2062, %v2099
    %v2116 = vadd.f32 %v2063, %v2100
    %v2117 = vadd.f32 %v2064, %v2101
    %v2118 = vadd.f32 %v2065, %v2102
    %v2119 = vadd.f32 %v2066, %v2103
    %v2120 = vadd.f32 %v2067, %v2104
    %v2121 = vld [vmem:[%s238 + $0x2] sm:$0xff]
    %v2122 = vld [vmem:[%s238 + $0xa] sm:$0xff]
    %v2123 = vld [vmem:[%s238 + $0x1a] sm:$0xff]
    %v2124 = vld [vmem:[%s238 + $0x22] sm:$0xff]
    %v2125 = vld [vmem:[%s238 + $0x32] sm:$0xff]
    %v2126 = vld [vmem:[%s238 + $0x3a] sm:$0xff]
    %v2127 = vld [vmem:[%s238 + $0x4a] sm:$0xff]
    %v2128 = vld [vmem:[%s238 + $0x52] sm:$0xff]
    %v2129 = vld [vmem:[%s238 + $0x62] sm:$0xff]
    %v2130 = vld [vmem:[%s238 + $0x6a] sm:$0xff]
    %v2131 = vld [vmem:[%s238 + $0x7a] sm:$0xff]
    %v2132 = vld [vmem:[%s238 + $0x82] sm:$0xff]
    %v2133 = vld [vmem:[%s238 + $0x92] sm:$0xff]
    %v2134 = vld [vmem:[%s238 + $0x9a] sm:$0xff]
    %v2135 = vld [vmem:[%s238 + $0xaa] sm:$0xff]
    %v2136 = vld [vmem:[%s238 + $0xb2] sm:$0xff]
    %v2137 = vld [vmem:[#allocation3 + $0x6] sm:$0x1]
    %v2138 = vlaneseq
    %v2139 = vshrl.u32 %v2138, 7
    %v2140 = vsub.s32 0, %v2139
    %v2141 = vrot.slane %v2137, %v2140
    %v2142 = vmul.f32 %v2121, %v2141
    %v2143 = vmul.f32 %v2122, %v2141
    %v2144 = vmul.f32 %v2123, %v2141
    %v2145 = vmul.f32 %v2124, %v2141
    %v2146 = vmul.f32 %v2125, %v2141
    %v2147 = vmul.f32 %v2126, %v2141
    %v2148 = vmul.f32 %v2127, %v2141
    %v2149 = vmul.f32 %v2128, %v2141
    %v2150 = vmul.f32 %v2129, %v2141
    %v2151 = vmul.f32 %v2130, %v2141
    %v2152 = vmul.f32 %v2131, %v2141
    %v2153 = vmul.f32 %v2132, %v2141
    %v2154 = vmul.f32 %v2133, %v2141
    %v2155 = vmul.f32 %v2134, %v2141
    %v2156 = vmul.f32 %v2135, %v2141
    %v2157 = vmul.f32 %v2136, %v2141
    %v2158 = vadd.f32 %v2105, %v2142
    %v2159 = vadd.f32 %v2106, %v2143
    %v2160 = vadd.f32 %v2107, %v2144
    %v2161 = vadd.f32 %v2108, %v2145
    %v2162 = vadd.f32 %v2109, %v2146
    %v2163 = vadd.f32 %v2110, %v2147
    %v2164 = vadd.f32 %v2111, %v2148
    %v2165 = vadd.f32 %v2112, %v2149
    %v2166 = vadd.f32 %v2113, %v2150
    %v2167 = vadd.f32 %v2114, %v2151
    %v2168 = vadd.f32 %v2115, %v2152
    %v2169 = vadd.f32 %v2116, %v2153
    %v2170 = vadd.f32 %v2117, %v2154
    %v2171 = vadd.f32 %v2118, %v2155
    %v2172 = vadd.f32 %v2119, %v2156
    %v2173 = vadd.f32 %v2120, %v2157
    %v2174 = vld [vmem:[%s238 + $0x3] sm:$0xff]
    %v2175 = vld [vmem:[%s238 + $0xb] sm:$0xff]
    %v2176 = vld [vmem:[%s238 + $0x1b] sm:$0xff]
    %v2177 = vld [vmem:[%s238 + $0x23] sm:$0xff]
    %v2178 = vld [vmem:[%s238 + $0x33] sm:$0xff]
    %v2179 = vld [vmem:[%s238 + $0x3b] sm:$0xff]
    %v2180 = vld [vmem:[%s238 + $0x4b] sm:$0xff]
    %v2181 = vld [vmem:[%s238 + $0x53] sm:$0xff]
    %v2182 = vld [vmem:[%s238 + $0x63] sm:$0xff]
    %v2183 = vld [vmem:[%s238 + $0x6b] sm:$0xff]
    %v2184 = vld [vmem:[%s238 + $0x7b] sm:$0xff]
    %v2185 = vld [vmem:[%s238 + $0x83] sm:$0xff]
    %v2186 = vld [vmem:[%s238 + $0x93] sm:$0xff]
    %v2187 = vld [vmem:[%s238 + $0x9b] sm:$0xff]
    %v2188 = vld [vmem:[%s238 + $0xab] sm:$0xff]
    %v2189 = vld [vmem:[%s238 + $0xb3] sm:$0xff]
    %v2190 = vld [vmem:[#allocation3 + $0x7] sm:$0x1]
    %v2191 = vlaneseq
    %v2192 = vshrl.u32 %v2191, 7
    %v2193 = vsub.s32 0, %v2192
    %v2194 = vrot.slane %v2190, %v2193
    %v2195 = vmul.f32 %v2174, %v2194
    %v2196 = vmul.f32 %v2175, %v2194
    %v2197 = vmul.f32 %v2176, %v2194
    %v2198 = vmul.f32 %v2177, %v2194
    %v2199 = vmul.f32 %v2178, %v2194
    %v2200 = vmul.f32 %v2179, %v2194
    %v2201 = vmul.f32 %v2180, %v2194
    %v2202 = vmul.f32 %v2181, %v2194
    %v2203 = vmul.f32 %v2182, %v2194
    %v2204 = vmul.f32 %v2183, %v2194
    %v2205 = vmul.f32 %v2184, %v2194
    %v2206 = vmul.f32 %v2185, %v2194
    %v2207 = vmul.f32 %v2186, %v2194
    %v2208 = vmul.f32 %v2187, %v2194
    %v2209 = vmul.f32 %v2188, %v2194
    %v2210 = vmul.f32 %v2189, %v2194
    %v2211 = vadd.f32 %v2158, %v2195
    %v2212 = vadd.f32 %v2159, %v2196
    %v2213 = vadd.f32 %v2160, %v2197
    %v2214 = vadd.f32 %v2161, %v2198
    %v2215 = vadd.f32 %v2162, %v2199
    %v2216 = vadd.f32 %v2163, %v2200
    %v2217 = vadd.f32 %v2164, %v2201
    %v2218 = vadd.f32 %v2165, %v2202
    %v2219 = vadd.f32 %v2166, %v2203
    %v2220 = vadd.f32 %v2167, %v2204
    %v2221 = vadd.f32 %v2168, %v2205
    %v2222 = vadd.f32 %v2169, %v2206
    %v2223 = vadd.f32 %v2170, %v2207
    %v2224 = vadd.f32 %v2171, %v2208
    %v2225 = vadd.f32 %v2172, %v2209
    %v2226 = vadd.f32 %v2173, %v2210
    %v2227 = vld [vmem:[%s353] sm:$0xff]
    %v2228 = vld [vmem:[%s353 + $0x8] sm:$0xff]
    %v2229 = vld [vmem:[%s353 + $0x18] sm:$0xff]
    %v2230 = vld [vmem:[%s353 + $0x20] sm:$0xff]
    %v2231 = vld [vmem:[%s353 + $0x30] sm:$0xff]
    %v2232 = vld [vmem:[%s353 + $0x38] sm:$0xff]
    %v2233 = vld [vmem:[%s353 + $0x48] sm:$0xff]
    %v2234 = vld [vmem:[%s353 + $0x50] sm:$0xff]
    %v2235 = vld [vmem:[%s353 + $0x60] sm:$0xff]
    %v2236 = vld [vmem:[%s353 + $0x68] sm:$0xff]
    %v2237 = vld [vmem:[%s353 + $0x78] sm:$0xff]
    %v2238 = vld [vmem:[%s353 + $0x80] sm:$0xff]
    %v2239 = vld [vmem:[%s353 + $0x90] sm:$0xff]
    %v2240 = vld [vmem:[%s353 + $0x98] sm:$0xff]
    %v2241 = vld [vmem:[%s353 + $0xa8] sm:$0xff]
    %v2242 = vld [vmem:[%s353 + $0xb0] sm:$0xff]
    %v2243 = vld [vmem:[#allocation3 + $0x8] sm:$0x1]
    %v2244 = vlaneseq
    %v2245 = vshrl.u32 %v2244, 7
    %v2246 = vsub.s32 0, %v2245
    %v2247 = vrot.slane %v2243, %v2246
    %v2248 = vmul.f32 %v2227, %v2247
    %v2249 = vmul.f32 %v2228, %v2247
    %v2250 = vmul.f32 %v2229, %v2247
    %v2251 = vmul.f32 %v2230, %v2247
    %v2252 = vmul.f32 %v2231, %v2247
    %v2253 = vmul.f32 %v2232, %v2247
    %v2254 = vmul.f32 %v2233, %v2247
    %v2255 = vmul.f32 %v2234, %v2247
    %v2256 = vmul.f32 %v2235, %v2247
    %v2257 = vmul.f32 %v2236, %v2247
    %v2258 = vmul.f32 %v2237, %v2247
    %v2259 = vmul.f32 %v2238, %v2247
    %v2260 = vmul.f32 %v2239, %v2247
    %v2261 = vmul.f32 %v2240, %v2247
    %v2262 = vmul.f32 %v2241, %v2247
    %v2263 = vmul.f32 %v2242, %v2247
    %v2264 = vadd.f32 %v2211, %v2248
    %v2265 = vadd.f32 %v2212, %v2249
    %v2266 = vadd.f32 %v2213, %v2250
    %v2267 = vadd.f32 %v2214, %v2251
    %v2268 = vadd.f32 %v2215, %v2252
    %v2269 = vadd.f32 %v2216, %v2253
    %v2270 = vadd.f32 %v2217, %v2254
    %v2271 = vadd.f32 %v2218, %v2255
    %v2272 = vadd.f32 %v2219, %v2256
    %v2273 = vadd.f32 %v2220, %v2257
    %v2274 = vadd.f32 %v2221, %v2258
    %v2275 = vadd.f32 %v2222, %v2259
    %v2276 = vadd.f32 %v2223, %v2260
    %v2277 = vadd.f32 %v2224, %v2261
    %v2278 = vadd.f32 %v2225, %v2262
    %v2279 = vadd.f32 %v2226, %v2263
    %v2280 = vld [vmem:[%s353 + $0x1] sm:$0xff]
    %v2281 = vld [vmem:[%s353 + $0x9] sm:$0xff]
    %v2282 = vld [vmem:[%s353 + $0x19] sm:$0xff]
    %v2283 = vld [vmem:[%s353 + $0x21] sm:$0xff]
    %v2284 = vld [vmem:[%s353 + $0x31] sm:$0xff]
    %v2285 = vld [vmem:[%s353 + $0x39] sm:$0xff]
    %v2286 = vld [vmem:[%s353 + $0x49] sm:$0xff]
    %v2287 = vld [vmem:[%s353 + $0x51] sm:$0xff]
    %v2288 = vld [vmem:[%s353 + $0x61] sm:$0xff]
    %v2289 = vld [vmem:[%s353 + $0x69] sm:$0xff]
    %v2290 = vld [vmem:[%s353 + $0x79] sm:$0xff]
    %v2291 = vld [vmem:[%s353 + $0x81] sm:$0xff]
    %v2292 = vld [vmem:[%s353 + $0x91] sm:$0xff]
    %v2293 = vld [vmem:[%s353 + $0x99] sm:$0xff]
    %v2294 = vld [vmem:[%s353 + $0xa9] sm:$0xff]
    %v2295 = vld [vmem:[%s353 + $0xb1] sm:$0xff]
    %v2296 = vld [vmem:[#allocation3 + $0x9] sm:$0x1]
    %v2297 = vlaneseq
    %v2298 = vshrl.u32 %v2297, 7
    %v2299 = vsub.s32 0, %v2298
    %v2300 = vrot.slane %v2296, %v2299
    %v2301 = vmul.f32 %v2280, %v2300
    %v2302 = vmul.f32 %v2281, %v2300
    %v2303 = vmul.f32 %v2282, %v2300
    %v2304 = vmul.f32 %v2283, %v2300
    %v2305 = vmul.f32 %v2284, %v2300
    %v2306 = vmul.f32 %v2285, %v2300
    %v2307 = vmul.f32 %v2286, %v2300
    %v2308 = vmul.f32 %v2287, %v2300
    %v2309 = vmul.f32 %v2288, %v2300
    %v2310 = vmul.f32 %v2289, %v2300
    %v2311 = vmul.f32 %v2290, %v2300
    %v2312 = vmul.f32 %v2291, %v2300
    %v2313 = vmul.f32 %v2292, %v2300
    %v2314 = vmul.f32 %v2293, %v2300
    %v2315 = vmul.f32 %v2294, %v2300
    %v2316 = vmul.f32 %v2295, %v2300
    %v2317 = vadd.f32 %v2264, %v2301
    %v2318 = vadd.f32 %v2265, %v2302
    %v2319 = vadd.f32 %v2266, %v2303
    %v2320 = vadd.f32 %v2267, %v2304
    %v2321 = vadd.f32 %v2268, %v2305
    %v2322 = vadd.f32 %v2269, %v2306
    %v2323 = vadd.f32 %v2270, %v2307
    %v2324 = vadd.f32 %v2271, %v2308
    %v2325 = vadd.f32 %v2272, %v2309
    %v2326 = vadd.f32 %v2273, %v2310
    %v2327 = vadd.f32 %v2274, %v2311
    %v2328 = vadd.f32 %v2275, %v2312
    %v2329 = vadd.f32 %v2276, %v2313
    %v2330 = vadd.f32 %v2277, %v2314
    %v2331 = vadd.f32 %v2278, %v2315
    %v2332 = vadd.f32 %v2279, %v2316
    %v2333 = vld [vmem:[%s353 + $0x2] sm:$0xff]
    %v2334 = vld [vmem:[%s353 + $0xa] sm:$0xff]
    %v2335 = vld [vmem:[%s353 + $0x1a] sm:$0xff]
    %v2336 = vld [vmem:[%s353 + $0x22] sm:$0xff]
    %v2337 = vld [vmem:[%s353 + $0x32] sm:$0xff]
    %v2338 = vld [vmem:[%s353 + $0x3a] sm:$0xff]
    %v2339 = vld [vmem:[%s353 + $0x4a] sm:$0xff]
    %v2340 = vld [vmem:[%s353 + $0x52] sm:$0xff]
    %v2341 = vld [vmem:[%s353 + $0x62] sm:$0xff]
    %v2342 = vld [vmem:[%s353 + $0x6a] sm:$0xff]
    %v2343 = vld [vmem:[%s353 + $0x7a] sm:$0xff]
    %v2344 = vld [vmem:[%s353 + $0x82] sm:$0xff]
    %v2345 = vld [vmem:[%s353 + $0x92] sm:$0xff]
    %v2346 = vld [vmem:[%s353 + $0x9a] sm:$0xff]
    %v2347 = vld [vmem:[%s353 + $0xaa] sm:$0xff]
    %v2348 = vld [vmem:[%s353 + $0xb2] sm:$0xff]
    %v2349 = vld [vmem:[#allocation3 + $0xa] sm:$0x1]
    %v2350 = vlaneseq
    %v2351 = vshrl.u32 %v2350, 7
    %v2352 = vsub.s32 0, %v2351
    %v2353 = vrot.slane %v2349, %v2352
    %v2354 = vmul.f32 %v2333, %v2353
    %v2355 = vmul.f32 %v2334, %v2353
    %v2356 = vmul.f32 %v2335, %v2353
    %v2357 = vmul.f32 %v2336, %v2353
    %v2358 = vmul.f32 %v2337, %v2353
    %v2359 = vmul.f32 %v2338, %v2353
    %v2360 = vmul.f32 %v2339, %v2353
    %v2361 = vmul.f32 %v2340, %v2353
    %v2362 = vmul.f32 %v2341, %v2353
    %v2363 = vmul.f32 %v2342, %v2353
    %v2364 = vmul.f32 %v2343, %v2353
    %v2365 = vmul.f32 %v2344, %v2353
    %v2366 = vmul.f32 %v2345, %v2353
    %v2367 = vmul.f32 %v2346, %v2353
    %v2368 = vmul.f32 %v2347, %v2353
    %v2369 = vmul.f32 %v2348, %v2353
    %v2370 = vadd.f32 %v2317, %v2354
    %v2371 = vadd.f32 %v2318, %v2355
    %v2372 = vadd.f32 %v2319, %v2356
    %v2373 = vadd.f32 %v2320, %v2357
    %v2374 = vadd.f32 %v2321, %v2358
    %v2375 = vadd.f32 %v2322, %v2359
    %v2376 = vadd.f32 %v2323, %v2360
    %v2377 = vadd.f32 %v2324, %v2361
    %v2378 = vadd.f32 %v2325, %v2362
    %v2379 = vadd.f32 %v2326, %v2363
    %v2380 = vadd.f32 %v2327, %v2364
    %v2381 = vadd.f32 %v2328, %v2365
    %v2382 = vadd.f32 %v2329, %v2366
    %v2383 = vadd.f32 %v2330, %v2367
    %v2384 = vadd.f32 %v2331, %v2368
    %v2385 = vadd.f32 %v2332, %v2369
    %v2386 = vld [vmem:[%s353 + $0x3] sm:$0xff]
    %v2387 = vld [vmem:[%s353 + $0xb] sm:$0xff]
    %v2388 = vld [vmem:[%s353 + $0x1b] sm:$0xff]
    %v2389 = vld [vmem:[%s353 + $0x23] sm:$0xff]
    %v2390 = vld [vmem:[%s353 + $0x33] sm:$0xff]
    %v2391 = vld [vmem:[%s353 + $0x3b] sm:$0xff]
    %v2392 = vld [vmem:[%s353 + $0x4b] sm:$0xff]
    %v2393 = vld [vmem:[%s353 + $0x53] sm:$0xff]
    %v2394 = vld [vmem:[%s353 + $0x63] sm:$0xff]
    %v2395 = vld [vmem:[%s353 + $0x6b] sm:$0xff]
    %v2396 = vld [vmem:[%s353 + $0x7b] sm:$0xff]
    %v2397 = vld [vmem:[%s353 + $0x83] sm:$0xff]
    %v2398 = vld [vmem:[%s353 + $0x93] sm:$0xff]
    %v2399 = vld [vmem:[%s353 + $0x9b] sm:$0xff]
    %v2400 = vld [vmem:[%s353 + $0xab] sm:$0xff]
    %v2401 = vld [vmem:[%s353 + $0xb3] sm:$0xff]
    %v2402 = vld [vmem:[#allocation3 + $0xb] sm:$0x1]
    %v2403 = vlaneseq
    %v2404 = vshrl.u32 %v2403, 7
    %v2405 = vsub.s32 0, %v2404
    %v2406 = vrot.slane %v2402, %v2405
    %v2407 = vmul.f32 %v2386, %v2406
    %v2408 = vmul.f32 %v2387, %v2406
    %v2409 = vmul.f32 %v2388, %v2406
    %v2410 = vmul.f32 %v2389, %v2406
    %v2411 = vmul.f32 %v2390, %v2406
    %v2412 = vmul.f32 %v2391, %v2406
    %v2413 = vmul.f32 %v2392, %v2406
    %v2414 = vmul.f32 %v2393, %v2406
    %v2415 = vmul.f32 %v2394, %v2406
    %v2416 = vmul.f32 %v2395, %v2406
    %v2417 = vmul.f32 %v2396, %v2406
    %v2418 = vmul.f32 %v2397, %v2406
    %v2419 = vmul.f32 %v2398, %v2406
    %v2420 = vmul.f32 %v2399, %v2406
    %v2421 = vmul.f32 %v2400, %v2406
    %v2422 = vmul.f32 %v2401, %v2406
    %v2423 = vadd.f32 %v2370, %v2407
    %v2424 = vadd.f32 %v2371, %v2408
    %v2425 = vadd.f32 %v2372, %v2409
    %v2426 = vadd.f32 %v2373, %v2410
    %v2427 = vadd.f32 %v2374, %v2411
    %v2428 = vadd.f32 %v2375, %v2412
    %v2429 = vadd.f32 %v2376, %v2413
    %v2430 = vadd.f32 %v2377, %v2414
    %v2431 = vadd.f32 %v2378, %v2415
    %v2432 = vadd.f32 %v2379, %v2416
    %v2433 = vadd.f32 %v2380, %v2417
    %v2434 = vadd.f32 %v2381, %v2418
    %v2435 = vadd.f32 %v2382, %v2419
    %v2436 = vadd.f32 %v2383, %v2420
    %v2437 = vadd.f32 %v2384, %v2421
    %v2438 = vadd.f32 %v2385, %v2422
    %v2439 = vld [vmem:[%s468] sm:$0xff]
    %v2440 = vld [vmem:[%s468 + $0x8] sm:$0xff]
    %v2441 = vld [vmem:[%s468 + $0x18] sm:$0xff]
    %v2442 = vld [vmem:[%s468 + $0x20] sm:$0xff]
    %v2443 = vld [vmem:[%s468 + $0x30] sm:$0xff]
    %v2444 = vld [vmem:[%s468 + $0x38] sm:$0xff]
    %v2445 = vld [vmem:[%s468 + $0x48] sm:$0xff]
    %v2446 = vld [vmem:[%s468 + $0x50] sm:$0xff]
    %v2447 = vld [vmem:[%s468 + $0x60] sm:$0xff]
    %v2448 = vld [vmem:[%s468 + $0x68] sm:$0xff]
    %v2449 = vld [vmem:[%s468 + $0x78] sm:$0xff]
    %v2450 = vld [vmem:[%s468 + $0x80] sm:$0xff]
    %v2451 = vld [vmem:[%s468 + $0x90] sm:$0xff]
    %v2452 = vld [vmem:[%s468 + $0x98] sm:$0xff]
    %v2453 = vld [vmem:[%s468 + $0xa8] sm:$0xff]
    %v2454 = vld [vmem:[%s468 + $0xb0] sm:$0xff]
    %v2455 = vld [vmem:[#allocation3 + $0xc] sm:$0x1]
    %v2456 = vlaneseq
    %v2457 = vshrl.u32 %v2456, 7
    %v2458 = vsub.s32 0, %v2457
    %v2459 = vrot.slane %v2455, %v2458
    %v2460 = vmul.f32 %v2439, %v2459
    %v2461 = vmul.f32 %v2440, %v2459
    %v2462 = vmul.f32 %v2441, %v2459
    %v2463 = vmul.f32 %v2442, %v2459
    %v2464 = vmul.f32 %v2443, %v2459
    %v2465 = vmul.f32 %v2444, %v2459
    %v2466 = vmul.f32 %v2445, %v2459
    %v2467 = vmul.f32 %v2446, %v2459
    %v2468 = vmul.f32 %v2447, %v2459
    %v2469 = vmul.f32 %v2448, %v2459
    %v2470 = vmul.f32 %v2449, %v2459
    %v2471 = vmul.f32 %v2450, %v2459
    %v2472 = vmul.f32 %v2451, %v2459
    %v2473 = vmul.f32 %v2452, %v2459
    %v2474 = vmul.f32 %v2453, %v2459
    %v2475 = vmul.f32 %v2454, %v2459
    %v2476 = vadd.f32 %v2423, %v2460
    %v2477 = vadd.f32 %v2424, %v2461
    %v2478 = vadd.f32 %v2425, %v2462
    %v2479 = vadd.f32 %v2426, %v2463
    %v2480 = vadd.f32 %v2427, %v2464
    %v2481 = vadd.f32 %v2428, %v2465
    %v2482 = vadd.f32 %v2429, %v2466
    %v2483 = vadd.f32 %v2430, %v2467
    %v2484 = vadd.f32 %v2431, %v2468
    %v2485 = vadd.f32 %v2432, %v2469
    %v2486 = vadd.f32 %v2433, %v2470
    %v2487 = vadd.f32 %v2434, %v2471
    %v2488 = vadd.f32 %v2435, %v2472
    %v2489 = vadd.f32 %v2436, %v2473
    %v2490 = vadd.f32 %v2437, %v2474
    %v2491 = vadd.f32 %v2438, %v2475
    %v2492 = vld [vmem:[%s468 + $0x1] sm:$0xff]
    %v2493 = vld [vmem:[%s468 + $0x9] sm:$0xff]
    %v2494 = vld [vmem:[%s468 + $0x19] sm:$0xff]
    %v2495 = vld [vmem:[%s468 + $0x21] sm:$0xff]
    %v2496 = vld [vmem:[%s468 + $0x31] sm:$0xff]
    %v2497 = vld [vmem:[%s468 + $0x39] sm:$0xff]
    %v2498 = vld [vmem:[%s468 + $0x49] sm:$0xff]
    %v2499 = vld [vmem:[%s468 + $0x51] sm:$0xff]
    %v2500 = vld [vmem:[%s468 + $0x61] sm:$0xff]
    %v2501 = vld [vmem:[%s468 + $0x69] sm:$0xff]
    %v2502 = vld [vmem:[%s468 + $0x79] sm:$0xff]
    %v2503 = vld [vmem:[%s468 + $0x81] sm:$0xff]
    %v2504 = vld [vmem:[%s468 + $0x91] sm:$0xff]
    %v2505 = vld [vmem:[%s468 + $0x99] sm:$0xff]
    %v2506 = vld [vmem:[%s468 + $0xa9] sm:$0xff]
    %v2507 = vld [vmem:[%s468 + $0xb1] sm:$0xff]
    %v2508 = vld [vmem:[#allocation3 + $0xd] sm:$0x1]
    %v2509 = vlaneseq
    %v2510 = vshrl.u32 %v2509, 7
    %v2511 = vsub.s32 0, %v2510
    %v2512 = vrot.slane %v2508, %v2511
    %v2513 = vmul.f32 %v2492, %v2512
    %v2514 = vmul.f32 %v2493, %v2512
    %v2515 = vmul.f32 %v2494, %v2512
    %v2516 = vmul.f32 %v2495, %v2512
    %v2517 = vmul.f32 %v2496, %v2512
    %v2518 = vmul.f32 %v2497, %v2512
    %v2519 = vmul.f32 %v2498, %v2512
    %v2520 = vmul.f32 %v2499, %v2512
    %v2521 = vmul.f32 %v2500, %v2512
    %v2522 = vmul.f32 %v2501, %v2512
    %v2523 = vmul.f32 %v2502, %v2512
    %v2524 = vmul.f32 %v2503, %v2512
    %v2525 = vmul.f32 %v2504, %v2512
    %v2526 = vmul.f32 %v2505, %v2512
    %v2527 = vmul.f32 %v2506, %v2512
    %v2528 = vmul.f32 %v2507, %v2512
    %v2529 = vadd.f32 %v2476, %v2513
    %v2530 = vadd.f32 %v2477, %v2514
    %v2531 = vadd.f32 %v2478, %v2515
    %v2532 = vadd.f32 %v2479, %v2516
    %v2533 = vadd.f32 %v2480, %v2517
    %v2534 = vadd.f32 %v2481, %v2518
    %v2535 = vadd.f32 %v2482, %v2519
    %v2536 = vadd.f32 %v2483, %v2520
    %v2537 = vadd.f32 %v2484, %v2521
    %v2538 = vadd.f32 %v2485, %v2522
    %v2539 = vadd.f32 %v2486, %v2523
    %v2540 = vadd.f32 %v2487, %v2524
    %v2541 = vadd.f32 %v2488, %v2525
    %v2542 = vadd.f32 %v2489, %v2526
    %v2543 = vadd.f32 %v2490, %v2527
    %v2544 = vadd.f32 %v2491, %v2528
    %v2545 = vld [vmem:[%s468 + $0x2] sm:$0xff]
    %v2546 = vld [vmem:[%s468 + $0xa] sm:$0xff]
    %v2547 = vld [vmem:[%s468 + $0x1a] sm:$0xff]
    %v2548 = vld [vmem:[%s468 + $0x22] sm:$0xff]
    %v2549 = vld [vmem:[%s468 + $0x32] sm:$0xff]
    %v2550 = vld [vmem:[%s468 + $0x3a] sm:$0xff]
    %v2551 = vld [vmem:[%s468 + $0x4a] sm:$0xff]
    %v2552 = vld [vmem:[%s468 + $0x52] sm:$0xff]
    %v2553 = vld [vmem:[%s468 + $0x62] sm:$0xff]
    %v2554 = vld [vmem:[%s468 + $0x6a] sm:$0xff]
    %v2555 = vld [vmem:[%s468 + $0x7a] sm:$0xff]
    %v2556 = vld [vmem:[%s468 + $0x82] sm:$0xff]
    %v2557 = vld [vmem:[%s468 + $0x92] sm:$0xff]
    %v2558 = vld [vmem:[%s468 + $0x9a] sm:$0xff]
    %v2559 = vld [vmem:[%s468 + $0xaa] sm:$0xff]
    %v2560 = vld [vmem:[%s468 + $0xb2] sm:$0xff]
    %v2561 = vld [vmem:[#allocation3 + $0xe] sm:$0x1]
    %v2562 = vlaneseq
    %v2563 = vshrl.u32 %v2562, 7
    %v2564 = vsub.s32 0, %v2563
    %v2565 = vrot.slane %v2561, %v2564
    %v2566 = vmul.f32 %v2545, %v2565
    %v2567 = vmul.f32 %v2546, %v2565
    %v2568 = vmul.f32 %v2547, %v2565
    %v2569 = vmul.f32 %v2548, %v2565
    %v2570 = vmul.f32 %v2549, %v2565
    %v2571 = vmul.f32 %v2550, %v2565
    %v2572 = vmul.f32 %v2551, %v2565
    %v2573 = vmul.f32 %v2552, %v2565
    %v2574 = vmul.f32 %v2553, %v2565
    %v2575 = vmul.f32 %v2554, %v2565
    %v2576 = vmul.f32 %v2555, %v2565
    %v2577 = vmul.f32 %v2556, %v2565
    %v2578 = vmul.f32 %v2557, %v2565
    %v2579 = vmul.f32 %v2558, %v2565
    %v2580 = vmul.f32 %v2559, %v2565
    %v2581 = vmul.f32 %v2560, %v2565
    %v2582 = vadd.f32 %v2529, %v2566
    %v2583 = vadd.f32 %v2530, %v2567
    %v2584 = vadd.f32 %v2531, %v2568
    %v2585 = vadd.f32 %v2532, %v2569
    %v2586 = vadd.f32 %v2533, %v2570
    %v2587 = vadd.f32 %v2534, %v2571
    %v2588 = vadd.f32 %v2535, %v2572
    %v2589 = vadd.f32 %v2536, %v2573
    %v2590 = vadd.f32 %v2537, %v2574
    %v2591 = vadd.f32 %v2538, %v2575
    %v2592 = vadd.f32 %v2539, %v2576
    %v2593 = vadd.f32 %v2540, %v2577
    %v2594 = vadd.f32 %v2541, %v2578
    %v2595 = vadd.f32 %v2542, %v2579
    %v2596 = vadd.f32 %v2543, %v2580
    %v2597 = vadd.f32 %v2544, %v2581
    %v2598 = vld [vmem:[%s468 + $0x3] sm:$0xff]
    %v2599 = vld [vmem:[%s468 + $0xb] sm:$0xff]
    %v2600 = vld [vmem:[%s468 + $0x1b] sm:$0xff]
    %v2601 = vld [vmem:[%s468 + $0x23] sm:$0xff]
    %v2602 = vld [vmem:[%s468 + $0x33] sm:$0xff]
    %v2603 = vld [vmem:[%s468 + $0x3b] sm:$0xff]
    %v2604 = vld [vmem:[%s468 + $0x4b] sm:$0xff]
    %v2605 = vld [vmem:[%s468 + $0x53] sm:$0xff]
    %v2606 = vld [vmem:[%s468 + $0x63] sm:$0xff]
    %v2607 = vld [vmem:[%s468 + $0x6b] sm:$0xff]
    %v2608 = vld [vmem:[%s468 + $0x7b] sm:$0xff]
    %v2609 = vld [vmem:[%s468 + $0x83] sm:$0xff]
    %v2610 = vld [vmem:[%s468 + $0x93] sm:$0xff]
    %v2611 = vld [vmem:[%s468 + $0x9b] sm:$0xff]
    %v2612 = vld [vmem:[%s468 + $0xab] sm:$0xff]
    %v2613 = vld [vmem:[%s468 + $0xb3] sm:$0xff]
    %v2614 = vld [vmem:[#allocation3 + $0xf] sm:$0x1]
    %v2615 = vlaneseq
    %v2616 = vshrl.u32 %v2615, 7
    %v2617 = vsub.s32 0, %v2616
    %v2618 = vrot.slane %v2614, %v2617
    %v2619 = vmul.f32 %v2598, %v2618
    %v2620 = vmul.f32 %v2599, %v2618
    %v2621 = vmul.f32 %v2600, %v2618
    %v2622 = vmul.f32 %v2601, %v2618
    %v2623 = vmul.f32 %v2602, %v2618
    %v2624 = vmul.f32 %v2603, %v2618
    %v2625 = vmul.f32 %v2604, %v2618
    %v2626 = vmul.f32 %v2605, %v2618
    %v2627 = vmul.f32 %v2606, %v2618
    %v2628 = vmul.f32 %v2607, %v2618
    %v2629 = vmul.f32 %v2608, %v2618
    %v2630 = vmul.f32 %v2609, %v2618
    %v2631 = vmul.f32 %v2610, %v2618
    %v2632 = vmul.f32 %v2611, %v2618
    %v2633 = vmul.f32 %v2612, %v2618
    %v2634 = vmul.f32 %v2613, %v2618
    %v2635 = vadd.f32 %v2582, %v2619
    %v2636 = vadd.f32 %v2583, %v2620
    %v2637 = vadd.f32 %v2584, %v2621
    %v2638 = vadd.f32 %v2585, %v2622
    %v2639 = vadd.f32 %v2586, %v2623
    %v2640 = vadd.f32 %v2587, %v2624
    %v2641 = vadd.f32 %v2588, %v2625
    %v2642 = vadd.f32 %v2589, %v2626
    %v2643 = vadd.f32 %v2590, %v2627
    %v2644 = vadd.f32 %v2591, %v2628
    %v2645 = vadd.f32 %v2592, %v2629
    %v2646 = vadd.f32 %v2593, %v2630
    %v2647 = vadd.f32 %v2594, %v2631
    %v2648 = vadd.f32 %v2595, %v2632
    %v2649 = vadd.f32 %v2596, %v2633
    %v2650 = vadd.f32 %v2597, %v2634
    %2651 = vst [vmem:[#allocation7] sm:$0xff] %v2635
    %2652 = vst [vmem:[#allocation7 + $0x8] sm:$0xff] %v2636
    %2653 = vst [vmem:[#allocation7 + $0x10] sm:$0xff] %v2637
    %2654 = vst [vmem:[#allocation7 + $0x18] sm:$0xff] %v2638
    %2655 = vst [vmem:[#allocation7 + $0x20] sm:$0xff] %v2639
    %2656 = vst [vmem:[#allocation7 + $0x28] sm:$0xff] %v2640
    %2657 = vst [vmem:[#allocation7 + $0x30] sm:$0xff] %v2641
    %2658 = vst [vmem:[#allocation7 + $0x38] sm:$0xff] %v2642
    %2659 = vst [vmem:[#allocation7 + $0x40] sm:$0xff] %v2643
    %2660 = vst [vmem:[#allocation7 + $0x48] sm:$0xff] %v2644
    %2661 = vst [vmem:[#allocation7 + $0x50] sm:$0xff] %v2645
    %2662 = vst [vmem:[#allocation7 + $0x58] sm:$0xff] %v2646
    %2663 = vst [vmem:[#allocation7 + $0x60] sm:$0xff] %v2647
    %2664 = vst [vmem:[#allocation7 + $0x68] sm:$0xff] %v2648
    %2665 = vst [vmem:[#allocation7 + $0x70] sm:$0xff] %v2649
    %2666 = vst [vmem:[#allocation7 + $0x78] sm:$0xff] %v2650
    %v2667 = vld [vmem:[%s979] sm:$0xff]
    %v2668 = vld [vmem:[%s979 + $0x8] sm:$0xff]
    %v2669 = vld [vmem:[%s979 + $0x18] sm:$0xff]
    %v2670 = vld [vmem:[%s979 + $0x20] sm:$0xff]
    %v2671 = vld [vmem:[%s979 + $0x30] sm:$0xff]
    %v2672 = vld [vmem:[%s979 + $0x38] sm:$0xff]
    %v2673 = vld [vmem:[%s979 + $0x48] sm:$0xff]
    %v2674 = vld [vmem:[%s979 + $0x50] sm:$0xff]
    %v2675 = vld [vmem:[%s979 + $0x60] sm:$0xff]
    %v2676 = vld [vmem:[%s979 + $0x68] sm:$0xff]
    %v2677 = vld [vmem:[#allocation3] sm:$0x1]
    %v2678 = vlaneseq
    %v2679 = vshrl.u32 %v2678, 7
    %v2680 = vsub.s32 0, %v2679
    %v2681 = vrot.slane %v2677, %v2680
    %v2682 = vmul.f32 %v2667, %v2681
    %v2683 = vmul.f32 %v2668, %v2681
    %v2684 = vmul.f32 %v2669, %v2681
    %v2685 = vmul.f32 %v2670, %v2681
    %v2686 = vmul.f32 %v2671, %v2681
    %v2687 = vmul.f32 %v2672, %v2681
    %v2688 = vmul.f32 %v2673, %v2681
    %v2689 = vmul.f32 %v2674, %v2681
    %v2690 = vmul.f32 %v2675, %v2681
    %v2691 = vmul.f32 %v2676, %v2681
    %v2692 = vadd.f32 %v2682, 0.0
    %v2693 = vadd.f32 %v2683, 0.0
    %v2694 = vadd.f32 %v2684, 0.0
    %v2695 = vadd.f32 %v2685, 0.0
    %v2696 = vadd.f32 %v2686, 0.0
    %v2697 = vadd.f32 %v2687, 0.0
    %v2698 = vadd.f32 %v2688, 0.0
    %v2699 = vadd.f32 %v2689, 0.0
    %v2700 = vadd.f32 %v2690, 0.0
    %v2701 = vadd.f32 %v2691, 0.0
    %v2702 = vld [vmem:[%s979 + $0x1] sm:$0xff]
    %v2703 = vld [vmem:[%s979 + $0x9] sm:$0xff]
    %v2704 = vld [vmem:[%s979 + $0x19] sm:$0xff]
    %v2705 = vld [vmem:[%s979 + $0x21] sm:$0xff]
    %v2706 = vld [vmem:[%s979 + $0x31] sm:$0xff]
    %v2707 = vld [vmem:[%s979 + $0x39] sm:$0xff]
    %v2708 = vld [vmem:[%s979 + $0x49] sm:$0xff]
    %v2709 = vld [vmem:[%s979 + $0x51] sm:$0xff]
    %v2710 = vld [vmem:[%s979 + $0x61] sm:$0xff]
    %v2711 = vld [vmem:[%s979 + $0x69] sm:$0xff]
    %v2712 = vld [vmem:[#allocation3 + $0x1] sm:$0x1]
    %v2713 = vlaneseq
    %v2714 = vshrl.u32 %v2713, 7
    %v2715 = vsub.s32 0, %v2714
    %v2716 = vrot.slane %v2712, %v2715
    %v2717 = vmul.f32 %v2702, %v2716
    %v2718 = vmul.f32 %v2703, %v2716
    %v2719 = vmul.f32 %v2704, %v2716
    %v2720 = vmul.f32 %v2705, %v2716
    %v2721 = vmul.f32 %v2706, %v2716
    %v2722 = vmul.f32 %v2707, %v2716
    %v2723 = vmul.f32 %v2708, %v2716
    %v2724 = vmul.f32 %v2709, %v2716
    %v2725 = vmul.f32 %v2710, %v2716
    %v2726 = vmul.f32 %v2711, %v2716
    %v2727 = vadd.f32 %v2692, %v2717
    %v2728 = vadd.f32 %v2693, %v2718
    %v2729 = vadd.f32 %v2694, %v2719
    %v2730 = vadd.f32 %v2695, %v2720
    %v2731 = vadd.f32 %v2696, %v2721
    %v2732 = vadd.f32 %v2697, %v2722
    %v2733 = vadd.f32 %v2698, %v2723
    %v2734 = vadd.f32 %v2699, %v2724
    %v2735 = vadd.f32 %v2700, %v2725
    %v2736 = vadd.f32 %v2701, %v2726
    %v2737 = vld [vmem:[%s979 + $0x2] sm:$0xff]
    %v2738 = vld [vmem:[%s979 + $0xa] sm:$0xff]
    %v2739 = vld [vmem:[%s979 + $0x1a] sm:$0xff]
    %v2740 = vld [vmem:[%s979 + $0x22] sm:$0xff]
    %v2741 = vld [vmem:[%s979 + $0x32] sm:$0xff]
    %v2742 = vld [vmem:[%s979 + $0x3a] sm:$0xff]
    %v2743 = vld [vmem:[%s979 + $0x4a] sm:$0xff]
    %v2744 = vld [vmem:[%s979 + $0x52] sm:$0xff]
    %v2745 = vld [vmem:[%s979 + $0x62] sm:$0xff]
    %v2746 = vld [vmem:[%s979 + $0x6a] sm:$0xff]
    %v2747 = vld [vmem:[#allocation3 + $0x2] sm:$0x1]
    %v2748 = vlaneseq
    %v2749 = vshrl.u32 %v2748, 7
    %v2750 = vsub.s32 0, %v2749
    %v2751 = vrot.slane %v2747, %v2750
    %v2752 = vmul.f32 %v2737, %v2751
    %v2753 = vmul.f32 %v2738, %v2751
    %v2754 = vmul.f32 %v2739, %v2751
    %v2755 = vmul.f32 %v2740, %v2751
    %v2756 = vmul.f32 %v2741, %v2751
    %v2757 = vmul.f32 %v2742, %v2751
    %v2758 = vmul.f32 %v2743, %v2751
    %v2759 = vmul.f32 %v2744, %v2751
    %v2760 = vmul.f32 %v2745, %v2751
    %v2761 = vmul.f32 %v2746, %v2751
    %v2762 = vadd.f32 %v2727, %v2752
    %v2763 = vadd.f32 %v2728, %v2753
    %v2764 = vadd.f32 %v2729, %v2754
    %v2765 = vadd.f32 %v2730, %v2755
    %v2766 = vadd.f32 %v2731, %v2756
    %v2767 = vadd.f32 %v2732, %v2757
    %v2768 = vadd.f32 %v2733, %v2758
    %v2769 = vadd.f32 %v2734, %v2759
    %v2770 = vadd.f32 %v2735, %v2760
    %v2771 = vadd.f32 %v2736, %v2761
    %v2772 = vld [vmem:[%s979 + $0x3] sm:$0xff]
    %v2773 = vld [vmem:[%s979 + $0xb] sm:$0xff]
    %v2774 = vld [vmem:[%s979 + $0x1b] sm:$0xff]
    %v2775 = vld [vmem:[%s979 + $0x23] sm:$0xff]
    %v2776 = vld [vmem:[%s979 + $0x33] sm:$0xff]
    %v2777 = vld [vmem:[%s979 + $0x3b] sm:$0xff]
    %v2778 = vld [vmem:[%s979 + $0x4b] sm:$0xff]
    %v2779 = vld [vmem:[%s979 + $0x53] sm:$0xff]
    %v2780 = vld [vmem:[%s979 + $0x63] sm:$0xff]
    %v2781 = vld [vmem:[%s979 + $0x6b] sm:$0xff]
    %v2782 = vld [vmem:[#allocation3 + $0x3] sm:$0x1]
    %v2783 = vlaneseq
    %v2784 = vshrl.u32 %v2783, 7
    %v2785 = vsub.s32 0, %v2784
    %v2786 = vrot.slane %v2782, %v2785
    %v2787 = vmul.f32 %v2772, %v2786
    %v2788 = vmul.f32 %v2773, %v2786
    %v2789 = vmul.f32 %v2774, %v2786
    %v2790 = vmul.f32 %v2775, %v2786
    %v2791 = vmul.f32 %v2776, %v2786
    %v2792 = vmul.f32 %v2777, %v2786
    %v2793 = vmul.f32 %v2778, %v2786
    %v2794 = vmul.f32 %v2779, %v2786
    %v2795 = vmul.f32 %v2780, %v2786
    %v2796 = vmul.f32 %v2781, %v2786
    %v2797 = vadd.f32 %v2762, %v2787
    %v2798 = vadd.f32 %v2763, %v2788
    %v2799 = vadd.f32 %v2764, %v2789
    %v2800 = vadd.f32 %v2765, %v2790
    %v2801 = vadd.f32 %v2766, %v2791
    %v2802 = vadd.f32 %v2767, %v2792
    %v2803 = vadd.f32 %v2768, %v2793
    %v2804 = vadd.f32 %v2769, %v2794
    %v2805 = vadd.f32 %v2770, %v2795
    %v2806 = vadd.f32 %v2771, %v2796
    %v2807 = vld [vmem:[%s1094] sm:$0xff]
    %v2808 = vld [vmem:[%s1094 + $0x8] sm:$0xff]
    %v2809 = vld [vmem:[%s1094 + $0x18] sm:$0xff]
    %v2810 = vld [vmem:[%s1094 + $0x20] sm:$0xff]
    %v2811 = vld [vmem:[%s1094 + $0x30] sm:$0xff]
    %v2812 = vld [vmem:[%s1094 + $0x38] sm:$0xff]
    %v2813 = vld [vmem:[%s1094 + $0x48] sm:$0xff]
    %v2814 = vld [vmem:[%s1094 + $0x50] sm:$0xff]
    %v2815 = vld [vmem:[%s1094 + $0x60] sm:$0xff]
    %v2816 = vld [vmem:[%s1094 + $0x68] sm:$0xff]
    %v2817 = vld [vmem:[#allocation3 + $0x4] sm:$0x1]
    %v2818 = vlaneseq
    %v2819 = vshrl.u32 %v2818, 7
    %v2820 = vsub.s32 0, %v2819
    %v2821 = vrot.slane %v2817, %v2820
    %v2822 = vmul.f32 %v2807, %v2821
    %v2823 = vmul.f32 %v2808, %v2821
    %v2824 = vmul.f32 %v2809, %v2821
    %v2825 = vmul.f32 %v2810, %v2821
    %v2826 = vmul.f32 %v2811, %v2821
    %v2827 = vmul.f32 %v2812, %v2821
    %v2828 = vmul.f32 %v2813, %v2821
    %v2829 = vmul.f32 %v2814, %v2821
    %v2830 = vmul.f32 %v2815, %v2821
    %v2831 = vmul.f32 %v2816, %v2821
    %v2832 = vadd.f32 %v2797, %v2822
    %v2833 = vadd.f32 %v2798, %v2823
    %v2834 = vadd.f32 %v2799, %v2824
    %v2835 = vadd.f32 %v2800, %v2825
    %v2836 = vadd.f32 %v2801, %v2826
    %v2837 = vadd.f32 %v2802, %v2827
    %v2838 = vadd.f32 %v2803, %v2828
    %v2839 = vadd.f32 %v2804, %v2829
    %v2840 = vadd.f32 %v2805, %v2830
    %v2841 = vadd.f32 %v2806, %v2831
    %v2842 = vld [vmem:[%s1094 + $0x1] sm:$0xff]
    %v2843 = vld [vmem:[%s1094 + $0x9] sm:$0xff]
    %v2844 = vld [vmem:[%s1094 + $0x19] sm:$0xff]
    %v2845 = vld [vmem:[%s1094 + $0x21] sm:$0xff]
    %v2846 = vld [vmem:[%s1094 + $0x31] sm:$0xff]
    %v2847 = vld [vmem:[%s1094 + $0x39] sm:$0xff]
    %v2848 = vld [vmem:[%s1094 + $0x49] sm:$0xff]
    %v2849 = vld [vmem:[%s1094 + $0x51] sm:$0xff]
    %v2850 = vld [vmem:[%s1094 + $0x61] sm:$0xff]
    %v2851 = vld [vmem:[%s1094 + $0x69] sm:$0xff]
    %v2852 = vld [vmem:[#allocation3 + $0x5] sm:$0x1]
    %v2853 = vlaneseq
    %v2854 = vshrl.u32 %v2853, 7
    %v2855 = vsub.s32 0, %v2854
    %v2856 = vrot.slane %v2852, %v2855
    %v2857 = vmul.f32 %v2842, %v2856
    %v2858 = vmul.f32 %v2843, %v2856
    %v2859 = vmul.f32 %v2844, %v2856
    %v2860 = vmul.f32 %v2845, %v2856
    %v2861 = vmul.f32 %v2846, %v2856
    %v2862 = vmul.f32 %v2847, %v2856
    %v2863 = vmul.f32 %v2848, %v2856
    %v2864 = vmul.f32 %v2849, %v2856
    %v2865 = vmul.f32 %v2850, %v2856
    %v2866 = vmul.f32 %v2851, %v2856
    %v2867 = vadd.f32 %v2832, %v2857
    %v2868 = vadd.f32 %v2833, %v2858
    %v2869 = vadd.f32 %v2834, %v2859
    %v2870 = vadd.f32 %v2835, %v2860
    %v2871 = vadd.f32 %v2836, %v2861
    %v2872 = vadd.f32 %v2837, %v2862
    %v2873 = vadd.f32 %v2838, %v2863
    %v2874 = vadd.f32 %v2839, %v2864
    %v2875 = vadd.f32 %v2840, %v2865
    %v2876 = vadd.f32 %v2841, %v2866
    %v2877 = vld [vmem:[%s1094 + $0x2] sm:$0xff]
    %v2878 = vld [vmem:[%s1094 + $0xa] sm:$0xff]
    %v2879 = vld [vmem:[%s1094 + $0x1a] sm:$0xff]
    %v2880 = vld [vmem:[%s1094 + $0x22] sm:$0xff]
    %v2881 = vld [vmem:[%s1094 + $0x32] sm:$0xff]
    %v2882 = vld [vmem:[%s1094 + $0x3a] sm:$0xff]
    %v2883 = vld [vmem:[%s1094 + $0x4a] sm:$0xff]
    %v2884 = vld [vmem:[%s1094 + $0x52] sm:$0xff]
    %v2885 = vld [vmem:[%s1094 + $0x62] sm:$0xff]
    %v2886 = vld [vmem:[%s1094 + $0x6a] sm:$0xff]
    %v2887 = vld [vmem:[#allocation3 + $0x6] sm:$0x1]
    %v2888 = vlaneseq
    %v2889 = vshrl.u32 %v2888, 7
    %v2890 = vsub.s32 0, %v2889
    %v2891 = vrot.slane %v2887, %v2890
    %v2892 = vmul.f32 %v2877, %v2891
    %v2893 = vmul.f32 %v2878, %v2891
    %v2894 = vmul.f32 %v2879, %v2891
    %v2895 = vmul.f32 %v2880, %v2891
    %v2896 = vmul.f32 %v2881, %v2891
    %v2897 = vmul.f32 %v2882, %v2891
    %v2898 = vmul.f32 %v2883, %v2891
    %v2899 = vmul.f32 %v2884, %v2891
    %v2900 = vmul.f32 %v2885, %v2891
    %v2901 = vmul.f32 %v2886, %v2891
    %v2902 = vadd.f32 %v2867, %v2892
    %v2903 = vadd.f32 %v2868, %v2893
    %v2904 = vadd.f32 %v2869, %v2894
    %v2905 = vadd.f32 %v2870, %v2895
    %v2906 = vadd.f32 %v2871, %v2896
    %v2907 = vadd.f32 %v2872, %v2897
    %v2908 = vadd.f32 %v2873, %v2898
    %v2909 = vadd.f32 %v2874, %v2899
    %v2910 = vadd.f32 %v2875, %v2900
    %v2911 = vadd.f32 %v2876, %v2901
    %v2912 = vld [vmem:[%s1094 + $0x3] sm:$0xff]
    %v2913 = vld [vmem:[%s1094 + $0xb] sm:$0xff]
    %v2914 = vld [vmem:[%s1094 + $0x1b] sm:$0xff]
    %v2915 = vld [vmem:[%s1094 + $0x23] sm:$0xff]
    %v2916 = vld [vmem:[%s1094 + $0x33] sm:$0xff]
    %v2917 = vld [vmem:[%s1094 + $0x3b] sm:$0xff]
    %v2918 = vld [vmem:[%s1094 + $0x4b] sm:$0xff]
    %v2919 = vld [vmem:[%s1094 + $0x53] sm:$0xff]
    %v2920 = vld [vmem:[%s1094 + $0x63] sm:$0xff]
    %v2921 = vld [vmem:[%s1094 + $0x6b] sm:$0xff]
    %v2922 = vld [vmem:[#allocation3 + $0x7] sm:$0x1]
    %v2923 = vlaneseq
    %v2924 = vshrl.u32 %v2923, 7
    %v2925 = vsub.s32 0, %v2924
    %v2926 = vrot.slane %v2922, %v2925
    %v2927 = vmul.f32 %v2912, %v2926
    %v2928 = vmul.f32 %v2913, %v2926
    %v2929 = vmul.f32 %v2914, %v2926
    %v2930 = vmul.f32 %v2915, %v2926
    %v2931 = vmul.f32 %v2916, %v2926
    %v2932 = vmul.f32 %v2917, %v2926
    %v2933 = vmul.f32 %v2918, %v2926
    %v2934 = vmul.f32 %v2919, %v2926
    %v2935 = vmul.f32 %v2920, %v2926
    %v2936 = vmul.f32 %v2921, %v2926
    %v2937 = vadd.f32 %v2902, %v2927
    %v2938 = vadd.f32 %v2903, %v2928
    %v2939 = vadd.f32 %v2904, %v2929
    %v2940 = vadd.f32 %v2905, %v2930
    %v2941 = vadd.f32 %v2906, %v2931
    %v2942 = vadd.f32 %v2907, %v2932
    %v2943 = vadd.f32 %v2908, %v2933
    %v2944 = vadd.f32 %v2909, %v2934
    %v2945 = vadd.f32 %v2910, %v2935
    %v2946 = vadd.f32 %v2911, %v2936
    %v2947 = vld [vmem:[%s1209] sm:$0xff]
    %v2948 = vld [vmem:[%s1209 + $0x8] sm:$0xff]
    %v2949 = vld [vmem:[%s1209 + $0x18] sm:$0xff]
    %v2950 = vld [vmem:[%s1209 + $0x20] sm:$0xff]
    %v2951 = vld [vmem:[%s1209 + $0x30] sm:$0xff]
    %v2952 = vld [vmem:[%s1209 + $0x38] sm:$0xff]
    %v2953 = vld [vmem:[%s1209 + $0x48] sm:$0xff]
    %v2954 = vld [vmem:[%s1209 + $0x50] sm:$0xff]
    %v2955 = vld [vmem:[%s1209 + $0x60] sm:$0xff]
    %v2956 = vld [vmem:[%s1209 + $0x68] sm:$0xff]
    %v2957 = vld [vmem:[#allocation3 + $0x8] sm:$0x1]
    %v2958 = vlaneseq
    %v2959 = vshrl.u32 %v2958, 7
    %v2960 = vsub.s32 0, %v2959
    %v2961 = vrot.slane %v2957, %v2960
    %v2962 = vmul.f32 %v2947, %v2961
    %v2963 = vmul.f32 %v2948, %v2961
    %v2964 = vmul.f32 %v2949, %v2961
    %v2965 = vmul.f32 %v2950, %v2961
    %v2966 = vmul.f32 %v2951, %v2961
    %v2967 = vmul.f32 %v2952, %v2961
    %v2968 = vmul.f32 %v2953, %v2961
    %v2969 = vmul.f32 %v2954, %v2961
    %v2970 = vmul.f32 %v2955, %v2961
    %v2971 = vmul.f32 %v2956, %v2961
    %v2972 = vadd.f32 %v2937, %v2962
    %v2973 = vadd.f32 %v2938, %v2963
    %v2974 = vadd.f32 %v2939, %v2964
    %v2975 = vadd.f32 %v2940, %v2965
    %v2976 = vadd.f32 %v2941, %v2966
    %v2977 = vadd.f32 %v2942, %v2967
    %v2978 = vadd.f32 %v2943, %v2968
    %v2979 = vadd.f32 %v2944, %v2969
    %v2980 = vadd.f32 %v2945, %v2970
    %v2981 = vadd.f32 %v2946, %v2971
    %v2982 = vld [vmem:[%s1209 + $0x1] sm:$0xff]
    %v2983 = vld [vmem:[%s1209 + $0x9] sm:$0xff]
    %v2984 = vld [vmem:[%s1209 + $0x19] sm:$0xff]
    %v2985 = vld [vmem:[%s1209 + $0x21] sm:$0xff]
    %v2986 = vld [vmem:[%s1209 + $0x31] sm:$0xff]
    %v2987 = vld [vmem:[%s1209 + $0x39] sm:$0xff]
    %v2988 = vld [vmem:[%s1209 + $0x49] sm:$0xff]
    %v2989 = vld [vmem:[%s1209 + $0x51] sm:$0xff]
    %v2990 = vld [vmem:[%s1209 + $0x61] sm:$0xff]
    %v2991 = vld [vmem:[%s1209 + $0x69] sm:$0xff]
    %v2992 = vld [vmem:[#allocation3 + $0x9] sm:$0x1]
    %v2993 = vlaneseq
    %v2994 = vshrl.u32 %v2993, 7
    %v2995 = vsub.s32 0, %v2994
    %v2996 = vrot.slane %v2992, %v2995
    %v2997 = vmul.f32 %v2982, %v2996
    %v2998 = vmul.f32 %v2983, %v2996
    %v2999 = vmul.f32 %v2984, %v2996
    %v3000 = vmul.f32 %v2985, %v2996
    %v3001 = vmul.f32 %v2986, %v2996
    %v3002 = vmul.f32 %v2987, %v2996
    %v3003 = vmul.f32 %v2988, %v2996
    %v3004 = vmul.f32 %v2989, %v2996
    %v3005 = vmul.f32 %v2990, %v2996
    %v3006 = vmul.f32 %v2991, %v2996
    %v3007 = vadd.f32 %v2972, %v2997
    %v3008 = vadd.f32 %v2973, %v2998
    %v3009 = vadd.f32 %v2974, %v2999
    %v3010 = vadd.f32 %v2975, %v3000
    %v3011 = vadd.f32 %v2976, %v3001
    %v3012 = vadd.f32 %v2977, %v3002
    %v3013 = vadd.f32 %v2978, %v3003
    %v3014 = vadd.f32 %v2979, %v3004
    %v3015 = vadd.f32 %v2980, %v3005
    %v3016 = vadd.f32 %v2981, %v3006
    %v3017 = vld [vmem:[%s1209 + $0x2] sm:$0xff]
    %v3018 = vld [vmem:[%s1209 + $0xa] sm:$0xff]
    %v3019 = vld [vmem:[%s1209 + $0x1a] sm:$0xff]
    %v3020 = vld [vmem:[%s1209 + $0x22] sm:$0xff]
    %v3021 = vld [vmem:[%s1209 + $0x32] sm:$0xff]
    %v3022 = vld [vmem:[%s1209 + $0x3a] sm:$0xff]
    %v3023 = vld [vmem:[%s1209 + $0x4a] sm:$0xff]
    %v3024 = vld [vmem:[%s1209 + $0x52] sm:$0xff]
    %v3025 = vld [vmem:[%s1209 + $0x62] sm:$0xff]
    %v3026 = vld [vmem:[%s1209 + $0x6a] sm:$0xff]
    %v3027 = vld [vmem:[#allocation3 + $0xa] sm:$0x1]
    %v3028 = vlaneseq
    %v3029 = vshrl.u32 %v3028, 7
    %v3030 = vsub.s32 0, %v3029
    %v3031 = vrot.slane %v3027, %v3030
    %v3032 = vmul.f32 %v3017, %v3031
    %v3033 = vmul.f32 %v3018, %v3031
    %v3034 = vmul.f32 %v3019, %v3031
    %v3035 = vmul.f32 %v3020, %v3031
    %v3036 = vmul.f32 %v3021, %v3031
    %v3037 = vmul.f32 %v3022, %v3031
    %v3038 = vmul.f32 %v3023, %v3031
    %v3039 = vmul.f32 %v3024, %v3031
    %v3040 = vmul.f32 %v3025, %v3031
    %v3041 = vmul.f32 %v3026, %v3031
    %v3042 = vadd.f32 %v3007, %v3032
    %v3043 = vadd.f32 %v3008, %v3033
    %v3044 = vadd.f32 %v3009, %v3034
    %v3045 = vadd.f32 %v3010, %v3035
    %v3046 = vadd.f32 %v3011, %v3036
    %v3047 = vadd.f32 %v3012, %v3037
    %v3048 = vadd.f32 %v3013, %v3038
    %v3049 = vadd.f32 %v3014, %v3039
    %v3050 = vadd.f32 %v3015, %v3040
    %v3051 = vadd.f32 %v3016, %v3041
    %v3052 = vld [vmem:[%s1209 + $0x3] sm:$0xff]
    %v3053 = vld [vmem:[%s1209 + $0xb] sm:$0xff]
    %v3054 = vld [vmem:[%s1209 + $0x1b] sm:$0xff]
    %v3055 = vld [vmem:[%s1209 + $0x23] sm:$0xff]
    %v3056 = vld [vmem:[%s1209 + $0x33] sm:$0xff]
    %v3057 = vld [vmem:[%s1209 + $0x3b] sm:$0xff]
    %v3058 = vld [vmem:[%s1209 + $0x4b] sm:$0xff]
    %v3059 = vld [vmem:[%s1209 + $0x53] sm:$0xff]
    %v3060 = vld [vmem:[%s1209 + $0x63] sm:$0xff]
    %v3061 = vld [vmem:[%s1209 + $0x6b] sm:$0xff]
    %v3062 = vld [vmem:[#allocation3 + $0xb] sm:$0x1]
    %v3063 = vlaneseq
    %v3064 = vshrl.u32 %v3063, 7
    %v3065 = vsub.s32 0, %v3064
    %v3066 = vrot.slane %v3062, %v3065
    %v3067 = vmul.f32 %v3052, %v3066
    %v3068 = vmul.f32 %v3053, %v3066
    %v3069 = vmul.f32 %v3054, %v3066
    %v3070 = vmul.f32 %v3055, %v3066
    %v3071 = vmul.f32 %v3056, %v3066
    %v3072 = vmul.f32 %v3057, %v3066
    %v3073 = vmul.f32 %v3058, %v3066
    %v3074 = vmul.f32 %v3059, %v3066
    %v3075 = vmul.f32 %v3060, %v3066
    %v3076 = vmul.f32 %v3061, %v3066
    %v3077 = vadd.f32 %v3042, %v3067
    %v3078 = vadd.f32 %v3043, %v3068
    %v3079 = vadd.f32 %v3044, %v3069
    %v3080 = vadd.f32 %v3045, %v3070
    %v3081 = vadd.f32 %v3046, %v3071
    %v3082 = vadd.f32 %v3047, %v3072
    %v3083 = vadd.f32 %v3048, %v3073
    %v3084 = vadd.f32 %v3049, %v3074
    %v3085 = vadd.f32 %v3050, %v3075
    %v3086 = vadd.f32 %v3051, %v3076
    %v3087 = vld [vmem:[%s1324] sm:$0xff]
    %v3088 = vld [vmem:[%s1324 + $0x8] sm:$0xff]
    %v3089 = vld [vmem:[%s1324 + $0x18] sm:$0xff]
    %v3090 = vld [vmem:[%s1324 + $0x20] sm:$0xff]
    %v3091 = vld [vmem:[%s1324 + $0x30] sm:$0xff]
    %v3092 = vld [vmem:[%s1324 + $0x38] sm:$0xff]
    %v3093 = vld [vmem:[%s1324 + $0x48] sm:$0xff]
    %v3094 = vld [vmem:[%s1324 + $0x50] sm:$0xff]
    %v3095 = vld [vmem:[%s1324 + $0x60] sm:$0xff]
    %v3096 = vld [vmem:[%s1324 + $0x68] sm:$0xff]
    %v3097 = vld [vmem:[#allocation3 + $0xc] sm:$0x1]
    %v3098 = vlaneseq
    %v3099 = vshrl.u32 %v3098, 7
    %v3100 = vsub.s32 0, %v3099
    %v3101 = vrot.slane %v3097, %v3100
    %v3102 = vmul.f32 %v3087, %v3101
    %v3103 = vmul.f32 %v3088, %v3101
    %v3104 = vmul.f32 %v3089, %v3101
    %v3105 = vmul.f32 %v3090, %v3101
    %v3106 = vmul.f32 %v3091, %v3101
    %v3107 = vmul.f32 %v3092, %v3101
    %v3108 = vmul.f32 %v3093, %v3101
    %v3109 = vmul.f32 %v3094, %v3101
    %v3110 = vmul.f32 %v3095, %v3101
    %v3111 = vmul.f32 %v3096, %v3101
    %v3112 = vadd.f32 %v3077, %v3102
    %v3113 = vadd.f32 %v3078, %v3103
    %v3114 = vadd.f32 %v3079, %v3104
    %v3115 = vadd.f32 %v3080, %v3105
    %v3116 = vadd.f32 %v3081, %v3106
    %v3117 = vadd.f32 %v3082, %v3107
    %v3118 = vadd.f32 %v3083, %v3108
    %v3119 = vadd.f32 %v3084, %v3109
    %v3120 = vadd.f32 %v3085, %v3110
    %v3121 = vadd.f32 %v3086, %v3111
    %v3122 = vld [vmem:[%s1324 + $0x1] sm:$0xff]
    %v3123 = vld [vmem:[%s1324 + $0x9] sm:$0xff]
    %v3124 = vld [vmem:[%s1324 + $0x19] sm:$0xff]
    %v3125 = vld [vmem:[%s1324 + $0x21] sm:$0xff]
    %v3126 = vld [vmem:[%s1324 + $0x31] sm:$0xff]
    %v3127 = vld [vmem:[%s1324 + $0x39] sm:$0xff]
    %v3128 = vld [vmem:[%s1324 + $0x49] sm:$0xff]
    %v3129 = vld [vmem:[%s1324 + $0x51] sm:$0xff]
    %v3130 = vld [vmem:[%s1324 + $0x61] sm:$0xff]
    %v3131 = vld [vmem:[%s1324 + $0x69] sm:$0xff]
    %v3132 = vld [vmem:[#allocation3 + $0xd] sm:$0x1]
    %v3133 = vlaneseq
    %v3134 = vshrl.u32 %v3133, 7
    %v3135 = vsub.s32 0, %v3134
    %v3136 = vrot.slane %v3132, %v3135
    %v3137 = vmul.f32 %v3122, %v3136
    %v3138 = vmul.f32 %v3123, %v3136
    %v3139 = vmul.f32 %v3124, %v3136
    %v3140 = vmul.f32 %v3125, %v3136
    %v3141 = vmul.f32 %v3126, %v3136
    %v3142 = vmul.f32 %v3127, %v3136
    %v3143 = vmul.f32 %v3128, %v3136
    %v3144 = vmul.f32 %v3129, %v3136
    %v3145 = vmul.f32 %v3130, %v3136
    %v3146 = vmul.f32 %v3131, %v3136
    %v3147 = vadd.f32 %v3112, %v3137
    %v3148 = vadd.f32 %v3113, %v3138
    %v3149 = vadd.f32 %v3114, %v3139
    %v3150 = vadd.f32 %v3115, %v3140
    %v3151 = vadd.f32 %v3116, %v3141
    %v3152 = vadd.f32 %v3117, %v3142
    %v3153 = vadd.f32 %v3118, %v3143
    %v3154 = vadd.f32 %v3119, %v3144
    %v3155 = vadd.f32 %v3120, %v3145
    %v3156 = vadd.f32 %v3121, %v3146
    %v3157 = vld [vmem:[%s1324 + $0x2] sm:$0xff]
    %v3158 = vld [vmem:[%s1324 + $0xa] sm:$0xff]
    %v3159 = vld [vmem:[%s1324 + $0x1a] sm:$0xff]
    %v3160 = vld [vmem:[%s1324 + $0x22] sm:$0xff]
    %v3161 = vld [vmem:[%s1324 + $0x32] sm:$0xff]
    %v3162 = vld [vmem:[%s1324 + $0x3a] sm:$0xff]
    %v3163 = vld [vmem:[%s1324 + $0x4a] sm:$0xff]
    %v3164 = vld [vmem:[%s1324 + $0x52] sm:$0xff]
    %v3165 = vld [vmem:[%s1324 + $0x62] sm:$0xff]
    %v3166 = vld [vmem:[%s1324 + $0x6a] sm:$0xff]
    %v3167 = vld [vmem:[#allocation3 + $0xe] sm:$0x1]
    %v3168 = vlaneseq
    %v3169 = vshrl.u32 %v3168, 7
    %v3170 = vsub.s32 0, %v3169
    %v3171 = vrot.slane %v3167, %v3170
    %v3172 = vmul.f32 %v3157, %v3171
    %v3173 = vmul.f32 %v3158, %v3171
    %v3174 = vmul.f32 %v3159, %v3171
    %v3175 = vmul.f32 %v3160, %v3171
    %v3176 = vmul.f32 %v3161, %v3171
    %v3177 = vmul.f32 %v3162, %v3171
    %v3178 = vmul.f32 %v3163, %v3171
    %v3179 = vmul.f32 %v3164, %v3171
    %v3180 = vmul.f32 %v3165, %v3171
    %v3181 = vmul.f32 %v3166, %v3171
    %v3182 = vadd.f32 %v3147, %v3172
    %v3183 = vadd.f32 %v3148, %v3173
    %v3184 = vadd.f32 %v3149, %v3174
    %v3185 = vadd.f32 %v3150, %v3175
    %v3186 = vadd.f32 %v3151, %v3176
    %v3187 = vadd.f32 %v3152, %v3177
    %v3188 = vadd.f32 %v3153, %v3178
    %v3189 = vadd.f32 %v3154, %v3179
    %v3190 = vadd.f32 %v3155, %v3180
    %v3191 = vadd.f32 %v3156, %v3181
    %v3192 = vld [vmem:[%s1324 + $0x3] sm:$0xff]
    %v3193 = vld [vmem:[%s1324 + $0xb] sm:$0xff]
    %v3194 = vld [vmem:[%s1324 + $0x1b] sm:$0xff]
    %v3195 = vld [vmem:[%s1324 + $0x23] sm:$0xff]
    %v3196 = vld [vmem:[%s1324 + $0x33] sm:$0xff]
    %v3197 = vld [vmem:[%s1324 + $0x3b] sm:$0xff]
    %v3198 = vld [vmem:[%s1324 + $0x4b] sm:$0xff]
    %v3199 = vld [vmem:[%s1324 + $0x53] sm:$0xff]
    %v3200 = vld [vmem:[%s1324 + $0x63] sm:$0xff]
    %v3201 = vld [vmem:[%s1324 + $0x6b] sm:$0xff]
    %v3202 = vld [vmem:[#allocation3 + $0xf] sm:$0x1]
    %v3203 = vlaneseq
    %v3204 = vshrl.u32 %v3203, 7
    %v3205 = vsub.s32 0, %v3204
    %v3206 = vrot.slane %v3202, %v3205
    %v3207 = vmul.f32 %v3192, %v3206
    %v3208 = vmul.f32 %v3193, %v3206
    %v3209 = vmul.f32 %v3194, %v3206
    %v3210 = vmul.f32 %v3195, %v3206
    %v3211 = vmul.f32 %v3196, %v3206
    %v3212 = vmul.f32 %v3197, %v3206
    %v3213 = vmul.f32 %v3198, %v3206
    %v3214 = vmul.f32 %v3199, %v3206
    %v3215 = vmul.f32 %v3200, %v3206
    %v3216 = vmul.f32 %v3201, %v3206
    %v3217 = vadd.f32 %v3182, %v3207
    %v3218 = vadd.f32 %v3183, %v3208
    %v3219 = vadd.f32 %v3184, %v3209
    %v3220 = vadd.f32 %v3185, %v3210
    %v3221 = vadd.f32 %v3186, %v3211
    %v3222 = vadd.f32 %v3187, %v3212
    %v3223 = vadd.f32 %v3188, %v3213
    %v3224 = vadd.f32 %v3189, %v3214
    %v3225 = vadd.f32 %v3190, %v3215
    %v3226 = vadd.f32 %v3191, %v3216
    %s3227 = scalar_lea.vmem [#allocation7], 128
    %3228 = vst [vmem:[%s3227] sm:$0xff] %v3217
    %3229 = vst [vmem:[%s3227 + $0x8] sm:$0xff] %v3218
    %3230 = vst [vmem:[%s3227 + $0x10] sm:$0xff] %v3219
    %3231 = vst [vmem:[%s3227 + $0x18] sm:$0xff] %v3220
    %3232 = vst [vmem:[%s3227 + $0x20] sm:$0xff] %v3221
    %3233 = vst [vmem:[%s3227 + $0x28] sm:$0xff] %v3222
    %3234 = vst [vmem:[%s3227 + $0x30] sm:$0xff] %v3223
    %3235 = vst [vmem:[%s3227 + $0x38] sm:$0xff] %v3224
    %3236 = vst [vmem:[%s3227 + $0x40] sm:$0xff] %v3225
    %3237 = vst [vmem:[%s3227 + $0x48] sm:$0xff] %v3226
    // Predicated region
    $region14: #{tpu_custom_call.1} parent=1 // pred_check
      _
    $region15: #{tpu_custom_call.1} parent=1 // pred_check_branch
      %3239 = sbr.rel (0) target = $region17
    $region16: #{tpu_custom_call.1} parent=1 // pred_region
      %s3241 = ssub.s32 3328, 3328
      %3242 = vsyncadd [#allocation6], %s3241
      %s3243 = sshll.u32 [#allocation7], 4
      %s3244 = int_to_ptr.vmem [resolvable:$true] %s3243
      %3249 = dma.vmem_to_hbm [thread:$0]  %s3244, 3328, %s2, [#allocation6], 128, 128, 8
    $region17: #{tpu_custom_call.1} parent=1 // pred_fallthru
      _
    // Predicated region
    $region18: #{tpu_custom_call.1} parent=1 // pred_check
      _
    $region19: #{tpu_custom_call.1} parent=1 // pred_check_branch
      %3251 = sbr.rel (0) target = $region21
    $region20: #{tpu_custom_call.1} parent=1 // pred_region
      %3252 = dma.done [#allocation6], 3328
    $region21: #{tpu_custom_call.1} parent=1 // pred_fallthru
      _
    %3253 = vsyncpa [#allocation5], 1
    %3254 = vsyncpa [#allocation6], 1

</llo_original>
